<compile_context>
chip_gen: v7x
topology: tpu7x:2x2x1
jax: 0.10.0
libtpu: 0.0.40
codegen_flags: <defaults>
</compile_context>

<pallas_src>
import math
import jax
import jax.numpy as jnp
from jax import lax
from jax.experimental import pallas as pl
from jax.experimental.pallas import tpu as pltpu

# ---- hyperparameters (PyTorch module defaults, small test shapes) ----
B = 2            # batch
S = 8            # sequence length
INPUT_DIM = 16   # input feature dim
D_MODEL = 64
NHEAD = 4
HEAD_DIM = D_MODEL // NHEAD
NUM_LAYERS = 2
DIM_FF = 128
OUTPUT_DIM = 1   # final Linear lowered as multiply+reduce (assumes OUTPUT_DIM == 1)
LN_EPS = 1e-5
N_ROWS = B * S

# ---- packed-slab layouts (static Python ints; row offsets into the slabs) ----
# bf16 weight slab: lane width 3*D_MODEL, weights stacked along rows.
W_LANES = 3 * D_MODEL                              # 192
W_WP = 0                                           # (INPUT_DIM, D_MODEL)
W_LAYER0 = INPUT_DIM                               # per-layer block start
W_QKV = 0                                          # (D_MODEL, 3*D_MODEL)
W_WO = D_MODEL                                     # (D_MODEL, D_MODEL)
W_W1 = 2 * D_MODEL                                 # (D_MODEL, DIM_FF)
W_W2 = 3 * D_MODEL                                 # (DIM_FF, D_MODEL)
W_LAYER_STRIDE = 3 * D_MODEL + DIM_FF              # 320
W_ROWS = W_LAYER0 + NUM_LAYERS * W_LAYER_STRIDE    # 656

# f32 slab: pe(+input-proj bias), per-layer biases / LN params, final linear.
F_LANES = 3 * D_MODEL                              # 192
F_PE = 0                                           # (B*S, D_MODEL)
F_LAYER0 = N_ROWS
F_BQKV, F_BO, F_LN1G, F_LN1B, F_B1, F_B2, F_LN2G, F_LN2B = range(8)
F_LAYER_STRIDE = 8
F_WF = F_LAYER0 + NUM_LAYERS * F_LAYER_STRIDE      # wf stored transposed (OUTPUT_DIM, D_MODEL)
F_BF = F_WF + OUTPUT_DIM
F_ROWS = ((F_BF + 1 + 7) // 8) * 8                 # pad rows to sublane multiple


def _layer_norm(h, gamma, beta):
    mu = jnp.mean(h, axis=-1, keepdims=True)
    var = jnp.mean((h - mu) ** 2, axis=-1, keepdims=True)
    return (h - mu) * lax.rsqrt(var + LN_EPS) * gamma + beta


def transformer_kernel(x_ref, w_ref, f_ref, out_ref):
    bf16 = jnp.bfloat16
    f32 = jnp.float32

    # input projection; bias already folded into the pe rows of the f32 slab
    h = jnp.dot(x_ref[...], w_ref[W_WP:W_WP + INPUT_DIM, 0:D_MODEL],
                preferred_element_type=f32) + f_ref[F_PE:F_PE + N_ROWS, 0:D_MODEL]

    for l in range(NUM_LAYERS):                    # unrolled (NUM_LAYERS = 2)
        wr = W_LAYER0 + l * W_LAYER_STRIDE
        fr = F_LAYER0 + l * F_LAYER_STRIDE

        # ---- fused QKV projection: one lane-dense (N,64)@(64,192) MXU push ----
        qkv = jnp.dot(h.astype(bf16),
                      w_ref[wr + W_QKV:wr + W_QKV + D_MODEL, 0:3 * D_MODEL],
                      preferred_element_type=f32)
        qkv = qkv + f_ref[fr + F_BQKV:fr + F_BQKV + 1, 0:3 * D_MODEL]   # (N, 3D) f32

        # split heads onto a leading batch axis (head-major); minor dim unchanged
        def split_heads(off):
            return jnp.concatenate(
                [qkv[:, off + hd * HEAD_DIM:off + (hd + 1) * HEAD_DIM]
                 .reshape(B, S, HEAD_DIM) for hd in range(NHEAD)],
                axis=0).astype(bf16)                       # (NHEAD*B, S, HEAD_DIM)

        qh = split_heads(0)                # 1/sqrt(HEAD_DIM) folded host-side
        kh = split_heads(D_MODEL)
        vh = split_heads(2 * D_MODEL)

        # ---- attention core: one score einsum, ONE softmax chain, one PV einsum ----
        sc = jnp.einsum('bqd,bkd->bqk', qh, kh,
                        preferred_element_type=f32)        # (NHEAD*B, S, S)
        sc = sc - jnp.max(sc, axis=-1, keepdims=True)
        p = jnp.exp(sc)
        p = p / jnp.sum(p, axis=-1, keepdims=True)         # exact divide (parity w/ torch)
        ctx_h = jnp.einsum('bqk,bkd->bqd', p.astype(bf16), vh,
                           preferred_element_type=f32)     # (NHEAD*B, S, HEAD_DIM)

        # merge heads back into (N, D) lanes, head-major feature order (as PyTorch concat)
        ctx = jnp.concatenate(
            [ctx_h[hd * B:(hd + 1) * B].reshape(N_ROWS, HEAD_DIM)
             for hd in range(NHEAD)], axis=-1).astype(bf16)

        # ---- out-projection: single (N,64)@(64,64) matmul ----
        attn = jnp.dot(ctx, w_ref[wr + W_WO:wr + W_WO + D_MODEL, 0:D_MODEL],
                       preferred_element_type=f32)
        attn = attn + f_ref[fr + F_BO:fr + F_BO + 1, 0:D_MODEL]

        # post-norm residual 1
        h = _layer_norm(h + attn,
                        f_ref[fr + F_LN1G:fr + F_LN1G + 1, 0:D_MODEL],
                        f_ref[fr + F_LN1B:fr + F_LN1B + 1, 0:D_MODEL])

        # ---- feed-forward (relu) ----
        ff = jnp.dot(h.astype(bf16), w_ref[wr + W_W1:wr + W_W1 + D_MODEL, 0:DIM_FF],
                     preferred_element_type=f32) + f_ref[fr + F_B1:fr + F_B1 + 1, 0:DIM_FF]
        ff = jnp.maximum(ff, 0.0)
        ff = jnp.dot(ff.astype(bf16), w_ref[wr + W_W2:wr + W_W2 + DIM_FF, 0:D_MODEL],
                     preferred_element_type=f32) + f_ref[fr + F_B2:fr + F_B2 + 1, 0:D_MODEL]

        # post-norm residual 2
        h = _layer_norm(h + ff,
                        f_ref[fr + F_LN2G:fr + F_LN2G + 1, 0:D_MODEL],
                        f_ref[fr + F_LN2B:fr + F_LN2B + 1, 0:D_MODEL])

    # mean-pool over S: sublane reduce (no pooling matmul, no extra DMA'd pool matrix)
    pooled = jnp.mean(h.reshape(B, S, D_MODEL), axis=1)              # (B, D) f32

    # final Linear (OUTPUT_DIM == 1): VPU multiply + lane reduce, no MXU pass
    wf_row = f_ref[F_WF:F_WF + 1, 0:D_MODEL]                         # (1, D)
    bf_row = f_ref[F_BF:F_BF + 1, 0:OUTPUT_DIM]                      # (1, 1)
    out_ref[...] = jnp.sum(pooled * wf_row, axis=-1, keepdims=True) + bf_row


def _full_spec(shape):
    nd = len(shape)
    return pl.BlockSpec(shape, lambda i, _nd=nd: (0,) * _nd)


def transformer_classifier(x, params):
    # host-side: batch-fused slab, pre-cast to bf16 (no in-kernel cast before 1st MXU push)
    x2 = x.reshape(B * S, INPUT_DIM).astype(jnp.bfloat16)
    args = (x2, params["w_slab"], params["f_slab"])          # 3 input DMAs total
    return pl.pallas_call(
        transformer_kernel,
        out_shape=jax.ShapeDtypeStruct((B, OUTPUT_DIM), jnp.float32),
        grid=(1,),
        in_specs=[_full_spec(a.shape) for a in args],
        out_specs=_full_spec((B, OUTPUT_DIM)),
        compiler_params=pltpu.CompilerParams(dimension_semantics=("arbitrary",)),
    )(*args)
    # TODO(synk): at large B*S (>=256 rows) shard the batch over a parallel grid axis
    # (v7x dual TensorCore); at B=2 the per-core fixed cost would dominate.


def make_params(key):
    ks = jax.random.split(key, 12)
    f32 = jnp.float32
    init = lambda k, shape, s=0.02: (s * jax.random.normal(k, shape)).astype(f32)

    # positional encoding buffer (same construction as the PyTorch PositionalEncoding)
    position = jnp.arange(S, dtype=f32)[:, None]
    div_term = jnp.exp(jnp.arange(0, D_MODEL, 2, dtype=f32) * (-math.log(10000.0) / D_MODEL))
    pe = jnp.zeros((S, D_MODEL), dtype=f32)
    pe = pe.at[:, 0::2].set(jnp.sin(position * div_term))
    pe = pe.at[:, 1::2].set(jnp.cos(position * div_term))

    L = NUM_LAYERS
    # base weights, Linear weights stored (in, out); in_proj ordered q|k|v
    wp = init(ks[0], (INPUT_DIM, D_MODEL))
    bp = init(ks[1], (D_MODEL,))
    wqkv = init(ks[2], (L, D_MODEL, 3 * D_MODEL))
    bqkv = init(ks[3], (L, 3 * D_MODEL))
    wo = init(ks[4], (L, D_MODEL, D_MODEL))
    bo = init(ks[5], (L, D_MODEL))
    w1 = init(ks[6], (L, D_MODEL, DIM_FF))
    b1 = init(ks[7], (L, DIM_FF))
    w2 = init(ks[8], (L, DIM_FF, D_MODEL))
    b2 = init(ks[9], (L, D_MODEL))
    wf = init(ks[10], (D_MODEL, OUTPUT_DIM))
    bf = init(ks[11], (OUTPUT_DIM,))
    ln1g = jnp.ones((L, D_MODEL), f32); ln1b = jnp.zeros((L, D_MODEL), f32)
    ln2g = jnp.ones((L, D_MODEL), f32); ln2b = jnp.zeros((L, D_MODEL), f32)

    # fold 1/sqrt(head_dim) into the q third of the fused in-projection
    scale = 1.0 / math.sqrt(HEAD_DIM)
    qscale = jnp.concatenate([jnp.full((D_MODEL,), scale, f32),
                              jnp.ones((2 * D_MODEL,), f32)])
    wqkv = wqkv * qscale[None, None, :]
    bqkv = bqkv * qscale[None, :]

    # ---- bf16 weight slab: wp | per-layer (wqkv, wo, w1, w2) stacked along rows ----
    w = jnp.zeros((W_ROWS, W_LANES), dtype=f32)
    w = w.at[W_WP:W_WP + INPUT_DIM, 0:D_MODEL].set(wp)
    for l in range(L):
        r = W_LAYER0 + l * W_LAYER_STRIDE
        w = w.at[r + W_QKV:r + W_QKV + D_MODEL, 0:3 * D_MODEL].set(wqkv[l])
        w = w.at[r + W_WO:r + W_WO + D_MODEL, 0:D_MODEL].set(wo[l])
        w = w.at[r + W_W1:r + W_W1 + D_MODEL, 0:DIM_FF].set(w1[l])
        w = w.at[r + W_W2:r + W_W2 + DIM_FF, 0:D_MODEL].set(w2[l])
    w_slab = w.astype(jnp.bfloat16)

    # ---- f32 slab: (pe + input bias) tiled over batch | per-layer biases/LN | wf/bf ----
    f = jnp.zeros((F_ROWS, F_LANES), dtype=f32)
    f = f.at[F_PE:F_PE + N_ROWS, 0:D_MODEL].set(jnp.tile(pe + bp[None, :], (B, 1)))
    for l in range(L):
        r = F_LAYER0 + l * F_LAYER_STRIDE
        f = f.at[r + F_BQKV, 0:3 * D_MODEL].set(bqkv[l])
        f = f.at[r + F_BO, 0:D_MODEL].set(bo[l])
        f = f.at[r + F_LN1G, 0:D_MODEL].set(ln1g[l])
        f = f.at[r + F_LN1B, 0:D_MODEL].set(ln1b[l])
        f = f.at[r + F_B1, 0:DIM_FF].set(b1[l])
        f = f.at[r + F_B2, 0:D_MODEL].set(b2[l])
        f = f.at[r + F_LN2G, 0:D_MODEL].set(ln2g[l])
        f = f.at[r + F_LN2B, 0:D_MODEL].set(ln2b[l])
    f = f.at[F_WF:F_WF + OUTPUT_DIM, 0:D_MODEL].set(wf.T)
    f = f.at[F_BF, 0:OUTPUT_DIM].set(bf)

    return {"w_slab": w_slab, "f_slab": f}


if __name__ == "__main__":
    key = jax.random.PRNGKey(0)
    kx, kp = jax.random.split(key)
    x = jax.random.normal(kx, (B, S, INPUT_DIM), dtype=jnp.float32)
    params = make_params(kp)

    out = transformer_classifier(x, params)
    out = jax.block_until_ready(out)
    assert out.shape == (B, OUTPUT_DIM)
    assert bool(jnp.all(jnp.isfinite(out)))
    print("KERNEL_OK")
</pallas_src>

<mosaic_0001>
module attributes {stable_mosaic.version = 11 : i64} {
  func.func @transformer_kernel(%arg0: i32, %arg1: memref<16x16xbf16, #tpu.memory_space<vmem>>, %arg2: memref<656x192xbf16, #tpu.memory_space<vmem>>, %arg3: memref<40x192xf32, #tpu.memory_space<vmem>>, %arg4: memref<2x1xf32, #tpu.memory_space<vmem>>) attributes {dimension_semantics = [#tpu.dimension_semantics<arbitrary>], iteration_bounds = array<i64: 1>, scalar_prefetch = 0 : i64, scratch_operands = 0 : i64, tpu.core_type = #tpu.core_type<tc>, window_params = [{pipeline_mode = #tpu.pipeline_mode<synchronous>, transform_indices = @transform_0, window_bounds = array<i64: 16, 16>}, {pipeline_mode = #tpu.pipeline_mode<synchronous>, transform_indices = @transform_1, window_bounds = array<i64: 656, 192>}, {pipeline_mode = #tpu.pipeline_mode<synchronous>, transform_indices = @transform_2, window_bounds = array<i64: 40, 192>}, {pipeline_mode = #tpu.pipeline_mode<synchronous>, transform_indices = @transform_3, window_bounds = array<i64: 2, 1>}]} {
    %c0 = arith.constant 0 : index
    %c0_0 = arith.constant 0 : index
    %0 = vector.load %arg1[%c0, %c0_0] : memref<16x16xbf16, #tpu.memory_space<vmem>>, vector<16x16xbf16>
    %c0_1 = arith.constant 0 : index
    %c0_2 = arith.constant 0 : index
    %1 = vector.load %arg2[%c0_1, %c0_2] : memref<656x192xbf16, #tpu.memory_space<vmem>>, vector<16x64xbf16>
    %cst = arith.constant dense<0.000000e+00> : vector<16x64xf32>
    %2 = tpu.matmul %0, %1, %cst {dimension_numbers = #tpu.dot_dimension_numbers<[1], [0], [0], [1], [0, 0, 1, 1], [], []>} : vector<16x16xbf16>, vector<16x64xbf16>, vector<16x64xf32> -> vector<16x64xf32>
    %c0_3 = arith.constant 0 : index
    %c0_4 = arith.constant 0 : index
    %3 = vector.load %arg3[%c0_3, %c0_4] : memref<40x192xf32, #tpu.memory_space<vmem>>, vector<16x64xf32>
    %4 = arith.addf %2, %3 : vector<16x64xf32>
    %5 = arith.truncf %4 : vector<16x64xf32> to vector<16x64xbf16>
    %c16 = arith.constant 16 : index
    %c0_5 = arith.constant 0 : index
    %6 = vector.load %arg2[%c16, %c0_5] : memref<656x192xbf16, #tpu.memory_space<vmem>>, vector<64x192xbf16>
    %cst_6 = arith.constant dense<0.000000e+00> : vector<16x192xf32>
    %7 = tpu.matmul %5, %6, %cst_6 {dimension_numbers = #tpu.dot_dimension_numbers<[1], [0], [0], [1], [0, 0, 1, 1], [], []>} : vector<16x64xbf16>, vector<64x192xbf16>, vector<16x192xf32> -> vector<16x192xf32>
    %c16_7 = arith.constant 16 : index
    %c0_8 = arith.constant 0 : index
    %8 = vector.load %arg3[%c16_7, %c0_8] : memref<40x192xf32, #tpu.memory_space<vmem>>, vector<1x192xf32>
    %9 = vector.broadcast %8 : vector<1x192xf32> to vector<16x192xf32>
    %10 = arith.addf %7, %9 : vector<16x192xf32>
    %11 = vector.extract_strided_slice %10 {offsets = [0, 0], sizes = [16, 16], strides = [1, 1]} : vector<16x192xf32> to vector<16x16xf32>
    %12 = vector.shape_cast %11 : vector<16x16xf32> to vector<2x8x16xf32>
    %13 = vector.extract_strided_slice %10 {offsets = [0, 16], sizes = [16, 16], strides = [1, 1]} : vector<16x192xf32> to vector<16x16xf32>
    %14 = vector.shape_cast %13 : vector<16x16xf32> to vector<2x8x16xf32>
    %15 = vector.extract_strided_slice %10 {offsets = [0, 32], sizes = [16, 16], strides = [1, 1]} : vector<16x192xf32> to vector<16x16xf32>
    %16 = vector.shape_cast %15 : vector<16x16xf32> to vector<2x8x16xf32>
    %17 = vector.extract_strided_slice %10 {offsets = [0, 48], sizes = [16, 16], strides = [1, 1]} : vector<16x192xf32> to vector<16x16xf32>
    %18 = vector.shape_cast %17 : vector<16x16xf32> to vector<2x8x16xf32>
    %19 = tpu.concatenate %12, %14, %16, %18 in 0 : vector<2x8x16xf32>, vector<2x8x16xf32>, vector<2x8x16xf32>, vector<2x8x16xf32> -> vector<8x8x16xf32>
    %20 = arith.truncf %19 : vector<8x8x16xf32> to vector<8x8x16xbf16>
    %21 = vector.extract_strided_slice %10 {offsets = [0, 64], sizes = [16, 16], strides = [1, 1]} : vector<16x192xf32> to vector<16x16xf32>
    %22 = vector.shape_cast %21 : vector<16x16xf32> to vector<2x8x16xf32>
    %23 = vector.extract_strided_slice %10 {offsets = [0, 80], sizes = [16, 16], strides = [1, 1]} : vector<16x192xf32> to vector<16x16xf32>
    %24 = vector.shape_cast %23 : vector<16x16xf32> to vector<2x8x16xf32>
    %25 = vector.extract_strided_slice %10 {offsets = [0, 96], sizes = [16, 16], strides = [1, 1]} : vector<16x192xf32> to vector<16x16xf32>
    %26 = vector.shape_cast %25 : vector<16x16xf32> to vector<2x8x16xf32>
    %27 = vector.extract_strided_slice %10 {offsets = [0, 112], sizes = [16, 16], strides = [1, 1]} : vector<16x192xf32> to vector<16x16xf32>
    %28 = vector.shape_cast %27 : vector<16x16xf32> to vector<2x8x16xf32>
    %29 = tpu.concatenate %22, %24, %26, %28 in 0 : vector<2x8x16xf32>, vector<2x8x16xf32>, vector<2x8x16xf32>, vector<2x8x16xf32> -> vector<8x8x16xf32>
    %30 = arith.truncf %29 : vector<8x8x16xf32> to vector<8x8x16xbf16>
    %31 = vector.extract_strided_slice %10 {offsets = [0, 128], sizes = [16, 16], strides = [1, 1]} : vector<16x192xf32> to vector<16x16xf32>
    %32 = vector.shape_cast %31 : vector<16x16xf32> to vector<2x8x16xf32>
    %33 = vector.extract_strided_slice %10 {offsets = [0, 144], sizes = [16, 16], strides = [1, 1]} : vector<16x192xf32> to vector<16x16xf32>
    %34 = vector.shape_cast %33 : vector<16x16xf32> to vector<2x8x16xf32>
    %35 = vector.extract_strided_slice %10 {offsets = [0, 160], sizes = [16, 16], strides = [1, 1]} : vector<16x192xf32> to vector<16x16xf32>
    %36 = vector.shape_cast %35 : vector<16x16xf32> to vector<2x8x16xf32>
    %37 = vector.extract_strided_slice %10 {offsets = [0, 176], sizes = [16, 16], strides = [1, 1]} : vector<16x192xf32> to vector<16x16xf32>
    %38 = vector.shape_cast %37 : vector<16x16xf32> to vector<2x8x16xf32>
    %39 = tpu.concatenate %32, %34, %36, %38 in 0 : vector<2x8x16xf32>, vector<2x8x16xf32>, vector<2x8x16xf32>, vector<2x8x16xf32> -> vector<8x8x16xf32>
    %40 = arith.truncf %39 : vector<8x8x16xf32> to vector<8x8x16xbf16>
    "tpu.trace_start"() <{level = 10 : i32, message = "bqd,bkd->bqk"}> : () -> ()
    %cst_9 = arith.constant dense<0.000000e+00> : vector<8x8x8xf32>
    %41 = tpu.matmul %20, %30, %cst_9 {dimension_numbers = #tpu.dot_dimension_numbers<[2], [2], [1], [1], [0, 0, 0, 1, 1, 1], [0], [0]>} : vector<8x8x16xbf16>, vector<8x8x16xbf16>, vector<8x8x8xf32> -> vector<8x8x8xf32>
    "tpu.trace_stop"() : () -> ()
    %cst_10 = arith.constant dense<0xFF800000> : vector<8x8xf32>
    %42 = vector.multi_reduction <maximumf>, %41, %cst_10 [2] : vector<8x8x8xf32> to vector<8x8xf32>
    %43 = vector.shape_cast %42 : vector<8x8xf32> to vector<8x8x1xf32>
    %44 = vector.broadcast %43 : vector<8x8x1xf32> to vector<8x8x8xf32>
    %45 = arith.subf %41, %44 : vector<8x8x8xf32>
    %46 = math.exp %45 : vector<8x8x8xf32>
    %cst_11 = arith.constant dense<0.000000e+00> : vector<8x8xf32>
    %47 = vector.multi_reduction <add>, %46, %cst_11 [2] : vector<8x8x8xf32> to vector<8x8xf32>
    %48 = vector.shape_cast %47 : vector<8x8xf32> to vector<8x8x1xf32>
    %49 = vector.broadcast %48 : vector<8x8x1xf32> to vector<8x8x8xf32>
    %50 = arith.divf %46, %49 : vector<8x8x8xf32>
    %51 = arith.truncf %50 : vector<8x8x8xf32> to vector<8x8x8xbf16>
    "tpu.trace_start"() <{level = 10 : i32, message = "bqk,bkd->bqd"}> : () -> ()
    %cst_12 = arith.constant dense<0.000000e+00> : vector<8x8x16xf32>
    %52 = tpu.matmul %51, %40, %cst_12 {dimension_numbers = #tpu.dot_dimension_numbers<[2], [1], [1], [2], [0, 0, 0, 1, 1, 2], [0], [0]>} : vector<8x8x8xbf16>, vector<8x8x16xbf16>, vector<8x8x16xf32> -> vector<8x8x16xf32>
    "tpu.trace_stop"() : () -> ()
    %53 = vector.extract_strided_slice %52 {offsets = [0, 0, 0], sizes = [2, 8, 16], strides = [1, 1, 1]} : vector<8x8x16xf32> to vector<2x8x16xf32>
    %54 = vector.shape_cast %53 : vector<2x8x16xf32> to vector<16x16xf32>
    %55 = vector.extract_strided_slice %52 {offsets = [2, 0, 0], sizes = [2, 8, 16], strides = [1, 1, 1]} : vector<8x8x16xf32> to vector<2x8x16xf32>
    %56 = vector.shape_cast %55 : vector<2x8x16xf32> to vector<16x16xf32>
    %57 = vector.extract_strided_slice %52 {offsets = [4, 0, 0], sizes = [2, 8, 16], strides = [1, 1, 1]} : vector<8x8x16xf32> to vector<2x8x16xf32>
    %58 = vector.shape_cast %57 : vector<2x8x16xf32> to vector<16x16xf32>
    %59 = vector.extract_strided_slice %52 {offsets = [6, 0, 0], sizes = [2, 8, 16], strides = [1, 1, 1]} : vector<8x8x16xf32> to vector<2x8x16xf32>
    %60 = vector.shape_cast %59 : vector<2x8x16xf32> to vector<16x16xf32>
    %61 = tpu.concatenate %54, %56, %58, %60 in 1 : vector<16x16xf32>, vector<16x16xf32>, vector<16x16xf32>, vector<16x16xf32> -> vector<16x64xf32>
    %62 = arith.truncf %61 : vector<16x64xf32> to vector<16x64xbf16>
    %c80 = arith.constant 80 : index
    %c0_13 = arith.constant 0 : index
    %63 = vector.load %arg2[%c80, %c0_13] : memref<656x192xbf16, #tpu.memory_space<vmem>>, vector<64x64xbf16>
    %cst_14 = arith.constant dense<0.000000e+00> : vector<16x64xf32>
    %64 = tpu.matmul %62, %63, %cst_14 {dimension_numbers = #tpu.dot_dimension_numbers<[1], [0], [0], [1], [0, 0, 1, 1], [], []>} : vector<16x64xbf16>, vector<64x64xbf16>, vector<16x64xf32> -> vector<16x64xf32>
    %c17 = arith.constant 17 : index
    %c0_15 = arith.constant 0 : index
    %65 = vector.load %arg3[%c17, %c0_15] : memref<40x192xf32, #tpu.memory_space<vmem>>, vector<1x64xf32>
    %66 = vector.broadcast %65 : vector<1x64xf32> to vector<16x64xf32>
    %67 = arith.addf %64, %66 : vector<16x64xf32>
    %68 = arith.addf %4, %67 : vector<16x64xf32>
    %c18 = arith.constant 18 : index
    %c0_16 = arith.constant 0 : index
    %69 = vector.load %arg3[%c18, %c0_16] : memref<40x192xf32, #tpu.memory_space<vmem>>, vector<1x64xf32>
    %c19 = arith.constant 19 : index
    %c0_17 = arith.constant 0 : index
    %70 = vector.load %arg3[%c19, %c0_17] : memref<40x192xf32, #tpu.memory_space<vmem>>, vector<1x64xf32>
    %cst_18 = arith.constant dense<0.000000e+00> : vector<16xf32>
    %71 = vector.multi_reduction <add>, %68, %cst_18 [1] : vector<16x64xf32> to vector<16xf32>
    %72 = vector.shape_cast %71 : vector<16xf32> to vector<16x1xf32>
    %cst_19 = arith.constant 6.400000e+01 : f32
    %73 = vector.broadcast %cst_19 : f32 to vector<16x1xf32>
    %74 = arith.divf %72, %73 : vector<16x1xf32>
    %75 = vector.broadcast %74 : vector<16x1xf32> to vector<16x64xf32>
    %76 = arith.subf %68, %75 : vector<16x64xf32>
    %77 = arith.mulf %76, %76 : vector<16x64xf32>
    %cst_20 = arith.constant dense<0.000000e+00> : vector<16xf32>
    %78 = vector.multi_reduction <add>, %77, %cst_20 [1] : vector<16x64xf32> to vector<16xf32>
    %79 = vector.shape_cast %78 : vector<16xf32> to vector<16x1xf32>
    %cst_21 = arith.constant 6.400000e+01 : f32
    %80 = vector.broadcast %cst_21 : f32 to vector<16x1xf32>
    %81 = arith.divf %79, %80 : vector<16x1xf32>
    %82 = vector.broadcast %74 : vector<16x1xf32> to vector<16x64xf32>
    %83 = arith.subf %68, %82 : vector<16x64xf32>
    %cst_22 = arith.constant 9.99999974E-6 : f32
    %84 = vector.broadcast %cst_22 : f32 to vector<16x1xf32>
    %85 = arith.addf %81, %84 : vector<16x1xf32>
    %86 = math.rsqrt %85 : vector<16x1xf32>
    %87 = vector.broadcast %86 : vector<16x1xf32> to vector<16x64xf32>
    %88 = arith.mulf %83, %87 : vector<16x64xf32>
    %89 = vector.broadcast %69 : vector<1x64xf32> to vector<16x64xf32>
    %90 = arith.mulf %88, %89 : vector<16x64xf32>
    %91 = vector.broadcast %70 : vector<1x64xf32> to vector<16x64xf32>
    %92 = arith.addf %90, %91 : vector<16x64xf32>
    %93 = arith.truncf %92 : vector<16x64xf32> to vector<16x64xbf16>
    %c144 = arith.constant 144 : index
    %c0_23 = arith.constant 0 : index
    %94 = vector.load %arg2[%c144, %c0_23] : memref<656x192xbf16, #tpu.memory_space<vmem>>, vector<64x128xbf16>
    %cst_24 = arith.constant dense<0.000000e+00> : vector<16x128xf32>
    %95 = tpu.matmul %93, %94, %cst_24 {dimension_numbers = #tpu.dot_dimension_numbers<[1], [0], [0], [1], [0, 0, 1, 1], [], []>} : vector<16x64xbf16>, vector<64x128xbf16>, vector<16x128xf32> -> vector<16x128xf32>
    %c20 = arith.constant 20 : index
    %c0_25 = arith.constant 0 : index
    %96 = vector.load %arg3[%c20, %c0_25] : memref<40x192xf32, #tpu.memory_space<vmem>>, vector<1x128xf32>
    %97 = vector.broadcast %96 : vector<1x128xf32> to vector<16x128xf32>
    %98 = arith.addf %95, %97 : vector<16x128xf32>
    %cst_26 = arith.constant 0.000000e+00 : f32
    %99 = vector.broadcast %cst_26 : f32 to vector<16x128xf32>
    %100 = arith.maximumf %98, %99 : vector<16x128xf32>
    %101 = arith.truncf %100 : vector<16x128xf32> to vector<16x128xbf16>
    %c208 = arith.constant 208 : index
    %c0_27 = arith.constant 0 : index
    %102 = vector.load %arg2[%c208, %c0_27] : memref<656x192xbf16, #tpu.memory_space<vmem>>, vector<128x64xbf16>
    %cst_28 = arith.constant dense<0.000000e+00> : vector<16x64xf32>
    %103 = tpu.matmul %101, %102, %cst_28 {dimension_numbers = #tpu.dot_dimension_numbers<[1], [0], [0], [1], [0, 0, 1, 1], [], []>} : vector<16x128xbf16>, vector<128x64xbf16>, vector<16x64xf32> -> vector<16x64xf32>
    %c21 = arith.constant 21 : index
    %c0_29 = arith.constant 0 : index
    %104 = vector.load %arg3[%c21, %c0_29] : memref<40x192xf32, #tpu.memory_space<vmem>>, vector<1x64xf32>
    %105 = vector.broadcast %104 : vector<1x64xf32> to vector<16x64xf32>
    %106 = arith.addf %103, %105 : vector<16x64xf32>
    %107 = arith.addf %92, %106 : vector<16x64xf32>
    %c22 = arith.constant 22 : index
    %c0_30 = arith.constant 0 : index
    %108 = vector.load %arg3[%c22, %c0_30] : memref<40x192xf32, #tpu.memory_space<vmem>>, vector<1x64xf32>
    %c23 = arith.constant 23 : index
    %c0_31 = arith.constant 0 : index
    %109 = vector.load %arg3[%c23, %c0_31] : memref<40x192xf32, #tpu.memory_space<vmem>>, vector<1x64xf32>
    %cst_32 = arith.constant dense<0.000000e+00> : vector<16xf32>
    %110 = vector.multi_reduction <add>, %107, %cst_32 [1] : vector<16x64xf32> to vector<16xf32>
    %111 = vector.shape_cast %110 : vector<16xf32> to vector<16x1xf32>
    %cst_33 = arith.constant 6.400000e+01 : f32
    %112 = vector.broadcast %cst_33 : f32 to vector<16x1xf32>
    %113 = arith.divf %111, %112 : vector<16x1xf32>
    %114 = vector.broadcast %113 : vector<16x1xf32> to vector<16x64xf32>
    %115 = arith.subf %107, %114 : vector<16x64xf32>
    %116 = arith.mulf %115, %115 : vector<16x64xf32>
    %cst_34 = arith.constant dense<0.000000e+00> : vector<16xf32>
    %117 = vector.multi_reduction <add>, %116, %cst_34 [1] : vector<16x64xf32> to vector<16xf32>
    %118 = vector.shape_cast %117 : vector<16xf32> to vector<16x1xf32>
    %cst_35 = arith.constant 6.400000e+01 : f32
    %119 = vector.broadcast %cst_35 : f32 to vector<16x1xf32>
    %120 = arith.divf %118, %119 : vector<16x1xf32>
    %121 = vector.broadcast %113 : vector<16x1xf32> to vector<16x64xf32>
    %122 = arith.subf %107, %121 : vector<16x64xf32>
    %cst_36 = arith.constant 9.99999974E-6 : f32
    %123 = vector.broadcast %cst_36 : f32 to vector<16x1xf32>
    %124 = arith.addf %120, %123 : vector<16x1xf32>
    %125 = math.rsqrt %124 : vector<16x1xf32>
    %126 = vector.broadcast %125 : vector<16x1xf32> to vector<16x64xf32>
    %127 = arith.mulf %122, %126 : vector<16x64xf32>
    %128 = vector.broadcast %108 : vector<1x64xf32> to vector<16x64xf32>
    %129 = arith.mulf %127, %128 : vector<16x64xf32>
    %130 = vector.broadcast %109 : vector<1x64xf32> to vector<16x64xf32>
    %131 = arith.addf %129, %130 : vector<16x64xf32>
    %132 = arith.truncf %131 : vector<16x64xf32> to vector<16x64xbf16>
    %c336 = arith.constant 336 : index
    %c0_37 = arith.constant 0 : index
    %133 = vector.load %arg2[%c336, %c0_37] : memref<656x192xbf16, #tpu.memory_space<vmem>>, vector<64x192xbf16>
    %cst_38 = arith.constant dense<0.000000e+00> : vector<16x192xf32>
    %134 = tpu.matmul %132, %133, %cst_38 {dimension_numbers = #tpu.dot_dimension_numbers<[1], [0], [0], [1], [0, 0, 1, 1], [], []>} : vector<16x64xbf16>, vector<64x192xbf16>, vector<16x192xf32> -> vector<16x192xf32>
    %c24 = arith.constant 24 : index
    %c0_39 = arith.constant 0 : index
    %135 = vector.load %arg3[%c24, %c0_39] : memref<40x192xf32, #tpu.memory_space<vmem>>, vector<1x192xf32>
    %136 = vector.broadcast %135 : vector<1x192xf32> to vector<16x192xf32>
    %137 = arith.addf %134, %136 : vector<16x192xf32>
    %138 = vector.extract_strided_slice %137 {offsets = [0, 0], sizes = [16, 16], strides = [1, 1]} : vector<16x192xf32> to vector<16x16xf32>
    %139 = vector.shape_cast %138 : vector<16x16xf32> to vector<2x8x16xf32>
    %140 = vector.extract_strided_slice %137 {offsets = [0, 16], sizes = [16, 16], strides = [1, 1]} : vector<16x192xf32> to vector<16x16xf32>
    %141 = vector.shape_cast %140 : vector<16x16xf32> to vector<2x8x16xf32>
    %142 = vector.extract_strided_slice %137 {offsets = [0, 32], sizes = [16, 16], strides = [1, 1]} : vector<16x192xf32> to vector<16x16xf32>
    %143 = vector.shape_cast %142 : vector<16x16xf32> to vector<2x8x16xf32>
    %144 = vector.extract_strided_slice %137 {offsets = [0, 48], sizes = [16, 16], strides = [1, 1]} : vector<16x192xf32> to vector<16x16xf32>
    %145 = vector.shape_cast %144 : vector<16x16xf32> to vector<2x8x16xf32>
    %146 = tpu.concatenate %139, %141, %143, %145 in 0 : vector<2x8x16xf32>, vector<2x8x16xf32>, vector<2x8x16xf32>, vector<2x8x16xf32> -> vector<8x8x16xf32>
    %147 = arith.truncf %146 : vector<8x8x16xf32> to vector<8x8x16xbf16>
    %148 = vector.extract_strided_slice %137 {offsets = [0, 64], sizes = [16, 16], strides = [1, 1]} : vector<16x192xf32> to vector<16x16xf32>
    %149 = vector.shape_cast %148 : vector<16x16xf32> to vector<2x8x16xf32>
    %150 = vector.extract_strided_slice %137 {offsets = [0, 80], sizes = [16, 16], strides = [1, 1]} : vector<16x192xf32> to vector<16x16xf32>
    %151 = vector.shape_cast %150 : vector<16x16xf32> to vector<2x8x16xf32>
    %152 = vector.extract_strided_slice %137 {offsets = [0, 96], sizes = [16, 16], strides = [1, 1]} : vector<16x192xf32> to vector<16x16xf32>
    %153 = vector.shape_cast %152 : vector<16x16xf32> to vector<2x8x16xf32>
    %154 = vector.extract_strided_slice %137 {offsets = [0, 112], sizes = [16, 16], strides = [1, 1]} : vector<16x192xf32> to vector<16x16xf32>
    %155 = vector.shape_cast %154 : vector<16x16xf32> to vector<2x8x16xf32>
    %156 = tpu.concatenate %149, %151, %153, %155 in 0 : vector<2x8x16xf32>, vector<2x8x16xf32>, vector<2x8x16xf32>, vector<2x8x16xf32> -> vector<8x8x16xf32>
    %157 = arith.truncf %156 : vector<8x8x16xf32> to vector<8x8x16xbf16>
    %158 = vector.extract_strided_slice %137 {offsets = [0, 128], sizes = [16, 16], strides = [1, 1]} : vector<16x192xf32> to vector<16x16xf32>
    %159 = vector.shape_cast %158 : vector<16x16xf32> to vector<2x8x16xf32>
    %160 = vector.extract_strided_slice %137 {offsets = [0, 144], sizes = [16, 16], strides = [1, 1]} : vector<16x192xf32> to vector<16x16xf32>
    %161 = vector.shape_cast %160 : vector<16x16xf32> to vector<2x8x16xf32>
    %162 = vector.extract_strided_slice %137 {offsets = [0, 160], sizes = [16, 16], strides = [1, 1]} : vector<16x192xf32> to vector<16x16xf32>
    %163 = vector.shape_cast %162 : vector<16x16xf32> to vector<2x8x16xf32>
    %164 = vector.extract_strided_slice %137 {offsets = [0, 176], sizes = [16, 16], strides = [1, 1]} : vector<16x192xf32> to vector<16x16xf32>
    %165 = vector.shape_cast %164 : vector<16x16xf32> to vector<2x8x16xf32>
    %166 = tpu.concatenate %159, %161, %163, %165 in 0 : vector<2x8x16xf32>, vector<2x8x16xf32>, vector<2x8x16xf32>, vector<2x8x16xf32> -> vector<8x8x16xf32>
    %167 = arith.truncf %166 : vector<8x8x16xf32> to vector<8x8x16xbf16>
    "tpu.trace_start"() <{level = 10 : i32, message = "bqd,bkd->bqk"}> : () -> ()
    %cst_40 = arith.constant dense<0.000000e+00> : vector<8x8x8xf32>
    %168 = tpu.matmul %147, %157, %cst_40 {dimension_numbers = #tpu.dot_dimension_numbers<[2], [2], [1], [1], [0, 0, 0, 1, 1, 1], [0], [0]>} : vector<8x8x16xbf16>, vector<8x8x16xbf16>, vector<8x8x8xf32> -> vector<8x8x8xf32>
    "tpu.trace_stop"() : () -> ()
    %cst_41 = arith.constant dense<0xFF800000> : vector<8x8xf32>
    %169 = vector.multi_reduction <maximumf>, %168, %cst_41 [2] : vector<8x8x8xf32> to vector<8x8xf32>
    %170 = vector.shape_cast %169 : vector<8x8xf32> to vector<8x8x1xf32>
    %171 = vector.broadcast %170 : vector<8x8x1xf32> to vector<8x8x8xf32>
    %172 = arith.subf %168, %171 : vector<8x8x8xf32>
    %173 = math.exp %172 : vector<8x8x8xf32>
    %cst_42 = arith.constant dense<0.000000e+00> : vector<8x8xf32>
    %174 = vector.multi_reduction <add>, %173, %cst_42 [2] : vector<8x8x8xf32> to vector<8x8xf32>
    %175 = vector.shape_cast %174 : vector<8x8xf32> to vector<8x8x1xf32>
    %176 = vector.broadcast %175 : vector<8x8x1xf32> to vector<8x8x8xf32>
    %177 = arith.divf %173, %176 : vector<8x8x8xf32>
    %178 = arith.truncf %177 : vector<8x8x8xf32> to vector<8x8x8xbf16>
    "tpu.trace_start"() <{level = 10 : i32, message = "bqk,bkd->bqd"}> : () -> ()
    %cst_43 = arith.constant dense<0.000000e+00> : vector<8x8x16xf32>
    %179 = tpu.matmul %178, %167, %cst_43 {dimension_numbers = #tpu.dot_dimension_numbers<[2], [1], [1], [2], [0, 0, 0, 1, 1, 2], [0], [0]>} : vector<8x8x8xbf16>, vector<8x8x16xbf16>, vector<8x8x16xf32> -> vector<8x8x16xf32>
    "tpu.trace_stop"() : () -> ()
    %180 = vector.extract_strided_slice %179 {offsets = [0, 0, 0], sizes = [2, 8, 16], strides = [1, 1, 1]} : vector<8x8x16xf32> to vector<2x8x16xf32>
    %181 = vector.shape_cast %180 : vector<2x8x16xf32> to vector<16x16xf32>
    %182 = vector.extract_strided_slice %179 {offsets = [2, 0, 0], sizes = [2, 8, 16], strides = [1, 1, 1]} : vector<8x8x16xf32> to vector<2x8x16xf32>
    %183 = vector.shape_cast %182 : vector<2x8x16xf32> to vector<16x16xf32>
    %184 = vector.extract_strided_slice %179 {offsets = [4, 0, 0], sizes = [2, 8, 16], strides = [1, 1, 1]} : vector<8x8x16xf32> to vector<2x8x16xf32>
    %185 = vector.shape_cast %184 : vector<2x8x16xf32> to vector<16x16xf32>
    %186 = vector.extract_strided_slice %179 {offsets = [6, 0, 0], sizes = [2, 8, 16], strides = [1, 1, 1]} : vector<8x8x16xf32> to vector<2x8x16xf32>
    %187 = vector.shape_cast %186 : vector<2x8x16xf32> to vector<16x16xf32>
    %188 = tpu.concatenate %181, %183, %185, %187 in 1 : vector<16x16xf32>, vector<16x16xf32>, vector<16x16xf32>, vector<16x16xf32> -> vector<16x64xf32>
    %189 = arith.truncf %188 : vector<16x64xf32> to vector<16x64xbf16>
    %c400 = arith.constant 400 : index
    %c0_44 = arith.constant 0 : index
    %190 = vector.load %arg2[%c400, %c0_44] : memref<656x192xbf16, #tpu.memory_space<vmem>>, vector<64x64xbf16>
    %cst_45 = arith.constant dense<0.000000e+00> : vector<16x64xf32>
    %191 = tpu.matmul %189, %190, %cst_45 {dimension_numbers = #tpu.dot_dimension_numbers<[1], [0], [0], [1], [0, 0, 1, 1], [], []>} : vector<16x64xbf16>, vector<64x64xbf16>, vector<16x64xf32> -> vector<16x64xf32>
    %c25 = arith.constant 25 : index
    %c0_46 = arith.constant 0 : index
    %192 = vector.load %arg3[%c25, %c0_46] : memref<40x192xf32, #tpu.memory_space<vmem>>, vector<1x64xf32>
    %193 = vector.broadcast %192 : vector<1x64xf32> to vector<16x64xf32>
    %194 = arith.addf %191, %193 : vector<16x64xf32>
    %195 = arith.addf %131, %194 : vector<16x64xf32>
    %c26 = arith.constant 26 : index
    %c0_47 = arith.constant 0 : index
    %196 = vector.load %arg3[%c26, %c0_47] : memref<40x192xf32, #tpu.memory_space<vmem>>, vector<1x64xf32>
    %c27 = arith.constant 27 : index
    %c0_48 = arith.constant 0 : index
    %197 = vector.load %arg3[%c27, %c0_48] : memref<40x192xf32, #tpu.memory_space<vmem>>, vector<1x64xf32>
    %cst_49 = arith.constant dense<0.000000e+00> : vector<16xf32>
    %198 = vector.multi_reduction <add>, %195, %cst_49 [1] : vector<16x64xf32> to vector<16xf32>
    %199 = vector.shape_cast %198 : vector<16xf32> to vector<16x1xf32>
    %cst_50 = arith.constant 6.400000e+01 : f32
    %200 = vector.broadcast %cst_50 : f32 to vector<16x1xf32>
    %201 = arith.divf %199, %200 : vector<16x1xf32>
    %202 = vector.broadcast %201 : vector<16x1xf32> to vector<16x64xf32>
    %203 = arith.subf %195, %202 : vector<16x64xf32>
    %204 = arith.mulf %203, %203 : vector<16x64xf32>
    %cst_51 = arith.constant dense<0.000000e+00> : vector<16xf32>
    %205 = vector.multi_reduction <add>, %204, %cst_51 [1] : vector<16x64xf32> to vector<16xf32>
    %206 = vector.shape_cast %205 : vector<16xf32> to vector<16x1xf32>
    %cst_52 = arith.constant 6.400000e+01 : f32
    %207 = vector.broadcast %cst_52 : f32 to vector<16x1xf32>
    %208 = arith.divf %206, %207 : vector<16x1xf32>
    %209 = vector.broadcast %201 : vector<16x1xf32> to vector<16x64xf32>
    %210 = arith.subf %195, %209 : vector<16x64xf32>
    %cst_53 = arith.constant 9.99999974E-6 : f32
    %211 = vector.broadcast %cst_53 : f32 to vector<16x1xf32>
    %212 = arith.addf %208, %211 : vector<16x1xf32>
    %213 = math.rsqrt %212 : vector<16x1xf32>
    %214 = vector.broadcast %213 : vector<16x1xf32> to vector<16x64xf32>
    %215 = arith.mulf %210, %214 : vector<16x64xf32>
    %216 = vector.broadcast %196 : vector<1x64xf32> to vector<16x64xf32>
    %217 = arith.mulf %215, %216 : vector<16x64xf32>
    %218 = vector.broadcast %197 : vector<1x64xf32> to vector<16x64xf32>
    %219 = arith.addf %217, %218 : vector<16x64xf32>
    %220 = arith.truncf %219 : vector<16x64xf32> to vector<16x64xbf16>
    %c464 = arith.constant 464 : index
    %c0_54 = arith.constant 0 : index
    %221 = vector.load %arg2[%c464, %c0_54] : memref<656x192xbf16, #tpu.memory_space<vmem>>, vector<64x128xbf16>
    %cst_55 = arith.constant dense<0.000000e+00> : vector<16x128xf32>
    %222 = tpu.matmul %220, %221, %cst_55 {dimension_numbers = #tpu.dot_dimension_numbers<[1], [0], [0], [1], [0, 0, 1, 1], [], []>} : vector<16x64xbf16>, vector<64x128xbf16>, vector<16x128xf32> -> vector<16x128xf32>
    %c28 = arith.constant 28 : index
    %c0_56 = arith.constant 0 : index
    %223 = vector.load %arg3[%c28, %c0_56] : memref<40x192xf32, #tpu.memory_space<vmem>>, vector<1x128xf32>
    %224 = vector.broadcast %223 : vector<1x128xf32> to vector<16x128xf32>
    %225 = arith.addf %222, %224 : vector<16x128xf32>
    %cst_57 = arith.constant 0.000000e+00 : f32
    %226 = vector.broadcast %cst_57 : f32 to vector<16x128xf32>
    %227 = arith.maximumf %225, %226 : vector<16x128xf32>
    %228 = arith.truncf %227 : vector<16x128xf32> to vector<16x128xbf16>
    %c528 = arith.constant 528 : index
    %c0_58 = arith.constant 0 : index
    %229 = vector.load %arg2[%c528, %c0_58] : memref<656x192xbf16, #tpu.memory_space<vmem>>, vector<128x64xbf16>
    %cst_59 = arith.constant dense<0.000000e+00> : vector<16x64xf32>
    %230 = tpu.matmul %228, %229, %cst_59 {dimension_numbers = #tpu.dot_dimension_numbers<[1], [0], [0], [1], [0, 0, 1, 1], [], []>} : vector<16x128xbf16>, vector<128x64xbf16>, vector<16x64xf32> -> vector<16x64xf32>
    %c29 = arith.constant 29 : index
    %c0_60 = arith.constant 0 : index
    %231 = vector.load %arg3[%c29, %c0_60] : memref<40x192xf32, #tpu.memory_space<vmem>>, vector<1x64xf32>
    %232 = vector.broadcast %231 : vector<1x64xf32> to vector<16x64xf32>
    %233 = arith.addf %230, %232 : vector<16x64xf32>
    %234 = arith.addf %219, %233 : vector<16x64xf32>
    %c30 = arith.constant 30 : index
    %c0_61 = arith.constant 0 : index
    %235 = vector.load %arg3[%c30, %c0_61] : memref<40x192xf32, #tpu.memory_space<vmem>>, vector<1x64xf32>
    %c31 = arith.constant 31 : index
    %c0_62 = arith.constant 0 : index
    %236 = vector.load %arg3[%c31, %c0_62] : memref<40x192xf32, #tpu.memory_space<vmem>>, vector<1x64xf32>
    %cst_63 = arith.constant dense<0.000000e+00> : vector<16xf32>
    %237 = vector.multi_reduction <add>, %234, %cst_63 [1] : vector<16x64xf32> to vector<16xf32>
    %238 = vector.shape_cast %237 : vector<16xf32> to vector<16x1xf32>
    %cst_64 = arith.constant 6.400000e+01 : f32
    %239 = vector.broadcast %cst_64 : f32 to vector<16x1xf32>
    %240 = arith.divf %238, %239 : vector<16x1xf32>
    %241 = vector.broadcast %240 : vector<16x1xf32> to vector<16x64xf32>
    %242 = arith.subf %234, %241 : vector<16x64xf32>
    %243 = arith.mulf %242, %242 : vector<16x64xf32>
    %cst_65 = arith.constant dense<0.000000e+00> : vector<16xf32>
    %244 = vector.multi_reduction <add>, %243, %cst_65 [1] : vector<16x64xf32> to vector<16xf32>
    %245 = vector.shape_cast %244 : vector<16xf32> to vector<16x1xf32>
    %cst_66 = arith.constant 6.400000e+01 : f32
    %246 = vector.broadcast %cst_66 : f32 to vector<16x1xf32>
    %247 = arith.divf %245, %246 : vector<16x1xf32>
    %248 = vector.broadcast %240 : vector<16x1xf32> to vector<16x64xf32>
    %249 = arith.subf %234, %248 : vector<16x64xf32>
    %cst_67 = arith.constant 9.99999974E-6 : f32
    %250 = vector.broadcast %cst_67 : f32 to vector<16x1xf32>
    %251 = arith.addf %247, %250 : vector<16x1xf32>
    %252 = math.rsqrt %251 : vector<16x1xf32>
    %253 = vector.broadcast %252 : vector<16x1xf32> to vector<16x64xf32>
    %254 = arith.mulf %249, %253 : vector<16x64xf32>
    %255 = vector.broadcast %235 : vector<1x64xf32> to vector<16x64xf32>
    %256 = arith.mulf %254, %255 : vector<16x64xf32>
    %257 = vector.broadcast %236 : vector<1x64xf32> to vector<16x64xf32>
    %258 = arith.addf %256, %257 : vector<16x64xf32>
    %259 = vector.shape_cast %258 : vector<16x64xf32> to vector<2x8x64xf32>
    %cst_68 = arith.constant dense<0.000000e+00> : vector<2x64xf32>
    %260 = vector.multi_reduction <add>, %259, %cst_68 [1] : vector<2x8x64xf32> to vector<2x64xf32>
    %cst_69 = arith.constant 8.000000e+00 : f32
    %261 = vector.broadcast %cst_69 : f32 to vector<2x64xf32>
    %262 = arith.divf %260, %261 : vector<2x64xf32>
    %c32 = arith.constant 32 : index
    %c0_70 = arith.constant 0 : index
    %263 = vector.load %arg3[%c32, %c0_70] : memref<40x192xf32, #tpu.memory_space<vmem>>, vector<1x64xf32>
    %c33 = arith.constant 33 : index
    %c0_71 = arith.constant 0 : index
    %264 = vector.load %arg3[%c33, %c0_71] : memref<40x192xf32, #tpu.memory_space<vmem>>, vector<1x1xf32>
    %265 = vector.broadcast %263 : vector<1x64xf32> to vector<2x64xf32>
    %266 = arith.mulf %262, %265 : vector<2x64xf32>
    %cst_72 = arith.constant dense<0.000000e+00> : vector<2xf32>
    %267 = vector.multi_reduction <add>, %266, %cst_72 [1] : vector<2x64xf32> to vector<2xf32>
    %268 = vector.shape_cast %267 : vector<2xf32> to vector<2x1xf32>
    %269 = vector.broadcast %264 : vector<1x1xf32> to vector<2x1xf32>
    %270 = arith.addf %268, %269 : vector<2x1xf32>
    %c0_73 = arith.constant 0 : index
    %c0_74 = arith.constant 0 : index
    %271 = vector.load %arg4[%c0_73, %c0_74] : memref<2x1xf32, #tpu.memory_space<vmem>>, vector<2x1xf32>
    tpu.vector_store %arg4[%c0_73, %c0_74], %270 {strides = array<i32>} : memref<2x1xf32, #tpu.memory_space<vmem>>, vector<2x1xf32>,
    return
  }
  func.func @transform_0(%arg0: i32) -> (i32, i32) {
    %c0_i32 = arith.constant 0 : i32
    %c0_i32_0 = arith.constant 0 : i32
    %c0_i32_1 = arith.constant 0 : i32
    return %c0_i32, %c0_i32_0 : i32, i32
  }
  func.func @transform_1(%arg0: i32) -> (i32, i32) {
    %c0_i32 = arith.constant 0 : i32
    %c0_i32_0 = arith.constant 0 : i32
    %c0_i32_1 = arith.constant 0 : i32
    return %c0_i32, %c0_i32_0 : i32, i32
  }
  func.func @transform_2(%arg0: i32) -> (i32, i32) {
    %c0_i32 = arith.constant 0 : i32
    %c0_i32_0 = arith.constant 0 : i32
    %c0_i32_1 = arith.constant 0 : i32
    return %c0_i32, %c0_i32_0 : i32, i32
  }
  func.func @transform_3(%arg0: i32) -> (i32, i32) {
    %c0_i32 = arith.constant 0 : i32
    %c0_i32_0 = arith.constant 0 : i32
    %c0_i32_1 = arith.constant 0 : i32
    return %c0_i32, %c0_i32_0 : i32, i32
  }
}

</mosaic_0001>

<llo_original>
// kernel: tpu_custom_call.1
$region0: #{tpu_custom_call.1}
  #allocation0 [shape = 'u32[]', space=smem, size = 0x4, offset = 0x4, fixed_abs, tag = 'smem constant byte address 0x4 - core index']
  #allocation1 [shape = 'u32[144,128]{1,0:T(1,128)}', space=vmem, size = 0x12000, scoped, tag = 'internal scratch']
  %s0 = inlined_call_operand.vmem [shape: bf16[16,16], index: 0, kind: input, shape index: {}]
  %s1 = inlined_call_operand.vmem [shape: bf16[656,192], index: 1, kind: input, shape index: {}]
  %s2 = inlined_call_operand.vmem [shape: f32[40,192], index: 2, kind: input, shape index: {}]
  %s3 = inlined_call_operand.vmem [shape: f32[2,1], index: 3, kind: output, shape index: {}]
  %s4 = sld [smem:[#allocation0]]
  $region22: #{tpu_custom_call.1} parent=0
    _
  %s6 = ssub.s32 1, %s4
  %s7 = scalar_select 0, %s6, %s4
  // Predicated region
  $region2: #{tpu_custom_call.1} parent=0 // pred_check
    _
  $region3: #{tpu_custom_call.1} parent=0 // pred_check_branch
    %9 = sbr.rel (0) target = $region5
  $region4: #{tpu_custom_call.1} parent=0 // pred_region
    _
  $region5: #{tpu_custom_call.1} parent=0 // pred_fallthru
    _
  // Predicated region
  $region6: #{tpu_custom_call.1} parent=0 // pred_check
    _
  $region7: #{tpu_custom_call.1} parent=0 // pred_check_branch
    %11 = sbr.rel (0) target = $region9
  $region8: #{tpu_custom_call.1} parent=0 // pred_region
    _
  $region9: #{tpu_custom_call.1} parent=0 // pred_fallthru
    _
  // Predicated region
  $region10: #{tpu_custom_call.1} parent=0 // pred_check
    _
  $region11: #{tpu_custom_call.1} parent=0 // pred_check_branch
    %13 = sbr.rel (0) target = $region13
  $region12: #{tpu_custom_call.1} parent=0 // pred_region
    _
  $region13: #{tpu_custom_call.1} parent=0 // pred_fallthru
    _
  %v15 = vld [vmem:[%s0] sm:$0xf]
  %v16 = vld [vmem:[%s0 + $0x4] sm:$0xf]
  %v17 = vld [vmem:[%s1] sm:$0xf]
  %v18 = vld [vmem:[%s1 + $0x8] sm:$0xf]
  %v19 = vld [vmem:[%s2] sm:$0xff]
  %v20 = vld [vmem:[%s2 + $0x10] sm:$0xff]
  %v23 = vunpack.c.l.b16 %v15
  %v24 = vunpack.c.l.b16 %v16
  %v25 = vpack.c.b16 %v24, %v23
  %v28 = vunpack.c.l.b16 %v17
  %v29 = vunpack.c.l.b16 %v18
  %v30 = vpack.c.b16 %v29, %v28
  %vm32 = vcmask 130048
  %v34 = vsel %vm32, %v25, 0
  %36 = vmatprep.subr.bf16.mxu0 0
  %37 = vmatpush1.bf16.msra.mxu0 %v30
  %38 = vmatprep.subr.bf16.mxu0 0
  %39 = vmatpush1.bf16.msra.mxu0 0
  %40 = vmatprep.subr.bf16.mxu0 0
  %41 = vmatpush1.bf16.msra.mxu0 0
  %42 = vmatprep.subr.bf16.mxu0 0
  %43 = vmatpush1.bf16.msra.mxu0 0
  %44 = vmatprep.subr.bf16.mxu0 0
  %45 = vmatpush1.bf16.msra.mxu0 0
  %46 = vmatprep.subr.bf16.mxu0 0
  %47 = vmatpush1.bf16.msra.mxu0 0
  %48 = vmatprep.subr.bf16.mxu0 0
  %49 = vmatpush1.bf16.msra.mxu0 0
  %50 = vmatprep.subr.bf16.mxu0 0
  %51 = vmatpush1.bf16.msra.mxu0 0
  %52 = vmatprep.subr.bf16.mxu0 0
  %53 = vmatpush1.bf16.msra.mxu0 0
  %54 = vmatprep.subr.bf16.mxu0 0
  %55 = vmatpush1.bf16.msra.mxu0 0
  %56 = vmatprep.subr.bf16.mxu0 0
  %57 = vmatpush1.bf16.msra.mxu0 0
  %58 = vmatprep.subr.bf16.mxu0 0
  %59 = vmatpush1.bf16.msra.mxu0 0
  %60 = vmatprep.subr.bf16.mxu0 0
  %61 = vmatpush1.bf16.msra.mxu0 0
  %62 = vmatprep.subr.bf16.mxu0 0
  %63 = vmatpush1.bf16.msra.mxu0 0
  %64 = vmatprep.subr.bf16.mxu0 0
  %65 = vmatpush1.bf16.msra.mxu0 0
  %66 = vmatprep.subr.bf16.mxu0 0
  %67 = vmatpush1.bf16.msra.mxu0 0
  %68 = vmatprep.mubr.bf16.mxu0 0
  %69 = vmatmul.mubr.bf16.gmra.mrb[0].mxu0 %v34
  %v70 = vpop.f32.mrb[0].mxu0
  %v71 = vadd.f32 %v19, %v70
  %v72 = vpop.f32.mrb[0].mxu0
  %v73 = vpop.f32.mrb[0].mxu0
  %v74 = vadd.f32 %v20, %v73
  %v75 = vpop.f32.mrb[0].mxu0
  %76 = vdwg.mxu0
  %v77 = vpack.c.bf16 %v74, %v71
  %v78 = vld [vmem:[%s1 + $0x10] sm:$0xff]
  %v79 = vld [vmem:[%s1 + $0x18] sm:$0xff]
  %v80 = vld [vmem:[%s1 + $0x20] sm:$0xff]
  %v81 = vld [vmem:[%s1 + $0x28] sm:$0xff]
  %v82 = vld [vmem:[%s1 + $0x30] sm:$0xff]
  %v83 = vld [vmem:[%s1 + $0x38] sm:$0xff]
  %v84 = vld [vmem:[%s1 + $0x40] sm:$0xff]
  %v85 = vld [vmem:[%s1 + $0x48] sm:$0xff]
  %s86 = scalar_lea.vmem %s2, 32
  %v87 = vld [vmem:[%s86] ss:$8 sm:$0x3]
  %v89 = vlaneseq
  %v90 = vshrl.u32 %v89, 7
  %v91 = vsub.s32 0, %v90
  %v92 = vrot.slane %v87, %v91
  %v93 = vlaneseq
  %v94 = vshrl.u32 %v93, 7
  %v95 = vsub.s32 1, %v94
  %v96 = vrot.slane %v87, %v95
  %v107 = vunpack.c.l.b16 %v78
  %v108 = vunpack.c.h.b16 %v78
  %v109 = vunpack.c.l.b16 %v79
  %v110 = vunpack.c.h.b16 %v79
  %v111 = vunpack.c.l.b16 %v80
  %v112 = vunpack.c.h.b16 %v80
  %v113 = vunpack.c.l.b16 %v81
  %v114 = vunpack.c.h.b16 %v81
  %v115 = vunpack.c.l.b16 %v82
  %v116 = vunpack.c.h.b16 %v82
  %v117 = vunpack.c.l.b16 %v83
  %v118 = vunpack.c.h.b16 %v83
  %v119 = vunpack.c.l.b16 %v84
  %v120 = vunpack.c.h.b16 %v84
  %v121 = vunpack.c.l.b16 %v85
  %v122 = vunpack.c.h.b16 %v85
  %v123 = vpack.c.b16 %v109, %v107
  %v124 = vpack.c.b16 %v110, %v108
  %v125 = vpack.c.b16 %v113, %v111
  %v126 = vpack.c.b16 %v114, %v112
  %v127 = vpack.c.b16 %v117, %v115
  %v128 = vpack.c.b16 %v118, %v116
  %v129 = vpack.c.b16 %v121, %v119
  %v130 = vpack.c.b16 %v122, %v120
  %vm139 = vcmask 523264
  %v141 = vsel %vm139, %v77, 0
  %143 = vmatprep.subr.bf16.mxu0 %v124
  %144 = vmatpush1.bf16.msra.mxu0 %v123
  %145 = vmatprep.subr.bf16.mxu0 %v126
  %146 = vmatpush1.bf16.msra.mxu0 %v125
  %147 = vmatprep.subr.bf16.mxu0 %v128
  %148 = vmatpush1.bf16.msra.mxu0 %v127
  %149 = vmatprep.subr.bf16.mxu0 %v130
  %150 = vmatpush1.bf16.msra.mxu0 %v129
  %151 = vmatprep.subr.bf16.mxu0 0
  %152 = vmatpush1.bf16.msra.mxu0 0
  %153 = vmatprep.subr.bf16.mxu0 0
  %154 = vmatpush1.bf16.msra.mxu0 0
  %155 = vmatprep.subr.bf16.mxu0 0
  %156 = vmatpush1.bf16.msra.mxu0 0
  %157 = vmatprep.subr.bf16.mxu0 0
  %158 = vmatpush1.bf16.msra.mxu0 0
  %159 = vmatprep.subr.bf16.mxu0 0
  %160 = vmatpush1.bf16.msra.mxu0 0
  %161 = vmatprep.subr.bf16.mxu0 0
  %162 = vmatpush1.bf16.msra.mxu0 0
  %163 = vmatprep.subr.bf16.mxu0 0
  %164 = vmatpush1.bf16.msra.mxu0 0
  %165 = vmatprep.subr.bf16.mxu0 0
  %166 = vmatpush1.bf16.msra.mxu0 0
  %167 = vmatprep.subr.bf16.mxu0 0
  %168 = vmatpush1.bf16.msra.mxu0 0
  %169 = vmatprep.subr.bf16.mxu0 0
  %170 = vmatpush1.bf16.msra.mxu0 0
  %171 = vmatprep.subr.bf16.mxu0 0
  %172 = vmatpush1.bf16.msra.mxu0 0
  %173 = vmatprep.subr.bf16.mxu0 0
  %174 = vmatpush1.bf16.msra.mxu0 0
  %175 = vmatprep.mubr.bf16.mxu0 0
  %176 = vmatmul.mubr.bf16.gmra.mrb[0].mxu0 %v141
  %v177 = vpop.f32.mrb[0].mxu0
  %v178 = vadd.f32 %v92, %v177
  %v179 = vpop.f32.mrb[0].mxu0
  %v180 = vadd.f32 %v96, %v179
  %v181 = vpop.f32.mrb[0].mxu0
  %v182 = vadd.f32 %v92, %v181
  %v183 = vpop.f32.mrb[0].mxu0
  %v184 = vadd.f32 %v96, %v183
  %185 = vdwg.mxu0
  %188 = vrot.lane.b32.xlu0 %v178, 112
  %v189 = vpop.permute.xlu0 %188
  %190 = vrot.lane.b32.xlu0 %v182, 112
  %v191 = vpop.permute.xlu0 %190
  %194 = vrot.lane.b32.xlu0 %v178, 96
  %v195 = vpop.permute.xlu0 %194
  %196 = vrot.lane.b32.xlu0 %v182, 96
  %v197 = vpop.permute.xlu0 %196
  %200 = vrot.lane.b32.xlu0 %v178, 80
  %v201 = vpop.permute.xlu0 %200
  %202 = vrot.lane.b32.xlu0 %v182, 80
  %v203 = vpop.permute.xlu0 %202
  %v206 = vpack.c.bf16 %v178, %v178
  %v207 = vpack.c.bf16 %v182, %v182
  %v208 = vpack.c.bf16 %v189, %v189
  %v209 = vpack.c.bf16 %v191, %v191
  %v210 = vpack.c.bf16 %v195, %v195
  %v211 = vpack.c.bf16 %v197, %v197
  %v212 = vpack.c.bf16 %v201, %v201
  %v213 = vpack.c.bf16 %v203, %v203
  %216 = vrot.lane.b32.xlu0 %v180, 112
  %v217 = vpop.permute.xlu0 %216
  %218 = vrot.lane.b32.xlu0 %v184, 112
  %v219 = vpop.permute.xlu0 %218
  %222 = vrot.lane.b32.xlu0 %v180, 96
  %v223 = vpop.permute.xlu0 %222
  %224 = vrot.lane.b32.xlu0 %v184, 96
  %v225 = vpop.permute.xlu0 %224
  %228 = vrot.lane.b32.xlu0 %v180, 80
  %v229 = vpop.permute.xlu0 %228
  %230 = vrot.lane.b32.xlu0 %v184, 80
  %v231 = vpop.permute.xlu0 %230
  %v234 = vpack.c.bf16 %v180, %v180
  %v235 = vpack.c.bf16 %v184, %v184
  %v236 = vpack.c.bf16 %v217, %v217
  %v237 = vpack.c.bf16 %v219, %v219
  %v238 = vpack.c.bf16 %v223, %v223
  %v239 = vpack.c.bf16 %v225, %v225
  %v240 = vpack.c.bf16 %v229, %v229
  %v241 = vpack.c.bf16 %v231, %v231
  %243 = vrot.lane.b32.xlu0 %v206, 64
  %v244 = vpop.permute.xlu0 %243
  %v246 = vsel %vm32, %v206, 0
  %v249 = vsel %vm32, %v244, 0
  %251 = vmatprep.subr.bf16.mxu0 0
  %252 = vmatpush1.bf16.xpose.msra.mxu0 %v249
  %253 = vmatprep.subr.bf16.mxu0 0
  %254 = vmatpush1.bf16.xpose.msra.mxu0 0
  %255 = vmatprep.subr.bf16.mxu0 0
  %256 = vmatpush1.bf16.xpose.msra.mxu0 0
  %257 = vmatprep.subr.bf16.mxu0 0
  %258 = vmatpush1.bf16.xpose.msra.mxu0 0
  %259 = vmatprep.subr.bf16.mxu0 0
  %260 = vmatpush1.bf16.xpose.msra.mxu0 0
  %261 = vmatprep.subr.bf16.mxu0 0
  %262 = vmatpush1.bf16.xpose.msra.mxu0 0
  %263 = vmatprep.subr.bf16.mxu0 0
  %264 = vmatpush1.bf16.xpose.msra.mxu0 0
  %265 = vmatprep.subr.bf16.mxu0 0
  %266 = vmatpush1.bf16.xpose.msra.mxu0 0
  %267 = vmatprep.subr.bf16.mxu0 0
  %268 = vmatpush1.bf16.xpose.msra.mxu0 0
  %269 = vmatprep.subr.bf16.mxu0 0
  %270 = vmatpush1.bf16.xpose.msra.mxu0 0
  %271 = vmatprep.subr.bf16.mxu0 0
  %272 = vmatpush1.bf16.xpose.msra.mxu0 0
  %273 = vmatprep.subr.bf16.mxu0 0
  %274 = vmatpush1.bf16.xpose.msra.mxu0 0
  %275 = vmatprep.subr.bf16.mxu0 0
  %276 = vmatpush1.bf16.xpose.msra.mxu0 0
  %277 = vmatprep.subr.bf16.mxu0 0
  %278 = vmatpush1.bf16.xpose.msra.mxu0 0
  %279 = vmatprep.subr.bf16.mxu0 0
  %280 = vmatpush1.bf16.xpose.msra.mxu0 0
  %281 = vmatprep.subr.bf16.mxu0 0
  %282 = vmatpush1.bf16.xpose.msra.mxu0 0
  %283 = vmatprep.mubr.bf16.mxu0 0
  %284 = vmatmul.mubr.bf16.gmra.mrb[0].mxu0 %v246
  %v285 = vpop.f32.mrb[0].mxu0
  %v286 = vadd.f32 0.0, %v285
  %v287 = vpop.f32.mrb[0].mxu0
  %v288 = vpop.f32.mrb[0].mxu0
  %v289 = vpop.f32.mrb[0].mxu0
  %290 = vdwg.mxu0
  %292 = vrot.lane.b32.xlu0 %v207, 64
  %v293 = vpop.permute.xlu0 %292
  %v295 = vsel %vm32, %v207, 0
  %v298 = vsel %vm32, %v293, 0
  %300 = vmatprep.subr.bf16.mxu0 0
  %301 = vmatpush1.bf16.xpose.msra.mxu0 %v298
  %302 = vmatprep.subr.bf16.mxu0 0
  %303 = vmatpush1.bf16.xpose.msra.mxu0 0
  %304 = vmatprep.subr.bf16.mxu0 0
  %305 = vmatpush1.bf16.xpose.msra.mxu0 0
  %306 = vmatprep.subr.bf16.mxu0 0
  %307 = vmatpush1.bf16.xpose.msra.mxu0 0
  %308 = vmatprep.subr.bf16.mxu0 0
  %309 = vmatpush1.bf16.xpose.msra.mxu0 0
  %310 = vmatprep.subr.bf16.mxu0 0
  %311 = vmatpush1.bf16.xpose.msra.mxu0 0
  %312 = vmatprep.subr.bf16.mxu0 0
  %313 = vmatpush1.bf16.xpose.msra.mxu0 0
  %314 = vmatprep.subr.bf16.mxu0 0
  %315 = vmatpush1.bf16.xpose.msra.mxu0 0
  %316 = vmatprep.subr.bf16.mxu0 0
  %317 = vmatpush1.bf16.xpose.msra.mxu0 0
  %318 = vmatprep.subr.bf16.mxu0 0
  %319 = vmatpush1.bf16.xpose.msra.mxu0 0
  %320 = vmatprep.subr.bf16.mxu0 0
  %321 = vmatpush1.bf16.xpose.msra.mxu0 0
  %322 = vmatprep.subr.bf16.mxu0 0
  %323 = vmatpush1.bf16.xpose.msra.mxu0 0
  %324 = vmatprep.subr.bf16.mxu0 0
  %325 = vmatpush1.bf16.xpose.msra.mxu0 0
  %326 = vmatprep.subr.bf16.mxu0 0
  %327 = vmatpush1.bf16.xpose.msra.mxu0 0
  %328 = vmatprep.subr.bf16.mxu0 0
  %329 = vmatpush1.bf16.xpose.msra.mxu0 0
  %330 = vmatprep.subr.bf16.mxu0 0
  %331 = vmatpush1.bf16.xpose.msra.mxu0 0
  %332 = vmatprep.mubr.bf16.mxu0 0
  %333 = vmatmul.mubr.bf16.gmra.mrb[0].mxu0 %v295
  %v334 = vpop.f32.mrb[0].mxu0
  %v335 = vadd.f32 0.0, %v334
  %v336 = vpop.f32.mrb[0].mxu0
  %v337 = vpop.f32.mrb[0].mxu0
  %v338 = vpop.f32.mrb[0].mxu0
  %339 = vdwg.mxu0
  %341 = vrot.lane.b32.xlu0 %v208, 64
  %v342 = vpop.permute.xlu0 %341
  %v344 = vsel %vm32, %v208, 0
  %v347 = vsel %vm32, %v342, 0
  %349 = vmatprep.subr.bf16.mxu0 0
  %350 = vmatpush1.bf16.xpose.msra.mxu0 %v347
  %351 = vmatprep.subr.bf16.mxu0 0
  %352 = vmatpush1.bf16.xpose.msra.mxu0 0
  %353 = vmatprep.subr.bf16.mxu0 0
  %354 = vmatpush1.bf16.xpose.msra.mxu0 0
  %355 = vmatprep.subr.bf16.mxu0 0
  %356 = vmatpush1.bf16.xpose.msra.mxu0 0
  %357 = vmatprep.subr.bf16.mxu0 0
  %358 = vmatpush1.bf16.xpose.msra.mxu0 0
  %359 = vmatprep.subr.bf16.mxu0 0
  %360 = vmatpush1.bf16.xpose.msra.mxu0 0
  %361 = vmatprep.subr.bf16.mxu0 0
  %362 = vmatpush1.bf16.xpose.msra.mxu0 0
  %363 = vmatprep.subr.bf16.mxu0 0
  %364 = vmatpush1.bf16.xpose.msra.mxu0 0
  %365 = vmatprep.subr.bf16.mxu0 0
  %366 = vmatpush1.bf16.xpose.msra.mxu0 0
  %367 = vmatprep.subr.bf16.mxu0 0
  %368 = vmatpush1.bf16.xpose.msra.mxu0 0
  %369 = vmatprep.subr.bf16.mxu0 0
  %370 = vmatpush1.bf16.xpose.msra.mxu0 0
  %371 = vmatprep.subr.bf16.mxu0 0
  %372 = vmatpush1.bf16.xpose.msra.mxu0 0
  %373 = vmatprep.subr.bf16.mxu0 0
  %374 = vmatpush1.bf16.xpose.msra.mxu0 0
  %375 = vmatprep.subr.bf16.mxu0 0
  %376 = vmatpush1.bf16.xpose.msra.mxu0 0
  %377 = vmatprep.subr.bf16.mxu0 0
  %378 = vmatpush1.bf16.xpose.msra.mxu0 0
  %379 = vmatprep.subr.bf16.mxu0 0
  %380 = vmatpush1.bf16.xpose.msra.mxu0 0
  %381 = vmatprep.mubr.bf16.mxu0 0
  %382 = vmatmul.mubr.bf16.gmra.mrb[0].mxu0 %v344
  %v383 = vpop.f32.mrb[0].mxu0
  %v384 = vadd.f32 0.0, %v383
  %v385 = vpop.f32.mrb[0].mxu0
  %v386 = vpop.f32.mrb[0].mxu0
  %v387 = vpop.f32.mrb[0].mxu0
  %388 = vdwg.mxu0
  %390 = vrot.lane.b32.xlu0 %v209, 64
  %v391 = vpop.permute.xlu0 %390
  %v393 = vsel %vm32, %v209, 0
  %v396 = vsel %vm32, %v391, 0
  %398 = vmatprep.subr.bf16.mxu0 0
  %399 = vmatpush1.bf16.xpose.msra.mxu0 %v396
  %400 = vmatprep.subr.bf16.mxu0 0
  %401 = vmatpush1.bf16.xpose.msra.mxu0 0
  %402 = vmatprep.subr.bf16.mxu0 0
  %403 = vmatpush1.bf16.xpose.msra.mxu0 0
  %404 = vmatprep.subr.bf16.mxu0 0
  %405 = vmatpush1.bf16.xpose.msra.mxu0 0
  %406 = vmatprep.subr.bf16.mxu0 0
  %407 = vmatpush1.bf16.xpose.msra.mxu0 0
  %408 = vmatprep.subr.bf16.mxu0 0
  %409 = vmatpush1.bf16.xpose.msra.mxu0 0
  %410 = vmatprep.subr.bf16.mxu0 0
  %411 = vmatpush1.bf16.xpose.msra.mxu0 0
  %412 = vmatprep.subr.bf16.mxu0 0
  %413 = vmatpush1.bf16.xpose.msra.mxu0 0
  %414 = vmatprep.subr.bf16.mxu0 0
  %415 = vmatpush1.bf16.xpose.msra.mxu0 0
  %416 = vmatprep.subr.bf16.mxu0 0
  %417 = vmatpush1.bf16.xpose.msra.mxu0 0
  %418 = vmatprep.subr.bf16.mxu0 0
  %419 = vmatpush1.bf16.xpose.msra.mxu0 0
  %420 = vmatprep.subr.bf16.mxu0 0
  %421 = vmatpush1.bf16.xpose.msra.mxu0 0
  %422 = vmatprep.subr.bf16.mxu0 0
  %423 = vmatpush1.bf16.xpose.msra.mxu0 0
  %424 = vmatprep.subr.bf16.mxu0 0
  %425 = vmatpush1.bf16.xpose.msra.mxu0 0
  %426 = vmatprep.subr.bf16.mxu0 0
  %427 = vmatpush1.bf16.xpose.msra.mxu0 0
  %428 = vmatprep.subr.bf16.mxu0 0
  %429 = vmatpush1.bf16.xpose.msra.mxu0 0
  %430 = vmatprep.mubr.bf16.mxu0 0
  %431 = vmatmul.mubr.bf16.gmra.mrb[0].mxu0 %v393
  %v432 = vpop.f32.mrb[0].mxu0
  %v433 = vadd.f32 0.0, %v432
  %v434 = vpop.f32.mrb[0].mxu0
  %v435 = vpop.f32.mrb[0].mxu0
  %v436 = vpop.f32.mrb[0].mxu0
  %437 = vdwg.mxu0
  %439 = vrot.lane.b32.xlu0 %v210, 64
  %v440 = vpop.permute.xlu0 %439
  %v442 = vsel %vm32, %v210, 0
  %v445 = vsel %vm32, %v440, 0
  %447 = vmatprep.subr.bf16.mxu0 0
  %448 = vmatpush1.bf16.xpose.msra.mxu0 %v445
  %449 = vmatprep.subr.bf16.mxu0 0
  %450 = vmatpush1.bf16.xpose.msra.mxu0 0
  %451 = vmatprep.subr.bf16.mxu0 0
  %452 = vmatpush1.bf16.xpose.msra.mxu0 0
  %453 = vmatprep.subr.bf16.mxu0 0
  %454 = vmatpush1.bf16.xpose.msra.mxu0 0
  %455 = vmatprep.subr.bf16.mxu0 0
  %456 = vmatpush1.bf16.xpose.msra.mxu0 0
  %457 = vmatprep.subr.bf16.mxu0 0
  %458 = vmatpush1.bf16.xpose.msra.mxu0 0
  %459 = vmatprep.subr.bf16.mxu0 0
  %460 = vmatpush1.bf16.xpose.msra.mxu0 0
  %461 = vmatprep.subr.bf16.mxu0 0
  %462 = vmatpush1.bf16.xpose.msra.mxu0 0
  %463 = vmatprep.subr.bf16.mxu0 0
  %464 = vmatpush1.bf16.xpose.msra.mxu0 0
  %465 = vmatprep.subr.bf16.mxu0 0
  %466 = vmatpush1.bf16.xpose.msra.mxu0 0
  %467 = vmatprep.subr.bf16.mxu0 0
  %468 = vmatpush1.bf16.xpose.msra.mxu0 0
  %469 = vmatprep.subr.bf16.mxu0 0
  %470 = vmatpush1.bf16.xpose.msra.mxu0 0
  %471 = vmatprep.subr.bf16.mxu0 0
  %472 = vmatpush1.bf16.xpose.msra.mxu0 0
  %473 = vmatprep.subr.bf16.mxu0 0
  %474 = vmatpush1.bf16.xpose.msra.mxu0 0
  %475 = vmatprep.subr.bf16.mxu0 0
  %476 = vmatpush1.bf16.xpose.msra.mxu0 0
  %477 = vmatprep.subr.bf16.mxu0 0
  %478 = vmatpush1.bf16.xpose.msra.mxu0 0
  %479 = vmatprep.mubr.bf16.mxu0 0
  %480 = vmatmul.mubr.bf16.gmra.mrb[0].mxu0 %v442
  %v481 = vpop.f32.mrb[0].mxu0
  %v482 = vadd.f32 0.0, %v481
  %v483 = vpop.f32.mrb[0].mxu0
  %v484 = vpop.f32.mrb[0].mxu0
  %v485 = vpop.f32.mrb[0].mxu0
  %486 = vdwg.mxu0
  %488 = vrot.lane.b32.xlu0 %v211, 64
  %v489 = vpop.permute.xlu0 %488
  %v491 = vsel %vm32, %v211, 0
  %v494 = vsel %vm32, %v489, 0
  %496 = vmatprep.subr.bf16.mxu0 0
  %497 = vmatpush1.bf16.xpose.msra.mxu0 %v494
  %498 = vmatprep.subr.bf16.mxu0 0
  %499 = vmatpush1.bf16.xpose.msra.mxu0 0
  %500 = vmatprep.subr.bf16.mxu0 0
  %501 = vmatpush1.bf16.xpose.msra.mxu0 0
  %502 = vmatprep.subr.bf16.mxu0 0
  %503 = vmatpush1.bf16.xpose.msra.mxu0 0
  %504 = vmatprep.subr.bf16.mxu0 0
  %505 = vmatpush1.bf16.xpose.msra.mxu0 0
  %506 = vmatprep.subr.bf16.mxu0 0
  %507 = vmatpush1.bf16.xpose.msra.mxu0 0
  %508 = vmatprep.subr.bf16.mxu0 0
  %509 = vmatpush1.bf16.xpose.msra.mxu0 0
  %510 = vmatprep.subr.bf16.mxu0 0
  %511 = vmatpush1.bf16.xpose.msra.mxu0 0
  %512 = vmatprep.subr.bf16.mxu0 0
  %513 = vmatpush1.bf16.xpose.msra.mxu0 0
  %514 = vmatprep.subr.bf16.mxu0 0
  %515 = vmatpush1.bf16.xpose.msra.mxu0 0
  %516 = vmatprep.subr.bf16.mxu0 0
  %517 = vmatpush1.bf16.xpose.msra.mxu0 0
  %518 = vmatprep.subr.bf16.mxu0 0
  %519 = vmatpush1.bf16.xpose.msra.mxu0 0
  %520 = vmatprep.subr.bf16.mxu0 0
  %521 = vmatpush1.bf16.xpose.msra.mxu0 0
  %522 = vmatprep.subr.bf16.mxu0 0
  %523 = vmatpush1.bf16.xpose.msra.mxu0 0
  %524 = vmatprep.subr.bf16.mxu0 0
  %525 = vmatpush1.bf16.xpose.msra.mxu0 0
  %526 = vmatprep.subr.bf16.mxu0 0
  %527 = vmatpush1.bf16.xpose.msra.mxu0 0
  %528 = vmatprep.mubr.bf16.mxu0 0
  %529 = vmatmul.mubr.bf16.gmra.mrb[0].mxu0 %v491
  %v530 = vpop.f32.mrb[0].mxu0
  %v531 = vadd.f32 0.0, %v530
  %v532 = vpop.f32.mrb[0].mxu0
  %v533 = vpop.f32.mrb[0].mxu0
  %v534 = vpop.f32.mrb[0].mxu0
  %535 = vdwg.mxu0
  %537 = vrot.lane.b32.xlu0 %v212, 64
  %v538 = vpop.permute.xlu0 %537
  %v540 = vsel %vm32, %v212, 0
  %v543 = vsel %vm32, %v538, 0
  %545 = vmatprep.subr.bf16.mxu0 0
  %546 = vmatpush1.bf16.xpose.msra.mxu0 %v543
  %547 = vmatprep.subr.bf16.mxu0 0
  %548 = vmatpush1.bf16.xpose.msra.mxu0 0
  %549 = vmatprep.subr.bf16.mxu0 0
  %550 = vmatpush1.bf16.xpose.msra.mxu0 0
  %551 = vmatprep.subr.bf16.mxu0 0
  %552 = vmatpush1.bf16.xpose.msra.mxu0 0
  %553 = vmatprep.subr.bf16.mxu0 0
  %554 = vmatpush1.bf16.xpose.msra.mxu0 0
  %555 = vmatprep.subr.bf16.mxu0 0
  %556 = vmatpush1.bf16.xpose.msra.mxu0 0
  %557 = vmatprep.subr.bf16.mxu0 0
  %558 = vmatpush1.bf16.xpose.msra.mxu0 0
  %559 = vmatprep.subr.bf16.mxu0 0
  %560 = vmatpush1.bf16.xpose.msra.mxu0 0
  %561 = vmatprep.subr.bf16.mxu0 0
  %562 = vmatpush1.bf16.xpose.msra.mxu0 0
  %563 = vmatprep.subr.bf16.mxu0 0
  %564 = vmatpush1.bf16.xpose.msra.mxu0 0
  %565 = vmatprep.subr.bf16.mxu0 0
  %566 = vmatpush1.bf16.xpose.msra.mxu0 0
  %567 = vmatprep.subr.bf16.mxu0 0
  %568 = vmatpush1.bf16.xpose.msra.mxu0 0
  %569 = vmatprep.subr.bf16.mxu0 0
  %570 = vmatpush1.bf16.xpose.msra.mxu0 0
  %571 = vmatprep.subr.bf16.mxu0 0
  %572 = vmatpush1.bf16.xpose.msra.mxu0 0
  %573 = vmatprep.subr.bf16.mxu0 0
  %574 = vmatpush1.bf16.xpose.msra.mxu0 0
  %575 = vmatprep.subr.bf16.mxu0 0
  %576 = vmatpush1.bf16.xpose.msra.mxu0 0
  %577 = vmatprep.mubr.bf16.mxu0 0
  %578 = vmatmul.mubr.bf16.gmra.mrb[0].mxu0 %v540
  %v579 = vpop.f32.mrb[0].mxu0
  %v580 = vadd.f32 0.0, %v579
  %v581 = vpop.f32.mrb[0].mxu0
  %v582 = vpop.f32.mrb[0].mxu0
  %v583 = vpop.f32.mrb[0].mxu0
  %584 = vdwg.mxu0
  %586 = vrot.lane.b32.xlu0 %v213, 64
  %v587 = vpop.permute.xlu0 %586
  %v589 = vsel %vm32, %v213, 0
  %v592 = vsel %vm32, %v587, 0
  %594 = vmatprep.subr.bf16.mxu0 0
  %595 = vmatpush1.bf16.xpose.msra.mxu0 %v592
  %596 = vmatprep.subr.bf16.mxu0 0
  %597 = vmatpush1.bf16.xpose.msra.mxu0 0
  %598 = vmatprep.subr.bf16.mxu0 0
  %599 = vmatpush1.bf16.xpose.msra.mxu0 0
  %600 = vmatprep.subr.bf16.mxu0 0
  %601 = vmatpush1.bf16.xpose.msra.mxu0 0
  %602 = vmatprep.subr.bf16.mxu0 0
  %603 = vmatpush1.bf16.xpose.msra.mxu0 0
  %604 = vmatprep.subr.bf16.mxu0 0
  %605 = vmatpush1.bf16.xpose.msra.mxu0 0
  %606 = vmatprep.subr.bf16.mxu0 0
  %607 = vmatpush1.bf16.xpose.msra.mxu0 0
  %608 = vmatprep.subr.bf16.mxu0 0
  %609 = vmatpush1.bf16.xpose.msra.mxu0 0
  %610 = vmatprep.subr.bf16.mxu0 0
  %611 = vmatpush1.bf16.xpose.msra.mxu0 0
  %612 = vmatprep.subr.bf16.mxu0 0
  %613 = vmatpush1.bf16.xpose.msra.mxu0 0
  %614 = vmatprep.subr.bf16.mxu0 0
  %615 = vmatpush1.bf16.xpose.msra.mxu0 0
  %616 = vmatprep.subr.bf16.mxu0 0
  %617 = vmatpush1.bf16.xpose.msra.mxu0 0
  %618 = vmatprep.subr.bf16.mxu0 0
  %619 = vmatpush1.bf16.xpose.msra.mxu0 0
  %620 = vmatprep.subr.bf16.mxu0 0
  %621 = vmatpush1.bf16.xpose.msra.mxu0 0
  %622 = vmatprep.subr.bf16.mxu0 0
  %623 = vmatpush1.bf16.xpose.msra.mxu0 0
  %624 = vmatprep.subr.bf16.mxu0 0
  %625 = vmatpush1.bf16.xpose.msra.mxu0 0
  %626 = vmatprep.mubr.bf16.mxu0 0
  %627 = vmatmul.mubr.bf16.gmra.mrb[0].mxu0 %v589
  %v628 = vpop.f32.mrb[0].mxu0
  %v629 = vadd.f32 0.0, %v628
  %v630 = vpop.f32.mrb[0].mxu0
  %v631 = vpop.f32.mrb[0].mxu0
  %v632 = vpop.f32.mrb[0].mxu0
  %633 = vdwg.mxu0
  %vm634 = vcmask 64512
  %v635 = vsel %vm634, %v286, -inf
  %636 = vmax.xlane.f32.xlu0 %v635
  %v637 = vpop.xlane.xlu0 %636
  %v638 = vsel %vm634, %v335, -inf
  %639 = vmax.xlane.f32.xlu0 %v638
  %v640 = vpop.xlane.xlu0 %639
  %v641 = vsel %vm634, %v384, -inf
  %642 = vmax.xlane.f32.xlu0 %v641
  %v643 = vpop.xlane.xlu0 %642
  %v644 = vsel %vm634, %v433, -inf
  %645 = vmax.xlane.f32.xlu0 %v644
  %v646 = vpop.xlane.xlu0 %645
  %v647 = vsel %vm634, %v482, -inf
  %648 = vmax.xlane.f32.xlu0 %v647
  %v649 = vpop.xlane.xlu0 %648
  %v650 = vsel %vm634, %v531, -inf
  %651 = vmax.xlane.f32.xlu0 %v650
  %v652 = vpop.xlane.xlu0 %651
  %v653 = vsel %vm634, %v580, -inf
  %654 = vmax.xlane.f32.xlu0 %v653
  %v655 = vpop.xlane.xlu0 %654
  %v656 = vsel %vm634, %v629, -inf
  %657 = vmax.xlane.f32.xlu0 %v656
  %v658 = vpop.xlane.xlu0 %657
  %v659 = vsub.f32 %v286, %v637
  %v660 = vsub.f32 %v335, %v640
  %v661 = vsub.f32 %v384, %v643
  %v662 = vsub.f32 %v433, %v646
  %v663 = vsub.f32 %v482, %v649
  %v664 = vsub.f32 %v531, %v652
  %v665 = vsub.f32 %v580, %v655
  %v666 = vsub.f32 %v629, %v658
  %v667 = vmul.f32 %v659, 1.442695
  %v668 = vpow.pop %v667
  %v669 = vmul.f32 %v660, 1.442695
  %v670 = vpow.pop %v669
  %v671 = vmul.f32 %v661, 1.442695
  %v672 = vpow.pop %v671
  %v673 = vmul.f32 %v662, 1.442695
  %v674 = vpow.pop %v673
  %v675 = vmul.f32 %v663, 1.442695
  %v676 = vpow.pop %v675
  %v677 = vmul.f32 %v664, 1.442695
  %v678 = vpow.pop %v677
  %v679 = vmul.f32 %v665, 1.442695
  %v680 = vpow.pop %v679
  %v681 = vmul.f32 %v666, 1.442695
  %v682 = vpow.pop %v681
  %v683 = vsel %vm634, %v668, 0.0
  %684 = vadd.xlane.f32.xlu0 %v683
  %v685 = vpop.xlane.xlu0 %684
  %v686 = vsel %vm634, %v670, 0.0
  %687 = vadd.xlane.f32.xlu0 %v686
  %v688 = vpop.xlane.xlu0 %687
  %v689 = vsel %vm634, %v672, 0.0
  %690 = vadd.xlane.f32.xlu0 %v689
  %v691 = vpop.xlane.xlu0 %690
  %v692 = vsel %vm634, %v674, 0.0
  %693 = vadd.xlane.f32.xlu0 %v692
  %v694 = vpop.xlane.xlu0 %693
  %v695 = vsel %vm634, %v676, 0.0
  %696 = vadd.xlane.f32.xlu0 %v695
  %v697 = vpop.xlane.xlu0 %696
  %v698 = vsel %vm634, %v678, 0.0
  %699 = vadd.xlane.f32.xlu0 %v698
  %v700 = vpop.xlane.xlu0 %699
  %v701 = vsel %vm634, %v680, 0.0
  %702 = vadd.xlane.f32.xlu0 %v701
  %v703 = vpop.xlane.xlu0 %702
  %v704 = vsel %vm634, %v682, 0.0
  %705 = vadd.xlane.f32.xlu0 %v704
  %v706 = vpop.xlane.xlu0 %705
  %v707 = vrcp.pop %v685
  %v708 = vmul.f32 %v668, %v707
  %v709 = vrcp.pop %v688
  %v710 = vmul.f32 %v670, %v709
  %v711 = vrcp.pop %v691
  %v712 = vmul.f32 %v672, %v711
  %v713 = vrcp.pop %v694
  %v714 = vmul.f32 %v674, %v713
  %v715 = vrcp.pop %v697
  %v716 = vmul.f32 %v676, %v715
  %v717 = vrcp.pop %v700
  %v718 = vmul.f32 %v678, %v717
  %v719 = vrcp.pop %v703
  %v720 = vmul.f32 %v680, %v719
  %v721 = vrcp.pop %v706
  %v722 = vmul.f32 %v682, %v721
  %v723 = vpack.c.bf16 %v708, %v708
  %v724 = vpack.c.bf16 %v710, %v710
  %v725 = vpack.c.bf16 %v712, %v712
  %v726 = vpack.c.bf16 %v714, %v714
  %v727 = vpack.c.bf16 %v716, %v716
  %v728 = vpack.c.bf16 %v718, %v718
  %v729 = vpack.c.bf16 %v720, %v720
  %v730 = vpack.c.bf16 %v722, %v722
  %v732 = vsel %vm634, %v723, 0
  %vm734 = vcmask 1043456
  %v736 = vsel %vm734, %v234, 0
  %738 = vmatprep.subr.bf16.mxu0 0
  %739 = vmatpush1.bf16.msra.mxu0 %v736
  %740 = vmatprep.subr.bf16.mxu0 0
  %741 = vmatpush1.bf16.msra.mxu0 0
  %742 = vmatprep.subr.bf16.mxu0 0
  %743 = vmatpush1.bf16.msra.mxu0 0
  %744 = vmatprep.subr.bf16.mxu0 0
  %745 = vmatpush1.bf16.msra.mxu0 0
  %746 = vmatprep.subr.bf16.mxu0 0
  %747 = vmatpush1.bf16.msra.mxu0 0
  %748 = vmatprep.subr.bf16.mxu0 0
  %749 = vmatpush1.bf16.msra.mxu0 0
  %750 = vmatprep.subr.bf16.mxu0 0
  %751 = vmatpush1.bf16.msra.mxu0 0
  %752 = vmatprep.subr.bf16.mxu0 0
  %753 = vmatpush1.bf16.msra.mxu0 0
  %754 = vmatprep.subr.bf16.mxu0 0
  %755 = vmatpush1.bf16.msra.mxu0 0
  %756 = vmatprep.subr.bf16.mxu0 0
  %757 = vmatpush1.bf16.msra.mxu0 0
  %758 = vmatprep.subr.bf16.mxu0 0
  %759 = vmatpush1.bf16.msra.mxu0 0
  %760 = vmatprep.subr.bf16.mxu0 0
  %761 = vmatpush1.bf16.msra.mxu0 0
  %762 = vmatprep.subr.bf16.mxu0 0
  %763 = vmatpush1.bf16.msra.mxu0 0
  %764 = vmatprep.subr.bf16.mxu0 0
  %765 = vmatpush1.bf16.msra.mxu0 0
  %766 = vmatprep.subr.bf16.mxu0 0
  %767 = vmatpush1.bf16.msra.mxu0 0
  %768 = vmatprep.subr.bf16.mxu0 0
  %769 = vmatpush1.bf16.msra.mxu0 0
  %770 = vmatprep.mubr.bf16.mxu0 0
  %771 = vmatmul.mubr.bf16.gmra.mrb[0].mxu0 %v732
  %v772 = vpop.f32.mrb[0].mxu0
  %v773 = vadd.f32 0.0, %v772
  %v774 = vpop.f32.mrb[0].mxu0
  %v775 = vpop.f32.mrb[0].mxu0
  %v776 = vpop.f32.mrb[0].mxu0
  %777 = vdwg.mxu0
  %v779 = vsel %vm634, %v724, 0
  %v782 = vsel %vm734, %v235, 0
  %784 = vmatprep.subr.bf16.mxu0 0
  %785 = vmatpush1.bf16.msra.mxu0 %v782
  %786 = vmatprep.subr.bf16.mxu0 0
  %787 = vmatpush1.bf16.msra.mxu0 0
  %788 = vmatprep.subr.bf16.mxu0 0
  %789 = vmatpush1.bf16.msra.mxu0 0
  %790 = vmatprep.subr.bf16.mxu0 0
  %791 = vmatpush1.bf16.msra.mxu0 0
  %792 = vmatprep.subr.bf16.mxu0 0
  %793 = vmatpush1.bf16.msra.mxu0 0
  %794 = vmatprep.subr.bf16.mxu0 0
  %795 = vmatpush1.bf16.msra.mxu0 0
  %796 = vmatprep.subr.bf16.mxu0 0
  %797 = vmatpush1.bf16.msra.mxu0 0
  %798 = vmatprep.subr.bf16.mxu0 0
  %799 = vmatpush1.bf16.msra.mxu0 0
  %800 = vmatprep.subr.bf16.mxu0 0
  %801 = vmatpush1.bf16.msra.mxu0 0
  %802 = vmatprep.subr.bf16.mxu0 0
  %803 = vmatpush1.bf16.msra.mxu0 0
  %804 = vmatprep.subr.bf16.mxu0 0
  %805 = vmatpush1.bf16.msra.mxu0 0
  %806 = vmatprep.subr.bf16.mxu0 0
  %807 = vmatpush1.bf16.msra.mxu0 0
  %808 = vmatprep.subr.bf16.mxu0 0
  %809 = vmatpush1.bf16.msra.mxu0 0
  %810 = vmatprep.subr.bf16.mxu0 0
  %811 = vmatpush1.bf16.msra.mxu0 0
  %812 = vmatprep.subr.bf16.mxu0 0
  %813 = vmatpush1.bf16.msra.mxu0 0
  %814 = vmatprep.subr.bf16.mxu0 0
  %815 = vmatpush1.bf16.msra.mxu0 0
  %816 = vmatprep.mubr.bf16.mxu0 0
  %817 = vmatmul.mubr.bf16.gmra.mrb[0].mxu0 %v779
  %v818 = vpop.f32.mrb[0].mxu0
  %v819 = vadd.f32 0.0, %v818
  %v820 = vpop.f32.mrb[0].mxu0
  %v821 = vpop.f32.mrb[0].mxu0
  %v822 = vpop.f32.mrb[0].mxu0
  %823 = vdwg.mxu0
  %v825 = vsel %vm634, %v725, 0
  %v828 = vsel %vm734, %v236, 0
  %830 = vmatprep.subr.bf16.mxu0 0
  %831 = vmatpush1.bf16.msra.mxu0 %v828
  %832 = vmatprep.subr.bf16.mxu0 0
  %833 = vmatpush1.bf16.msra.mxu0 0
  %834 = vmatprep.subr.bf16.mxu0 0
  %835 = vmatpush1.bf16.msra.mxu0 0
  %836 = vmatprep.subr.bf16.mxu0 0
  %837 = vmatpush1.bf16.msra.mxu0 0
  %838 = vmatprep.subr.bf16.mxu0 0
  %839 = vmatpush1.bf16.msra.mxu0 0
  %840 = vmatprep.subr.bf16.mxu0 0
  %841 = vmatpush1.bf16.msra.mxu0 0
  %842 = vmatprep.subr.bf16.mxu0 0
  %843 = vmatpush1.bf16.msra.mxu0 0
  %844 = vmatprep.subr.bf16.mxu0 0
  %845 = vmatpush1.bf16.msra.mxu0 0
  %846 = vmatprep.subr.bf16.mxu0 0
  %847 = vmatpush1.bf16.msra.mxu0 0
  %848 = vmatprep.subr.bf16.mxu0 0
  %849 = vmatpush1.bf16.msra.mxu0 0
  %850 = vmatprep.subr.bf16.mxu0 0
  %851 = vmatpush1.bf16.msra.mxu0 0
  %852 = vmatprep.subr.bf16.mxu0 0
  %853 = vmatpush1.bf16.msra.mxu0 0
  %854 = vmatprep.subr.bf16.mxu0 0
  %855 = vmatpush1.bf16.msra.mxu0 0
  %856 = vmatprep.subr.bf16.mxu0 0
  %857 = vmatpush1.bf16.msra.mxu0 0
  %858 = vmatprep.subr.bf16.mxu0 0
  %859 = vmatpush1.bf16.msra.mxu0 0
  %860 = vmatprep.subr.bf16.mxu0 0
  %861 = vmatpush1.bf16.msra.mxu0 0
  %862 = vmatprep.mubr.bf16.mxu0 0
  %863 = vmatmul.mubr.bf16.gmra.mrb[0].mxu0 %v825
  %v864 = vpop.f32.mrb[0].mxu0
  %v865 = vadd.f32 0.0, %v864
  %v866 = vpop.f32.mrb[0].mxu0
  %v867 = vpop.f32.mrb[0].mxu0
  %v868 = vpop.f32.mrb[0].mxu0
  %869 = vdwg.mxu0
  %v871 = vsel %vm634, %v726, 0
  %v874 = vsel %vm734, %v237, 0
  %876 = vmatprep.subr.bf16.mxu0 0
  %877 = vmatpush1.bf16.msra.mxu0 %v874
  %878 = vmatprep.subr.bf16.mxu0 0
  %879 = vmatpush1.bf16.msra.mxu0 0
  %880 = vmatprep.subr.bf16.mxu0 0
  %881 = vmatpush1.bf16.msra.mxu0 0
  %882 = vmatprep.subr.bf16.mxu0 0
  %883 = vmatpush1.bf16.msra.mxu0 0
  %884 = vmatprep.subr.bf16.mxu0 0
  %885 = vmatpush1.bf16.msra.mxu0 0
  %886 = vmatprep.subr.bf16.mxu0 0
  %887 = vmatpush1.bf16.msra.mxu0 0
  %888 = vmatprep.subr.bf16.mxu0 0
  %889 = vmatpush1.bf16.msra.mxu0 0
  %890 = vmatprep.subr.bf16.mxu0 0
  %891 = vmatpush1.bf16.msra.mxu0 0
  %892 = vmatprep.subr.bf16.mxu0 0
  %893 = vmatpush1.bf16.msra.mxu0 0
  %894 = vmatprep.subr.bf16.mxu0 0
  %895 = vmatpush1.bf16.msra.mxu0 0
  %896 = vmatprep.subr.bf16.mxu0 0
  %897 = vmatpush1.bf16.msra.mxu0 0
  %898 = vmatprep.subr.bf16.mxu0 0
  %899 = vmatpush1.bf16.msra.mxu0 0
  %900 = vmatprep.subr.bf16.mxu0 0
  %901 = vmatpush1.bf16.msra.mxu0 0
  %902 = vmatprep.subr.bf16.mxu0 0
  %903 = vmatpush1.bf16.msra.mxu0 0
  %904 = vmatprep.subr.bf16.mxu0 0
  %905 = vmatpush1.bf16.msra.mxu0 0
  %906 = vmatprep.subr.bf16.mxu0 0
  %907 = vmatpush1.bf16.msra.mxu0 0
  %908 = vmatprep.mubr.bf16.mxu0 0
  %909 = vmatmul.mubr.bf16.gmra.mrb[0].mxu0 %v871
  %v910 = vpop.f32.mrb[0].mxu0
  %v911 = vadd.f32 0.0, %v910
  %v912 = vpop.f32.mrb[0].mxu0
  %v913 = vpop.f32.mrb[0].mxu0
  %v914 = vpop.f32.mrb[0].mxu0
  %915 = vdwg.mxu0
  %v917 = vsel %vm634, %v727, 0
  %v920 = vsel %vm734, %v238, 0
  %922 = vmatprep.subr.bf16.mxu0 0
  %923 = vmatpush1.bf16.msra.mxu0 %v920
  %924 = vmatprep.subr.bf16.mxu0 0
  %925 = vmatpush1.bf16.msra.mxu0 0
  %926 = vmatprep.subr.bf16.mxu0 0
  %927 = vmatpush1.bf16.msra.mxu0 0
  %928 = vmatprep.subr.bf16.mxu0 0
  %929 = vmatpush1.bf16.msra.mxu0 0
  %930 = vmatprep.subr.bf16.mxu0 0
  %931 = vmatpush1.bf16.msra.mxu0 0
  %932 = vmatprep.subr.bf16.mxu0 0
  %933 = vmatpush1.bf16.msra.mxu0 0
  %934 = vmatprep.subr.bf16.mxu0 0
  %935 = vmatpush1.bf16.msra.mxu0 0
  %936 = vmatprep.subr.bf16.mxu0 0
  %937 = vmatpush1.bf16.msra.mxu0 0
  %938 = vmatprep.subr.bf16.mxu0 0
  %939 = vmatpush1.bf16.msra.mxu0 0
  %940 = vmatprep.subr.bf16.mxu0 0
  %941 = vmatpush1.bf16.msra.mxu0 0
  %942 = vmatprep.subr.bf16.mxu0 0
  %943 = vmatpush1.bf16.msra.mxu0 0
  %944 = vmatprep.subr.bf16.mxu0 0
  %945 = vmatpush1.bf16.msra.mxu0 0
  %946 = vmatprep.subr.bf16.mxu0 0
  %947 = vmatpush1.bf16.msra.mxu0 0
  %948 = vmatprep.subr.bf16.mxu0 0
  %949 = vmatpush1.bf16.msra.mxu0 0
  %950 = vmatprep.subr.bf16.mxu0 0
  %951 = vmatpush1.bf16.msra.mxu0 0
  %952 = vmatprep.subr.bf16.mxu0 0
  %953 = vmatpush1.bf16.msra.mxu0 0
  %954 = vmatprep.mubr.bf16.mxu0 0
  %955 = vmatmul.mubr.bf16.gmra.mrb[0].mxu0 %v917
  %v956 = vpop.f32.mrb[0].mxu0
  %v957 = vadd.f32 0.0, %v956
  %v958 = vpop.f32.mrb[0].mxu0
  %v959 = vpop.f32.mrb[0].mxu0
  %v960 = vpop.f32.mrb[0].mxu0
  %961 = vdwg.mxu0
  %v963 = vsel %vm634, %v728, 0
  %v966 = vsel %vm734, %v239, 0
  %968 = vmatprep.subr.bf16.mxu0 0
  %969 = vmatpush1.bf16.msra.mxu0 %v966
  %970 = vmatprep.subr.bf16.mxu0 0
  %971 = vmatpush1.bf16.msra.mxu0 0
  %972 = vmatprep.subr.bf16.mxu0 0
  %973 = vmatpush1.bf16.msra.mxu0 0
  %974 = vmatprep.subr.bf16.mxu0 0
  %975 = vmatpush1.bf16.msra.mxu0 0
  %976 = vmatprep.subr.bf16.mxu0 0
  %977 = vmatpush1.bf16.msra.mxu0 0
  %978 = vmatprep.subr.bf16.mxu0 0
  %979 = vmatpush1.bf16.msra.mxu0 0
  %980 = vmatprep.subr.bf16.mxu0 0
  %981 = vmatpush1.bf16.msra.mxu0 0
  %982 = vmatprep.subr.bf16.mxu0 0
  %983 = vmatpush1.bf16.msra.mxu0 0
  %984 = vmatprep.subr.bf16.mxu0 0
  %985 = vmatpush1.bf16.msra.mxu0 0
  %986 = vmatprep.subr.bf16.mxu0 0
  %987 = vmatpush1.bf16.msra.mxu0 0
  %988 = vmatprep.subr.bf16.mxu0 0
  %989 = vmatpush1.bf16.msra.mxu0 0
  %990 = vmatprep.subr.bf16.mxu0 0
  %991 = vmatpush1.bf16.msra.mxu0 0
  %992 = vmatprep.subr.bf16.mxu0 0
  %993 = vmatpush1.bf16.msra.mxu0 0
  %994 = vmatprep.subr.bf16.mxu0 0
  %995 = vmatpush1.bf16.msra.mxu0 0
  %996 = vmatprep.subr.bf16.mxu0 0
  %997 = vmatpush1.bf16.msra.mxu0 0
  %998 = vmatprep.subr.bf16.mxu0 0
  %999 = vmatpush1.bf16.msra.mxu0 0
  %1000 = vmatprep.mubr.bf16.mxu0 0
  %1001 = vmatmul.mubr.bf16.gmra.mrb[0].mxu0 %v963
  %v1002 = vpop.f32.mrb[0].mxu0
  %v1003 = vadd.f32 0.0, %v1002
  %v1004 = vpop.f32.mrb[0].mxu0
  %v1005 = vpop.f32.mrb[0].mxu0
  %v1006 = vpop.f32.mrb[0].mxu0
  %1007 = vdwg.mxu0
  %v1009 = vsel %vm634, %v729, 0
  %v1012 = vsel %vm734, %v240, 0
  %1014 = vmatprep.subr.bf16.mxu0 0
  %1015 = vmatpush1.bf16.msra.mxu0 %v1012
  %1016 = vmatprep.subr.bf16.mxu0 0
  %1017 = vmatpush1.bf16.msra.mxu0 0
  %1018 = vmatprep.subr.bf16.mxu0 0
  %1019 = vmatpush1.bf16.msra.mxu0 0
  %1020 = vmatprep.subr.bf16.mxu0 0
  %1021 = vmatpush1.bf16.msra.mxu0 0
  %1022 = vmatprep.subr.bf16.mxu0 0
  %1023 = vmatpush1.bf16.msra.mxu0 0
  %1024 = vmatprep.subr.bf16.mxu0 0
  %1025 = vmatpush1.bf16.msra.mxu0 0
  %1026 = vmatprep.subr.bf16.mxu0 0
  %1027 = vmatpush1.bf16.msra.mxu0 0
  %1028 = vmatprep.subr.bf16.mxu0 0
  %1029 = vmatpush1.bf16.msra.mxu0 0
  %1030 = vmatprep.subr.bf16.mxu0 0
  %1031 = vmatpush1.bf16.msra.mxu0 0
  %1032 = vmatprep.subr.bf16.mxu0 0
  %1033 = vmatpush1.bf16.msra.mxu0 0
  %1034 = vmatprep.subr.bf16.mxu0 0
  %1035 = vmatpush1.bf16.msra.mxu0 0
  %1036 = vmatprep.subr.bf16.mxu0 0
  %1037 = vmatpush1.bf16.msra.mxu0 0
  %1038 = vmatprep.subr.bf16.mxu0 0
  %1039 = vmatpush1.bf16.msra.mxu0 0
  %1040 = vmatprep.subr.bf16.mxu0 0
  %1041 = vmatpush1.bf16.msra.mxu0 0
  %1042 = vmatprep.subr.bf16.mxu0 0
  %1043 = vmatpush1.bf16.msra.mxu0 0
  %1044 = vmatprep.subr.bf16.mxu0 0
  %1045 = vmatpush1.bf16.msra.mxu0 0
  %1046 = vmatprep.mubr.bf16.mxu0 0
  %1047 = vmatmul.mubr.bf16.gmra.mrb[0].mxu0 %v1009
  %v1048 = vpop.f32.mrb[0].mxu0
  %v1049 = vadd.f32 0.0, %v1048
  %v1050 = vpop.f32.mrb[0].mxu0
  %v1051 = vpop.f32.mrb[0].mxu0
  %v1052 = vpop.f32.mrb[0].mxu0
  %1053 = vdwg.mxu0
  %v1055 = vsel %vm634, %v730, 0
  %v1058 = vsel %vm734, %v241, 0
  %1060 = vmatprep.subr.bf16.mxu0 0
  %1061 = vmatpush1.bf16.msra.mxu0 %v1058
  %1062 = vmatprep.subr.bf16.mxu0 0
  %1063 = vmatpush1.bf16.msra.mxu0 0
  %1064 = vmatprep.subr.bf16.mxu0 0
  %1065 = vmatpush1.bf16.msra.mxu0 0
  %1066 = vmatprep.subr.bf16.mxu0 0
  %1067 = vmatpush1.bf16.msra.mxu0 0
  %1068 = vmatprep.subr.bf16.mxu0 0
  %1069 = vmatpush1.bf16.msra.mxu0 0
  %1070 = vmatprep.subr.bf16.mxu0 0
  %1071 = vmatpush1.bf16.msra.mxu0 0
  %1072 = vmatprep.subr.bf16.mxu0 0
  %1073 = vmatpush1.bf16.msra.mxu0 0
  %1074 = vmatprep.subr.bf16.mxu0 0
  %1075 = vmatpush1.bf16.msra.mxu0 0
  %1076 = vmatprep.subr.bf16.mxu0 0
  %1077 = vmatpush1.bf16.msra.mxu0 0
  %1078 = vmatprep.subr.bf16.mxu0 0
  %1079 = vmatpush1.bf16.msra.mxu0 0
  %1080 = vmatprep.subr.bf16.mxu0 0
  %1081 = vmatpush1.bf16.msra.mxu0 0
  %1082 = vmatprep.subr.bf16.mxu0 0
  %1083 = vmatpush1.bf16.msra.mxu0 0
  %1084 = vmatprep.subr.bf16.mxu0 0
  %1085 = vmatpush1.bf16.msra.mxu0 0
  %1086 = vmatprep.subr.bf16.mxu0 0
  %1087 = vmatpush1.bf16.msra.mxu0 0
  %1088 = vmatprep.subr.bf16.mxu0 0
  %1089 = vmatpush1.bf16.msra.mxu0 0
  %1090 = vmatprep.subr.bf16.mxu0 0
  %1091 = vmatpush1.bf16.msra.mxu0 0
  %1092 = vmatprep.mubr.bf16.mxu0 0
  %1093 = vmatmul.mubr.bf16.gmra.mrb[0].mxu0 %v1055
  %v1094 = vpop.f32.mrb[0].mxu0
  %v1095 = vadd.f32 0.0, %v1094
  %v1096 = vpop.f32.mrb[0].mxu0
  %v1097 = vpop.f32.mrb[0].mxu0
  %v1098 = vpop.f32.mrb[0].mxu0
  %1099 = vdwg.mxu0
  %1102 = vrot.lane.b32.xlu0 %v865, 16
  %v1103 = vpop.permute.xlu0 %1102
  %1104 = vrot.lane.b32.xlu0 %v911, 16
  %v1105 = vpop.permute.xlu0 %1104
  %1110 = vrot.lane.b32.xlu0 %v957, 32
  %v1111 = vpop.permute.xlu0 %1110
  %1112 = vrot.lane.b32.xlu0 %v1003, 32
  %v1113 = vpop.permute.xlu0 %1112
  %1118 = vrot.lane.b32.xlu0 %v1049, 48
  %v1119 = vpop.permute.xlu0 %1118
  %1120 = vrot.lane.b32.xlu0 %v1095, 48
  %v1121 = vpop.permute.xlu0 %1120
  %v1124 = vsel %vm32, %v773, %v1103
  %v1125 = vsel %vm32, %v819, %v1105
  %vm1126 = vcmask 261120
  %v1127 = vsel %vm1126, %v1124, %v1111
  %v1128 = vsel %vm1126, %v1125, %v1113
  %vm1129 = vcmask 392192
  %v1130 = vsel %vm1129, %v1127, %v1119
  %v1131 = vsel %vm1129, %v1128, %v1121
  %v1132 = vpack.c.bf16 %v1131, %v1130
  %v1133 = vld [vmem:[%s1 + $0x50] sm:$0xf]
  %v1134 = vld [vmem:[%s1 + $0x58] sm:$0xf]
  %v1135 = vld [vmem:[%s1 + $0x60] sm:$0xf]
  %v1136 = vld [vmem:[%s1 + $0x68] sm:$0xf]
  %v1137 = vld [vmem:[%s1 + $0x70] sm:$0xf]
  %v1138 = vld [vmem:[%s1 + $0x78] sm:$0xf]
  %v1139 = vld [vmem:[%s1 + $0x80] sm:$0xf]
  %v1140 = vld [vmem:[%s1 + $0x88] sm:$0xf]
  %v1141 = vld [vmem:[%s2 + $0x21] ss:$0 sm:$0xff]
  %v1150 = vunpack.c.l.b16 %v1133
  %v1151 = vunpack.c.l.b16 %v1134
  %v1152 = vunpack.c.l.b16 %v1135
  %v1153 = vunpack.c.l.b16 %v1136
  %v1154 = vunpack.c.l.b16 %v1137
  %v1155 = vunpack.c.l.b16 %v1138
  %v1156 = vunpack.c.l.b16 %v1139
  %v1157 = vunpack.c.l.b16 %v1140
  %v1158 = vpack.c.b16 %v1151, %v1150
  %v1159 = vpack.c.b16 %v1153, %v1152
  %v1160 = vpack.c.b16 %v1155, %v1154
  %v1161 = vpack.c.b16 %v1157, %v1156
  %v1167 = vsel %vm139, %v1132, 0
  %1169 = vmatprep.subr.bf16.mxu0 0
  %1170 = vmatpush1.bf16.msra.mxu0 %v1158
  %1171 = vmatprep.subr.bf16.mxu0 0
  %1172 = vmatpush1.bf16.msra.mxu0 %v1159
  %1173 = vmatprep.subr.bf16.mxu0 0
  %1174 = vmatpush1.bf16.msra.mxu0 %v1160
  %1175 = vmatprep.subr.bf16.mxu0 0
  %1176 = vmatpush1.bf16.msra.mxu0 %v1161
  %1177 = vmatprep.subr.bf16.mxu0 0
  %1178 = vmatpush1.bf16.msra.mxu0 0
  %1179 = vmatprep.subr.bf16.mxu0 0
  %1180 = vmatpush1.bf16.msra.mxu0 0
  %1181 = vmatprep.subr.bf16.mxu0 0
  %1182 = vmatpush1.bf16.msra.mxu0 0
  %1183 = vmatprep.subr.bf16.mxu0 0
  %1184 = vmatpush1.bf16.msra.mxu0 0
  %1185 = vmatprep.subr.bf16.mxu0 0
  %1186 = vmatpush1.bf16.msra.mxu0 0
  %1187 = vmatprep.subr.bf16.mxu0 0
  %1188 = vmatpush1.bf16.msra.mxu0 0
  %1189 = vmatprep.subr.bf16.mxu0 0
  %1190 = vmatpush1.bf16.msra.mxu0 0
  %1191 = vmatprep.subr.bf16.mxu0 0
  %1192 = vmatpush1.bf16.msra.mxu0 0
  %1193 = vmatprep.subr.bf16.mxu0 0
  %1194 = vmatpush1.bf16.msra.mxu0 0
  %1195 = vmatprep.subr.bf16.mxu0 0
  %1196 = vmatpush1.bf16.msra.mxu0 0
  %1197 = vmatprep.subr.bf16.mxu0 0
  %1198 = vmatpush1.bf16.msra.mxu0 0
  %1199 = vmatprep.subr.bf16.mxu0 0
  %1200 = vmatpush1.bf16.msra.mxu0 0
  %1201 = vmatprep.mubr.bf16.mxu0 0
  %1202 = vmatmul.mubr.bf16.gmra.mrb[0].mxu0 %v1167
  %v1203 = vpop.f32.mrb[0].mxu0
  %v1204 = vadd.f32 %v1141, %v1203
  %v1205 = vpop.f32.mrb[0].mxu0
  %v1206 = vpop.f32.mrb[0].mxu0
  %v1207 = vadd.f32 %v1141, %v1206
  %v1208 = vpop.f32.mrb[0].mxu0
  %1209 = vdwg.mxu0
  %v1210 = vadd.f32 %v71, %v1204
  %v1211 = vadd.f32 %v74, %v1207
  %v1212 = vld [vmem:[%s2 + $0x22] ss:$0 sm:$0xff]
  %v1213 = vld [vmem:[%s2 + $0x23] ss:$0 sm:$0xff]
  %v1214 = vsel %vm139, %v1210, 0.0
  %1215 = vadd.xlane.f32.xlu0 %v1214
  %v1216 = vpop.xlane.xlu0 %1215
  %v1217 = vsel %vm139, %v1211, 0.0
  %1218 = vadd.xlane.f32.xlu0 %v1217
  %v1219 = vpop.xlane.xlu0 %1218
  %v1220 = vrcp.pop 64.0
  %v1221 = vmul.f32 %v1216, %v1220
  %v1222 = vmul.f32 %v1219, %v1220
  %v1223 = vsub.f32 %v1210, %v1221
  %v1224 = vsub.f32 %v1211, %v1222
  %v1225 = vmul.f32 %v1223, %v1223
  %v1226 = vmul.f32 %v1224, %v1224
  %v1227 = vsel %vm139, %v1225, 0.0
  %1228 = vadd.xlane.f32.xlu0 %v1227
  %v1229 = vpop.xlane.xlu0 %1228
  %v1230 = vsel %vm139, %v1226, 0.0
  %1231 = vadd.xlane.f32.xlu0 %v1230
  %v1232 = vpop.xlane.xlu0 %1231
  %v1233 = vmul.f32 %v1229, %v1220
  %v1234 = vmul.f32 %v1232, %v1220
  %v1235 = vadd.f32 %v1233, 1e-05
  %v1236 = vadd.f32 %v1234, 1e-05
  %v1237 = vrsqrt.pop %v1235
  %v1238 = vrsqrt.pop %v1236
  %v1239 = vmul.f32 %v1223, %v1237
  %v1240 = vmul.f32 %v1224, %v1238
  %v1241 = vmul.f32 %v1239, %v1212
  %v1242 = vmul.f32 %v1240, %v1212
  %v1243 = vadd.f32 %v1241, %v1213
  %v1244 = vadd.f32 %v1242, %v1213
  %v1245 = vpack.c.bf16 %v1244, %v1243
  %v1246 = vld [vmem:[%s1 + $0x90] sm:$0xf]
  %v1247 = vld [vmem:[%s1 + $0x98] sm:$0xf]
  %v1248 = vld [vmem:[%s1 + $0xa0] sm:$0xf]
  %v1249 = vld [vmem:[%s1 + $0xa8] sm:$0xf]
  %v1250 = vld [vmem:[%s1 + $0xb0] sm:$0xf]
  %v1251 = vld [vmem:[%s1 + $0xb8] sm:$0xf]
  %v1252 = vld [vmem:[%s1 + $0xc0] sm:$0xf]
  %v1253 = vld [vmem:[%s1 + $0xc8] sm:$0xf]
  %v1254 = vld [vmem:[%s2 + $0x24] ss:$0 sm:$0xff]
  %v1263 = vunpack.c.l.b16 %v1246
  %v1264 = vunpack.c.l.b16 %v1247
  %v1265 = vunpack.c.l.b16 %v1248
  %v1266 = vunpack.c.l.b16 %v1249
  %v1267 = vunpack.c.l.b16 %v1250
  %v1268 = vunpack.c.l.b16 %v1251
  %v1269 = vunpack.c.l.b16 %v1252
  %v1270 = vunpack.c.l.b16 %v1253
  %v1271 = vpack.c.b16 %v1264, %v1263
  %v1272 = vpack.c.b16 %v1266, %v1265
  %v1273 = vpack.c.b16 %v1268, %v1267
  %v1274 = vpack.c.b16 %v1270, %v1269
  %v1280 = vsel %vm139, %v1245, 0
  %1282 = vmatprep.subr.bf16.mxu0 0
  %1283 = vmatpush1.bf16.msra.mxu0 %v1271
  %1284 = vmatprep.subr.bf16.mxu0 0
  %1285 = vmatpush1.bf16.msra.mxu0 %v1272
  %1286 = vmatprep.subr.bf16.mxu0 0
  %1287 = vmatpush1.bf16.msra.mxu0 %v1273
  %1288 = vmatprep.subr.bf16.mxu0 0
  %1289 = vmatpush1.bf16.msra.mxu0 %v1274
  %1290 = vmatprep.subr.bf16.mxu0 0
  %1291 = vmatpush1.bf16.msra.mxu0 0
  %1292 = vmatprep.subr.bf16.mxu0 0
  %1293 = vmatpush1.bf16.msra.mxu0 0
  %1294 = vmatprep.subr.bf16.mxu0 0
  %1295 = vmatpush1.bf16.msra.mxu0 0
  %1296 = vmatprep.subr.bf16.mxu0 0
  %1297 = vmatpush1.bf16.msra.mxu0 0
  %1298 = vmatprep.subr.bf16.mxu0 0
  %1299 = vmatpush1.bf16.msra.mxu0 0
  %1300 = vmatprep.subr.bf16.mxu0 0
  %1301 = vmatpush1.bf16.msra.mxu0 0
  %1302 = vmatprep.subr.bf16.mxu0 0
  %1303 = vmatpush1.bf16.msra.mxu0 0
  %1304 = vmatprep.subr.bf16.mxu0 0
  %1305 = vmatpush1.bf16.msra.mxu0 0
  %1306 = vmatprep.subr.bf16.mxu0 0
  %1307 = vmatpush1.bf16.msra.mxu0 0
  %1308 = vmatprep.subr.bf16.mxu0 0
  %1309 = vmatpush1.bf16.msra.mxu0 0
  %1310 = vmatprep.subr.bf16.mxu0 0
  %1311 = vmatpush1.bf16.msra.mxu0 0
  %1312 = vmatprep.subr.bf16.mxu0 0
  %1313 = vmatpush1.bf16.msra.mxu0 0
  %1314 = vmatprep.mubr.bf16.mxu0 0
  %1315 = vmatmul.mubr.bf16.gmra.mrb[0].mxu0 %v1280
  %v1316 = vpop.f32.mrb[0].mxu0
  %v1317 = vadd.f32 %v1254, %v1316
  %v1318 = vpop.f32.mrb[0].mxu0
  %v1319 = vpop.f32.mrb[0].mxu0
  %v1320 = vadd.f32 %v1254, %v1319
  %v1321 = vpop.f32.mrb[0].mxu0
  %1322 = vdwg.mxu0
  %v1323 = vmax.f32 %v1317, 0.0
  %v1324 = vmax.f32 %v1320, 0.0
  %v1325 = vpack.c.bf16 %v1324, %v1323
  %v1326 = vld [vmem:[%s1 + $0xd0] sm:$0xf]
  %v1327 = vld [vmem:[%s1 + $0xd8] sm:$0xf]
  %v1328 = vld [vmem:[%s1 + $0xe0] sm:$0xf]
  %v1329 = vld [vmem:[%s1 + $0xe8] sm:$0xf]
  %v1330 = vld [vmem:[%s1 + $0xf0] sm:$0xf]
  %v1331 = vld [vmem:[%s1 + $0xf8] sm:$0xf]
  %v1332 = vld [vmem:[%s1 + $0x100] sm:$0xf]
  %v1333 = vld [vmem:[%s1 + $0x108] sm:$0xf]
  %v1334 = vld [vmem:[%s1 + $0x110] sm:$0xf]
  %v1335 = vld [vmem:[%s1 + $0x118] sm:$0xf]
  %v1336 = vld [vmem:[%s1 + $0x120] sm:$0xf]
  %v1337 = vld [vmem:[%s1 + $0x128] sm:$0xf]
  %v1338 = vld [vmem:[%s1 + $0x130] sm:$0xf]
  %v1339 = vld [vmem:[%s1 + $0x138] sm:$0xf]
  %v1340 = vld [vmem:[%s1 + $0x140] sm:$0xf]
  %v1341 = vld [vmem:[%s1 + $0x148] sm:$0xf]
  %v1342 = vld [vmem:[%s2 + $0x25] ss:$0 sm:$0xff]
  %v1359 = vunpack.c.l.b16 %v1326
  %v1360 = vunpack.c.l.b16 %v1327
  %v1361 = vunpack.c.l.b16 %v1328
  %v1362 = vunpack.c.l.b16 %v1329
  %v1363 = vunpack.c.l.b16 %v1330
  %v1364 = vunpack.c.l.b16 %v1331
  %v1365 = vunpack.c.l.b16 %v1332
  %v1366 = vunpack.c.l.b16 %v1333
  %v1367 = vunpack.c.l.b16 %v1334
  %v1368 = vunpack.c.l.b16 %v1335
  %v1369 = vunpack.c.l.b16 %v1336
  %v1370 = vunpack.c.l.b16 %v1337
  %v1371 = vunpack.c.l.b16 %v1338
  %v1372 = vunpack.c.l.b16 %v1339
  %v1373 = vunpack.c.l.b16 %v1340
  %v1374 = vunpack.c.l.b16 %v1341
  %v1375 = vpack.c.b16 %v1360, %v1359
  %v1376 = vpack.c.b16 %v1362, %v1361
  %v1377 = vpack.c.b16 %v1364, %v1363
  %v1378 = vpack.c.b16 %v1366, %v1365
  %v1379 = vpack.c.b16 %v1368, %v1367
  %v1380 = vpack.c.b16 %v1370, %v1369
  %v1381 = vpack.c.b16 %v1372, %v1371
  %v1382 = vpack.c.b16 %v1374, %v1373
  %1391 = vmatprep.subr.bf16.mxu0 0
  %1392 = vmatpush1.bf16.msra.mxu0 %v1375
  %1393 = vmatprep.subr.bf16.mxu0 0
  %1394 = vmatpush1.bf16.msra.mxu0 %v1376
  %1395 = vmatprep.subr.bf16.mxu0 0
  %1396 = vmatpush1.bf16.msra.mxu0 %v1377
  %1397 = vmatprep.subr.bf16.mxu0 0
  %1398 = vmatpush1.bf16.msra.mxu0 %v1378
  %1399 = vmatprep.subr.bf16.mxu0 0
  %1400 = vmatpush1.bf16.msra.mxu0 %v1379
  %1401 = vmatprep.subr.bf16.mxu0 0
  %1402 = vmatpush1.bf16.msra.mxu0 %v1380
  %1403 = vmatprep.subr.bf16.mxu0 0
  %1404 = vmatpush1.bf16.msra.mxu0 %v1381
  %1405 = vmatprep.subr.bf16.mxu0 0
  %1406 = vmatpush1.bf16.msra.mxu0 %v1382
  %1407 = vmatprep.subr.bf16.mxu0 0
  %1408 = vmatpush1.bf16.msra.mxu0 0
  %1409 = vmatprep.subr.bf16.mxu0 0
  %1410 = vmatpush1.bf16.msra.mxu0 0
  %1411 = vmatprep.subr.bf16.mxu0 0
  %1412 = vmatpush1.bf16.msra.mxu0 0
  %1413 = vmatprep.subr.bf16.mxu0 0
  %1414 = vmatpush1.bf16.msra.mxu0 0
  %1415 = vmatprep.subr.bf16.mxu0 0
  %1416 = vmatpush1.bf16.msra.mxu0 0
  %1417 = vmatprep.subr.bf16.mxu0 0
  %1418 = vmatpush1.bf16.msra.mxu0 0
  %1419 = vmatprep.subr.bf16.mxu0 0
  %1420 = vmatpush1.bf16.msra.mxu0 0
  %1421 = vmatprep.subr.bf16.mxu0 0
  %1422 = vmatpush1.bf16.msra.mxu0 0
  %1423 = vmatprep.mubr.bf16.mxu0 0
  %1424 = vmatmul.mubr.bf16.gmra.mrb[0].mxu0 %v1325
  %v1425 = vpop.f32.mrb[0].mxu0
  %v1426 = vadd.f32 %v1342, %v1425
  %v1427 = vpop.f32.mrb[0].mxu0
  %v1428 = vpop.f32.mrb[0].mxu0
  %v1429 = vadd.f32 %v1342, %v1428
  %v1430 = vpop.f32.mrb[0].mxu0
  %1431 = vdwg.mxu0
  %v1432 = vadd.f32 %v1243, %v1426
  %v1433 = vadd.f32 %v1244, %v1429
  %v1434 = vld [vmem:[%s2 + $0x26] ss:$0 sm:$0xff]
  %v1435 = vld [vmem:[%s2 + $0x27] ss:$0 sm:$0xff]
  %v1436 = vsel %vm139, %v1432, 0.0
  %1437 = vadd.xlane.f32.xlu0 %v1436
  %v1438 = vpop.xlane.xlu0 %1437
  %v1439 = vsel %vm139, %v1433, 0.0
  %1440 = vadd.xlane.f32.xlu0 %v1439
  %v1441 = vpop.xlane.xlu0 %1440
  %v1442 = vmul.f32 %v1438, %v1220
  %v1443 = vmul.f32 %v1441, %v1220
  %v1444 = vsub.f32 %v1432, %v1442
  %v1445 = vsub.f32 %v1433, %v1443
  %v1446 = vmul.f32 %v1444, %v1444
  %v1447 = vmul.f32 %v1445, %v1445
  %v1448 = vsel %vm139, %v1446, 0.0
  %1449 = vadd.xlane.f32.xlu0 %v1448
  %v1450 = vpop.xlane.xlu0 %1449
  %v1451 = vsel %vm139, %v1447, 0.0
  %1452 = vadd.xlane.f32.xlu0 %v1451
  %v1453 = vpop.xlane.xlu0 %1452
  %v1454 = vmul.f32 %v1450, %v1220
  %v1455 = vmul.f32 %v1453, %v1220
  %v1456 = vadd.f32 %v1454, 1e-05
  %v1457 = vadd.f32 %v1455, 1e-05
  %v1458 = vrsqrt.pop %v1456
  %v1459 = vrsqrt.pop %v1457
  %v1460 = vmul.f32 %v1444, %v1458
  %v1461 = vmul.f32 %v1445, %v1459
  %v1462 = vmul.f32 %v1460, %v1434
  %v1463 = vmul.f32 %v1461, %v1434
  %v1464 = vadd.f32 %v1462, %v1435
  %v1465 = vadd.f32 %v1463, %v1435
  %v1466 = vpack.c.bf16 %v1465, %v1464
  %v1467 = vld [vmem:[%s1 + $0x150] sm:$0xff]
  %v1468 = vld [vmem:[%s1 + $0x158] sm:$0xff]
  %v1469 = vld [vmem:[%s1 + $0x160] sm:$0xff]
  %v1470 = vld [vmem:[%s1 + $0x168] sm:$0xff]
  %v1471 = vld [vmem:[%s1 + $0x170] sm:$0xff]
  %v1472 = vld [vmem:[%s1 + $0x178] sm:$0xff]
  %v1473 = vld [vmem:[%s1 + $0x180] sm:$0xff]
  %v1474 = vld [vmem:[%s1 + $0x188] sm:$0xff]
  %s1475 = scalar_lea.vmem %s2, 48
  %v1476 = vld [vmem:[%s1475] ss:$8 sm:$0x3]
  %v1478 = vlaneseq
  %v1479 = vshrl.u32 %v1478, 7
  %v1480 = vsub.s32 0, %v1479
  %v1481 = vrot.slane %v1476, %v1480
  %v1482 = vlaneseq
  %v1483 = vshrl.u32 %v1482, 7
  %v1484 = vsub.s32 1, %v1483
  %v1485 = vrot.slane %v1476, %v1484
  %v1496 = vunpack.c.l.b16 %v1467
  %v1497 = vunpack.c.h.b16 %v1467
  %v1498 = vunpack.c.l.b16 %v1468
  %v1499 = vunpack.c.h.b16 %v1468
  %v1500 = vunpack.c.l.b16 %v1469
  %v1501 = vunpack.c.h.b16 %v1469
  %v1502 = vunpack.c.l.b16 %v1470
  %v1503 = vunpack.c.h.b16 %v1470
  %v1504 = vunpack.c.l.b16 %v1471
  %v1505 = vunpack.c.h.b16 %v1471
  %v1506 = vunpack.c.l.b16 %v1472
  %v1507 = vunpack.c.h.b16 %v1472
  %v1508 = vunpack.c.l.b16 %v1473
  %v1509 = vunpack.c.h.b16 %v1473
  %v1510 = vunpack.c.l.b16 %v1474
  %v1511 = vunpack.c.h.b16 %v1474
  %v1512 = vpack.c.b16 %v1498, %v1496
  %v1513 = vpack.c.b16 %v1499, %v1497
  %v1514 = vpack.c.b16 %v1502, %v1500
  %v1515 = vpack.c.b16 %v1503, %v1501
  %v1516 = vpack.c.b16 %v1506, %v1504
  %v1517 = vpack.c.b16 %v1507, %v1505
  %v1518 = vpack.c.b16 %v1510, %v1508
  %v1519 = vpack.c.b16 %v1511, %v1509
  %v1529 = vsel %vm139, %v1466, 0
  %1531 = vmatprep.subr.bf16.mxu0 %v1513
  %1532 = vmatpush1.bf16.msra.mxu0 %v1512
  %1533 = vmatprep.subr.bf16.mxu0 %v1515
  %1534 = vmatpush1.bf16.msra.mxu0 %v1514
  %1535 = vmatprep.subr.bf16.mxu0 %v1517
  %1536 = vmatpush1.bf16.msra.mxu0 %v1516
  %1537 = vmatprep.subr.bf16.mxu0 %v1519
  %1538 = vmatpush1.bf16.msra.mxu0 %v1518
  %1539 = vmatprep.subr.bf16.mxu0 0
  %1540 = vmatpush1.bf16.msra.mxu0 0
  %1541 = vmatprep.subr.bf16.mxu0 0
  %1542 = vmatpush1.bf16.msra.mxu0 0
  %1543 = vmatprep.subr.bf16.mxu0 0
  %1544 = vmatpush1.bf16.msra.mxu0 0
  %1545 = vmatprep.subr.bf16.mxu0 0
  %1546 = vmatpush1.bf16.msra.mxu0 0
  %1547 = vmatprep.subr.bf16.mxu0 0
  %1548 = vmatpush1.bf16.msra.mxu0 0
  %1549 = vmatprep.subr.bf16.mxu0 0
  %1550 = vmatpush1.bf16.msra.mxu0 0
  %1551 = vmatprep.subr.bf16.mxu0 0
  %1552 = vmatpush1.bf16.msra.mxu0 0
  %1553 = vmatprep.subr.bf16.mxu0 0
  %1554 = vmatpush1.bf16.msra.mxu0 0
  %1555 = vmatprep.subr.bf16.mxu0 0
  %1556 = vmatpush1.bf16.msra.mxu0 0
  %1557 = vmatprep.subr.bf16.mxu0 0
  %1558 = vmatpush1.bf16.msra.mxu0 0
  %1559 = vmatprep.subr.bf16.mxu0 0
  %1560 = vmatpush1.bf16.msra.mxu0 0
  %1561 = vmatprep.subr.bf16.mxu0 0
  %1562 = vmatpush1.bf16.msra.mxu0 0
  %1563 = vmatprep.mubr.bf16.mxu0 0
  %1564 = vmatmul.mubr.bf16.gmra.mrb[0].mxu0 %v1529
  %v1565 = vpop.f32.mrb[0].mxu0
  %v1566 = vadd.f32 %v1481, %v1565
  %v1567 = vpop.f32.mrb[0].mxu0
  %v1568 = vadd.f32 %v1485, %v1567
  %v1569 = vpop.f32.mrb[0].mxu0
  %v1570 = vadd.f32 %v1481, %v1569
  %v1571 = vpop.f32.mrb[0].mxu0
  %v1572 = vadd.f32 %v1485, %v1571
  %1573 = vdwg.mxu0
  %1576 = vrot.lane.b32.xlu0 %v1566, 112
  %v1577 = vpop.permute.xlu0 %1576
  %1578 = vrot.lane.b32.xlu0 %v1570, 112
  %v1579 = vpop.permute.xlu0 %1578
  %1582 = vrot.lane.b32.xlu0 %v1566, 96
  %v1583 = vpop.permute.xlu0 %1582
  %1584 = vrot.lane.b32.xlu0 %v1570, 96
  %v1585 = vpop.permute.xlu0 %1584
  %1588 = vrot.lane.b32.xlu0 %v1566, 80
  %v1589 = vpop.permute.xlu0 %1588
  %1590 = vrot.lane.b32.xlu0 %v1570, 80
  %v1591 = vpop.permute.xlu0 %1590
  %v1594 = vpack.c.bf16 %v1566, %v1566
  %v1595 = vpack.c.bf16 %v1570, %v1570
  %v1596 = vpack.c.bf16 %v1577, %v1577
  %v1597 = vpack.c.bf16 %v1579, %v1579
  %v1598 = vpack.c.bf16 %v1583, %v1583
  %v1599 = vpack.c.bf16 %v1585, %v1585
  %v1600 = vpack.c.bf16 %v1589, %v1589
  %v1601 = vpack.c.bf16 %v1591, %v1591
  %1604 = vrot.lane.b32.xlu0 %v1568, 112
  %v1605 = vpop.permute.xlu0 %1604
  %1606 = vrot.lane.b32.xlu0 %v1572, 112
  %v1607 = vpop.permute.xlu0 %1606
  %1610 = vrot.lane.b32.xlu0 %v1568, 96
  %v1611 = vpop.permute.xlu0 %1610
  %1612 = vrot.lane.b32.xlu0 %v1572, 96
  %v1613 = vpop.permute.xlu0 %1612
  %1616 = vrot.lane.b32.xlu0 %v1568, 80
  %v1617 = vpop.permute.xlu0 %1616
  %1618 = vrot.lane.b32.xlu0 %v1572, 80
  %v1619 = vpop.permute.xlu0 %1618
  %v1622 = vpack.c.bf16 %v1568, %v1568
  %v1623 = vpack.c.bf16 %v1572, %v1572
  %v1624 = vpack.c.bf16 %v1605, %v1605
  %v1625 = vpack.c.bf16 %v1607, %v1607
  %v1626 = vpack.c.bf16 %v1611, %v1611
  %v1627 = vpack.c.bf16 %v1613, %v1613
  %v1628 = vpack.c.bf16 %v1617, %v1617
  %v1629 = vpack.c.bf16 %v1619, %v1619
  %1631 = vrot.lane.b32.xlu0 %v1594, 64
  %v1632 = vpop.permute.xlu0 %1631
  %v1634 = vsel %vm32, %v1594, 0
  %v1637 = vsel %vm32, %v1632, 0
  %1639 = vmatprep.subr.bf16.mxu0 0
  %1640 = vmatpush1.bf16.xpose.msra.mxu0 %v1637
  %1641 = vmatprep.subr.bf16.mxu0 0
  %1642 = vmatpush1.bf16.xpose.msra.mxu0 0
  %1643 = vmatprep.subr.bf16.mxu0 0
  %1644 = vmatpush1.bf16.xpose.msra.mxu0 0
  %1645 = vmatprep.subr.bf16.mxu0 0
  %1646 = vmatpush1.bf16.xpose.msra.mxu0 0
  %1647 = vmatprep.subr.bf16.mxu0 0
  %1648 = vmatpush1.bf16.xpose.msra.mxu0 0
  %1649 = vmatprep.subr.bf16.mxu0 0
  %1650 = vmatpush1.bf16.xpose.msra.mxu0 0
  %1651 = vmatprep.subr.bf16.mxu0 0
  %1652 = vmatpush1.bf16.xpose.msra.mxu0 0
  %1653 = vmatprep.subr.bf16.mxu0 0
  %1654 = vmatpush1.bf16.xpose.msra.mxu0 0
  %1655 = vmatprep.subr.bf16.mxu0 0
  %1656 = vmatpush1.bf16.xpose.msra.mxu0 0
  %1657 = vmatprep.subr.bf16.mxu0 0
  %1658 = vmatpush1.bf16.xpose.msra.mxu0 0
  %1659 = vmatprep.subr.bf16.mxu0 0
  %1660 = vmatpush1.bf16.xpose.msra.mxu0 0
  %1661 = vmatprep.subr.bf16.mxu0 0
  %1662 = vmatpush1.bf16.xpose.msra.mxu0 0
  %1663 = vmatprep.subr.bf16.mxu0 0
  %1664 = vmatpush1.bf16.xpose.msra.mxu0 0
  %1665 = vmatprep.subr.bf16.mxu0 0
  %1666 = vmatpush1.bf16.xpose.msra.mxu0 0
  %1667 = vmatprep.subr.bf16.mxu0 0
  %1668 = vmatpush1.bf16.xpose.msra.mxu0 0
  %1669 = vmatprep.subr.bf16.mxu0 0
  %1670 = vmatpush1.bf16.xpose.msra.mxu0 0
  %1671 = vmatprep.mubr.bf16.mxu0 0
  %1672 = vmatmul.mubr.bf16.gmra.mrb[0].mxu0 %v1634
  %v1673 = vpop.f32.mrb[0].mxu0
  %v1674 = vadd.f32 0.0, %v1673
  %v1675 = vpop.f32.mrb[0].mxu0
  %v1676 = vpop.f32.mrb[0].mxu0
  %v1677 = vpop.f32.mrb[0].mxu0
  %1678 = vdwg.mxu0
  %1680 = vrot.lane.b32.xlu0 %v1595, 64
  %v1681 = vpop.permute.xlu0 %1680
  %v1683 = vsel %vm32, %v1595, 0
  %v1686 = vsel %vm32, %v1681, 0
  %1688 = vmatprep.subr.bf16.mxu0 0
  %1689 = vmatpush1.bf16.xpose.msra.mxu0 %v1686
  %1690 = vmatprep.subr.bf16.mxu0 0
  %1691 = vmatpush1.bf16.xpose.msra.mxu0 0
  %1692 = vmatprep.subr.bf16.mxu0 0
  %1693 = vmatpush1.bf16.xpose.msra.mxu0 0
  %1694 = vmatprep.subr.bf16.mxu0 0
  %1695 = vmatpush1.bf16.xpose.msra.mxu0 0
  %1696 = vmatprep.subr.bf16.mxu0 0
  %1697 = vmatpush1.bf16.xpose.msra.mxu0 0
  %1698 = vmatprep.subr.bf16.mxu0 0
  %1699 = vmatpush1.bf16.xpose.msra.mxu0 0
  %1700 = vmatprep.subr.bf16.mxu0 0
  %1701 = vmatpush1.bf16.xpose.msra.mxu0 0
  %1702 = vmatprep.subr.bf16.mxu0 0
  %1703 = vmatpush1.bf16.xpose.msra.mxu0 0
  %1704 = vmatprep.subr.bf16.mxu0 0
  %1705 = vmatpush1.bf16.xpose.msra.mxu0 0
  %1706 = vmatprep.subr.bf16.mxu0 0
  %1707 = vmatpush1.bf16.xpose.msra.mxu0 0
  %1708 = vmatprep.subr.bf16.mxu0 0
  %1709 = vmatpush1.bf16.xpose.msra.mxu0 0
  %1710 = vmatprep.subr.bf16.mxu0 0
  %1711 = vmatpush1.bf16.xpose.msra.mxu0 0
  %1712 = vmatprep.subr.bf16.mxu0 0
  %1713 = vmatpush1.bf16.xpose.msra.mxu0 0
  %1714 = vmatprep.subr.bf16.mxu0 0
  %1715 = vmatpush1.bf16.xpose.msra.mxu0 0
  %1716 = vmatprep.subr.bf16.mxu0 0
  %1717 = vmatpush1.bf16.xpose.msra.mxu0 0
  %1718 = vmatprep.subr.bf16.mxu0 0
  %1719 = vmatpush1.bf16.xpose.msra.mxu0 0
  %1720 = vmatprep.mubr.bf16.mxu0 0
  %1721 = vmatmul.mubr.bf16.gmra.mrb[0].mxu0 %v1683
  %v1722 = vpop.f32.mrb[0].mxu0
  %v1723 = vadd.f32 0.0, %v1722
  %v1724 = vpop.f32.mrb[0].mxu0
  %v1725 = vpop.f32.mrb[0].mxu0
  %v1726 = vpop.f32.mrb[0].mxu0
  %1727 = vdwg.mxu0
  %1729 = vrot.lane.b32.xlu0 %v1596, 64
  %v1730 = vpop.permute.xlu0 %1729
  %v1732 = vsel %vm32, %v1596, 0
  %v1735 = vsel %vm32, %v1730, 0
  %1737 = vmatprep.subr.bf16.mxu0 0
  %1738 = vmatpush1.bf16.xpose.msra.mxu0 %v1735
  %1739 = vmatprep.subr.bf16.mxu0 0
  %1740 = vmatpush1.bf16.xpose.msra.mxu0 0
  %1741 = vmatprep.subr.bf16.mxu0 0
  %1742 = vmatpush1.bf16.xpose.msra.mxu0 0
  %1743 = vmatprep.subr.bf16.mxu0 0
  %1744 = vmatpush1.bf16.xpose.msra.mxu0 0
  %1745 = vmatprep.subr.bf16.mxu0 0
  %1746 = vmatpush1.bf16.xpose.msra.mxu0 0
  %1747 = vmatprep.subr.bf16.mxu0 0
  %1748 = vmatpush1.bf16.xpose.msra.mxu0 0
  %1749 = vmatprep.subr.bf16.mxu0 0
  %1750 = vmatpush1.bf16.xpose.msra.mxu0 0
  %1751 = vmatprep.subr.bf16.mxu0 0
  %1752 = vmatpush1.bf16.xpose.msra.mxu0 0
  %1753 = vmatprep.subr.bf16.mxu0 0
  %1754 = vmatpush1.bf16.xpose.msra.mxu0 0
  %1755 = vmatprep.subr.bf16.mxu0 0
  %1756 = vmatpush1.bf16.xpose.msra.mxu0 0
  %1757 = vmatprep.subr.bf16.mxu0 0
  %1758 = vmatpush1.bf16.xpose.msra.mxu0 0
  %1759 = vmatprep.subr.bf16.mxu0 0
  %1760 = vmatpush1.bf16.xpose.msra.mxu0 0
  %1761 = vmatprep.subr.bf16.mxu0 0
  %1762 = vmatpush1.bf16.xpose.msra.mxu0 0
  %1763 = vmatprep.subr.bf16.mxu0 0
  %1764 = vmatpush1.bf16.xpose.msra.mxu0 0
  %1765 = vmatprep.subr.bf16.mxu0 0
  %1766 = vmatpush1.bf16.xpose.msra.mxu0 0
  %1767 = vmatprep.subr.bf16.mxu0 0
  %1768 = vmatpush1.bf16.xpose.msra.mxu0 0
  %1769 = vmatprep.mubr.bf16.mxu0 0
  %1770 = vmatmul.mubr.bf16.gmra.mrb[0].mxu0 %v1732
  %v1771 = vpop.f32.mrb[0].mxu0
  %v1772 = vadd.f32 0.0, %v1771
  %v1773 = vpop.f32.mrb[0].mxu0
  %v1774 = vpop.f32.mrb[0].mxu0
  %v1775 = vpop.f32.mrb[0].mxu0
  %1776 = vdwg.mxu0
  %1778 = vrot.lane.b32.xlu0 %v1597, 64
  %v1779 = vpop.permute.xlu0 %1778
  %v1781 = vsel %vm32, %v1597, 0
  %v1784 = vsel %vm32, %v1779, 0
  %1786 = vmatprep.subr.bf16.mxu0 0
  %1787 = vmatpush1.bf16.xpose.msra.mxu0 %v1784
  %1788 = vmatprep.subr.bf16.mxu0 0
  %1789 = vmatpush1.bf16.xpose.msra.mxu0 0
  %1790 = vmatprep.subr.bf16.mxu0 0
  %1791 = vmatpush1.bf16.xpose.msra.mxu0 0
  %1792 = vmatprep.subr.bf16.mxu0 0
  %1793 = vmatpush1.bf16.xpose.msra.mxu0 0
  %1794 = vmatprep.subr.bf16.mxu0 0
  %1795 = vmatpush1.bf16.xpose.msra.mxu0 0
  %1796 = vmatprep.subr.bf16.mxu0 0
  %1797 = vmatpush1.bf16.xpose.msra.mxu0 0
  %1798 = vmatprep.subr.bf16.mxu0 0
  %1799 = vmatpush1.bf16.xpose.msra.mxu0 0
  %1800 = vmatprep.subr.bf16.mxu0 0
  %1801 = vmatpush1.bf16.xpose.msra.mxu0 0
  %1802 = vmatprep.subr.bf16.mxu0 0
  %1803 = vmatpush1.bf16.xpose.msra.mxu0 0
  %1804 = vmatprep.subr.bf16.mxu0 0
  %1805 = vmatpush1.bf16.xpose.msra.mxu0 0
  %1806 = vmatprep.subr.bf16.mxu0 0
  %1807 = vmatpush1.bf16.xpose.msra.mxu0 0
  %1808 = vmatprep.subr.bf16.mxu0 0
  %1809 = vmatpush1.bf16.xpose.msra.mxu0 0
  %1810 = vmatprep.subr.bf16.mxu0 0
  %1811 = vmatpush1.bf16.xpose.msra.mxu0 0
  %1812 = vmatprep.subr.bf16.mxu0 0
  %1813 = vmatpush1.bf16.xpose.msra.mxu0 0
  %1814 = vmatprep.subr.bf16.mxu0 0
  %1815 = vmatpush1.bf16.xpose.msra.mxu0 0
  %1816 = vmatprep.subr.bf16.mxu0 0
  %1817 = vmatpush1.bf16.xpose.msra.mxu0 0
  %1818 = vmatprep.mubr.bf16.mxu0 0
  %1819 = vmatmul.mubr.bf16.gmra.mrb[0].mxu0 %v1781
  %v1820 = vpop.f32.mrb[0].mxu0
  %v1821 = vadd.f32 0.0, %v1820
  %v1822 = vpop.f32.mrb[0].mxu0
  %v1823 = vpop.f32.mrb[0].mxu0
  %v1824 = vpop.f32.mrb[0].mxu0
  %1825 = vdwg.mxu0
  %1827 = vrot.lane.b32.xlu0 %v1598, 64
  %v1828 = vpop.permute.xlu0 %1827
  %v1830 = vsel %vm32, %v1598, 0
  %v1833 = vsel %vm32, %v1828, 0
  %1835 = vmatprep.subr.bf16.mxu0 0
  %1836 = vmatpush1.bf16.xpose.msra.mxu0 %v1833
  %1837 = vmatprep.subr.bf16.mxu0 0
  %1838 = vmatpush1.bf16.xpose.msra.mxu0 0
  %1839 = vmatprep.subr.bf16.mxu0 0
  %1840 = vmatpush1.bf16.xpose.msra.mxu0 0
  %1841 = vmatprep.subr.bf16.mxu0 0
  %1842 = vmatpush1.bf16.xpose.msra.mxu0 0
  %1843 = vmatprep.subr.bf16.mxu0 0
  %1844 = vmatpush1.bf16.xpose.msra.mxu0 0
  %1845 = vmatprep.subr.bf16.mxu0 0
  %1846 = vmatpush1.bf16.xpose.msra.mxu0 0
  %1847 = vmatprep.subr.bf16.mxu0 0
  %1848 = vmatpush1.bf16.xpose.msra.mxu0 0
  %1849 = vmatprep.subr.bf16.mxu0 0
  %1850 = vmatpush1.bf16.xpose.msra.mxu0 0
  %1851 = vmatprep.subr.bf16.mxu0 0
  %1852 = vmatpush1.bf16.xpose.msra.mxu0 0
  %1853 = vmatprep.subr.bf16.mxu0 0
  %1854 = vmatpush1.bf16.xpose.msra.mxu0 0
  %1855 = vmatprep.subr.bf16.mxu0 0
  %1856 = vmatpush1.bf16.xpose.msra.mxu0 0
  %1857 = vmatprep.subr.bf16.mxu0 0
  %1858 = vmatpush1.bf16.xpose.msra.mxu0 0
  %1859 = vmatprep.subr.bf16.mxu0 0
  %1860 = vmatpush1.bf16.xpose.msra.mxu0 0
  %1861 = vmatprep.subr.bf16.mxu0 0
  %1862 = vmatpush1.bf16.xpose.msra.mxu0 0
  %1863 = vmatprep.subr.bf16.mxu0 0
  %1864 = vmatpush1.bf16.xpose.msra.mxu0 0
  %1865 = vmatprep.subr.bf16.mxu0 0
  %1866 = vmatpush1.bf16.xpose.msra.mxu0 0
  %1867 = vmatprep.mubr.bf16.mxu0 0
  %1868 = vmatmul.mubr.bf16.gmra.mrb[0].mxu0 %v1830
  %v1869 = vpop.f32.mrb[0].mxu0
  %v1870 = vadd.f32 0.0, %v1869
  %v1871 = vpop.f32.mrb[0].mxu0
  %v1872 = vpop.f32.mrb[0].mxu0
  %v1873 = vpop.f32.mrb[0].mxu0
  %1874 = vdwg.mxu0
  %1876 = vrot.lane.b32.xlu0 %v1599, 64
  %v1877 = vpop.permute.xlu0 %1876
  %v1879 = vsel %vm32, %v1599, 0
  %v1882 = vsel %vm32, %v1877, 0
  %1884 = vmatprep.subr.bf16.mxu0 0
  %1885 = vmatpush1.bf16.xpose.msra.mxu0 %v1882
  %1886 = vmatprep.subr.bf16.mxu0 0
  %1887 = vmatpush1.bf16.xpose.msra.mxu0 0
  %1888 = vmatprep.subr.bf16.mxu0 0
  %1889 = vmatpush1.bf16.xpose.msra.mxu0 0
  %1890 = vmatprep.subr.bf16.mxu0 0
  %1891 = vmatpush1.bf16.xpose.msra.mxu0 0
  %1892 = vmatprep.subr.bf16.mxu0 0
  %1893 = vmatpush1.bf16.xpose.msra.mxu0 0
  %1894 = vmatprep.subr.bf16.mxu0 0
  %1895 = vmatpush1.bf16.xpose.msra.mxu0 0
  %1896 = vmatprep.subr.bf16.mxu0 0
  %1897 = vmatpush1.bf16.xpose.msra.mxu0 0
  %1898 = vmatprep.subr.bf16.mxu0 0
  %1899 = vmatpush1.bf16.xpose.msra.mxu0 0
  %1900 = vmatprep.subr.bf16.mxu0 0
  %1901 = vmatpush1.bf16.xpose.msra.mxu0 0
  %1902 = vmatprep.subr.bf16.mxu0 0
  %1903 = vmatpush1.bf16.xpose.msra.mxu0 0
  %1904 = vmatprep.subr.bf16.mxu0 0
  %1905 = vmatpush1.bf16.xpose.msra.mxu0 0
  %1906 = vmatprep.subr.bf16.mxu0 0
  %1907 = vmatpush1.bf16.xpose.msra.mxu0 0
  %1908 = vmatprep.subr.bf16.mxu0 0
  %1909 = vmatpush1.bf16.xpose.msra.mxu0 0
  %1910 = vmatprep.subr.bf16.mxu0 0
  %1911 = vmatpush1.bf16.xpose.msra.mxu0 0
  %1912 = vmatprep.subr.bf16.mxu0 0
  %1913 = vmatpush1.bf16.xpose.msra.mxu0 0
  %1914 = vmatprep.subr.bf16.mxu0 0
  %1915 = vmatpush1.bf16.xpose.msra.mxu0 0
  %1916 = vmatprep.mubr.bf16.mxu0 0
  %1917 = vmatmul.mubr.bf16.gmra.mrb[0].mxu0 %v1879
  %v1918 = vpop.f32.mrb[0].mxu0
  %v1919 = vadd.f32 0.0, %v1918
  %v1920 = vpop.f32.mrb[0].mxu0
  %v1921 = vpop.f32.mrb[0].mxu0
  %v1922 = vpop.f32.mrb[0].mxu0
  %1923 = vdwg.mxu0
  %1925 = vrot.lane.b32.xlu0 %v1600, 64
  %v1926 = vpop.permute.xlu0 %1925
  %v1928 = vsel %vm32, %v1600, 0
  %v1931 = vsel %vm32, %v1926, 0
  %1933 = vmatprep.subr.bf16.mxu0 0
  %1934 = vmatpush1.bf16.xpose.msra.mxu0 %v1931
  %1935 = vmatprep.subr.bf16.mxu0 0
  %1936 = vmatpush1.bf16.xpose.msra.mxu0 0
  %1937 = vmatprep.subr.bf16.mxu0 0
  %1938 = vmatpush1.bf16.xpose.msra.mxu0 0
  %1939 = vmatprep.subr.bf16.mxu0 0
  %1940 = vmatpush1.bf16.xpose.msra.mxu0 0
  %1941 = vmatprep.subr.bf16.mxu0 0
  %1942 = vmatpush1.bf16.xpose.msra.mxu0 0
  %1943 = vmatprep.subr.bf16.mxu0 0
  %1944 = vmatpush1.bf16.xpose.msra.mxu0 0
  %1945 = vmatprep.subr.bf16.mxu0 0
  %1946 = vmatpush1.bf16.xpose.msra.mxu0 0
  %1947 = vmatprep.subr.bf16.mxu0 0
  %1948 = vmatpush1.bf16.xpose.msra.mxu0 0
  %1949 = vmatprep.subr.bf16.mxu0 0
  %1950 = vmatpush1.bf16.xpose.msra.mxu0 0
  %1951 = vmatprep.subr.bf16.mxu0 0
  %1952 = vmatpush1.bf16.xpose.msra.mxu0 0
  %1953 = vmatprep.subr.bf16.mxu0 0
  %1954 = vmatpush1.bf16.xpose.msra.mxu0 0
  %1955 = vmatprep.subr.bf16.mxu0 0
  %1956 = vmatpush1.bf16.xpose.msra.mxu0 0
  %1957 = vmatprep.subr.bf16.mxu0 0
  %1958 = vmatpush1.bf16.xpose.msra.mxu0 0
  %1959 = vmatprep.subr.bf16.mxu0 0
  %1960 = vmatpush1.bf16.xpose.msra.mxu0 0
  %1961 = vmatprep.subr.bf16.mxu0 0
  %1962 = vmatpush1.bf16.xpose.msra.mxu0 0
  %1963 = vmatprep.subr.bf16.mxu0 0
  %1964 = vmatpush1.bf16.xpose.msra.mxu0 0
  %1965 = vmatprep.mubr.bf16.mxu0 0
  %1966 = vmatmul.mubr.bf16.gmra.mrb[0].mxu0 %v1928
  %v1967 = vpop.f32.mrb[0].mxu0
  %v1968 = vadd.f32 0.0, %v1967
  %v1969 = vpop.f32.mrb[0].mxu0
  %v1970 = vpop.f32.mrb[0].mxu0
  %v1971 = vpop.f32.mrb[0].mxu0
  %1972 = vdwg.mxu0
  %1974 = vrot.lane.b32.xlu0 %v1601, 64
  %v1975 = vpop.permute.xlu0 %1974
  %v1977 = vsel %vm32, %v1601, 0
  %v1980 = vsel %vm32, %v1975, 0
  %1982 = vmatprep.subr.bf16.mxu0 0
  %1983 = vmatpush1.bf16.xpose.msra.mxu0 %v1980
  %1984 = vmatprep.subr.bf16.mxu0 0
  %1985 = vmatpush1.bf16.xpose.msra.mxu0 0
  %1986 = vmatprep.subr.bf16.mxu0 0
  %1987 = vmatpush1.bf16.xpose.msra.mxu0 0
  %1988 = vmatprep.subr.bf16.mxu0 0
  %1989 = vmatpush1.bf16.xpose.msra.mxu0 0
  %1990 = vmatprep.subr.bf16.mxu0 0
  %1991 = vmatpush1.bf16.xpose.msra.mxu0 0
  %1992 = vmatprep.subr.bf16.mxu0 0
  %1993 = vmatpush1.bf16.xpose.msra.mxu0 0
  %1994 = vmatprep.subr.bf16.mxu0 0
  %1995 = vmatpush1.bf16.xpose.msra.mxu0 0
  %1996 = vmatprep.subr.bf16.mxu0 0
  %1997 = vmatpush1.bf16.xpose.msra.mxu0 0
  %1998 = vmatprep.subr.bf16.mxu0 0
  %1999 = vmatpush1.bf16.xpose.msra.mxu0 0
  %2000 = vmatprep.subr.bf16.mxu0 0
  %2001 = vmatpush1.bf16.xpose.msra.mxu0 0
  %2002 = vmatprep.subr.bf16.mxu0 0
  %2003 = vmatpush1.bf16.xpose.msra.mxu0 0
  %2004 = vmatprep.subr.bf16.mxu0 0
  %2005 = vmatpush1.bf16.xpose.msra.mxu0 0
  %2006 = vmatprep.subr.bf16.mxu0 0
  %2007 = vmatpush1.bf16.xpose.msra.mxu0 0
  %2008 = vmatprep.subr.bf16.mxu0 0
  %2009 = vmatpush1.bf16.xpose.msra.mxu0 0
  %2010 = vmatprep.subr.bf16.mxu0 0
  %2011 = vmatpush1.bf16.xpose.msra.mxu0 0
  %2012 = vmatprep.subr.bf16.mxu0 0
  %2013 = vmatpush1.bf16.xpose.msra.mxu0 0
  %2014 = vmatprep.mubr.bf16.mxu0 0
  %2015 = vmatmul.mubr.bf16.gmra.mrb[0].mxu0 %v1977
  %v2016 = vpop.f32.mrb[0].mxu0
  %v2017 = vadd.f32 0.0, %v2016
  %v2018 = vpop.f32.mrb[0].mxu0
  %v2019 = vpop.f32.mrb[0].mxu0
  %v2020 = vpop.f32.mrb[0].mxu0
  %2021 = vdwg.mxu0
  %v2022 = vsel %vm634, %v1674, -inf
  %2023 = vmax.xlane.f32.xlu0 %v2022
  %v2024 = vpop.xlane.xlu0 %2023
  %v2025 = vsel %vm634, %v1723, -inf
  %2026 = vmax.xlane.f32.xlu0 %v2025
  %v2027 = vpop.xlane.xlu0 %2026
  %v2028 = vsel %vm634, %v1772, -inf
  %2029 = vmax.xlane.f32.xlu0 %v2028
  %v2030 = vpop.xlane.xlu0 %2029
  %v2031 = vsel %vm634, %v1821, -inf
  %2032 = vmax.xlane.f32.xlu0 %v2031
  %v2033 = vpop.xlane.xlu0 %2032
  %v2034 = vsel %vm634, %v1870, -inf
  %2035 = vmax.xlane.f32.xlu0 %v2034
  %v2036 = vpop.xlane.xlu0 %2035
  %v2037 = vsel %vm634, %v1919, -inf
  %2038 = vmax.xlane.f32.xlu0 %v2037
  %v2039 = vpop.xlane.xlu0 %2038
  %v2040 = vsel %vm634, %v1968, -inf
  %2041 = vmax.xlane.f32.xlu0 %v2040
  %v2042 = vpop.xlane.xlu0 %2041
  %v2043 = vsel %vm634, %v2017, -inf
  %2044 = vmax.xlane.f32.xlu0 %v2043
  %v2045 = vpop.xlane.xlu0 %2044
  %v2046 = vsub.f32 %v1674, %v2024
  %v2047 = vsub.f32 %v1723, %v2027
  %v2048 = vsub.f32 %v1772, %v2030
  %v2049 = vsub.f32 %v1821, %v2033
  %v2050 = vsub.f32 %v1870, %v2036
  %v2051 = vsub.f32 %v1919, %v2039
  %v2052 = vsub.f32 %v1968, %v2042
  %v2053 = vsub.f32 %v2017, %v2045
  %v2054 = vmul.f32 %v2046, 1.442695
  %v2055 = vpow.pop %v2054
  %v2056 = vmul.f32 %v2047, 1.442695
  %v2057 = vpow.pop %v2056
  %v2058 = vmul.f32 %v2048, 1.442695
  %v2059 = vpow.pop %v2058
  %v2060 = vmul.f32 %v2049, 1.442695
  %v2061 = vpow.pop %v2060
  %v2062 = vmul.f32 %v2050, 1.442695
  %v2063 = vpow.pop %v2062
  %v2064 = vmul.f32 %v2051, 1.442695
  %v2065 = vpow.pop %v2064
  %v2066 = vmul.f32 %v2052, 1.442695
  %v2067 = vpow.pop %v2066
  %v2068 = vmul.f32 %v2053, 1.442695
  %v2069 = vpow.pop %v2068
  %v2070 = vsel %vm634, %v2055, 0.0
  %2071 = vadd.xlane.f32.xlu0 %v2070
  %v2072 = vpop.xlane.xlu0 %2071
  %v2073 = vsel %vm634, %v2057, 0.0
  %2074 = vadd.xlane.f32.xlu0 %v2073
  %v2075 = vpop.xlane.xlu0 %2074
  %v2076 = vsel %vm634, %v2059, 0.0
  %2077 = vadd.xlane.f32.xlu0 %v2076
  %v2078 = vpop.xlane.xlu0 %2077
  %v2079 = vsel %vm634, %v2061, 0.0
  %2080 = vadd.xlane.f32.xlu0 %v2079
  %v2081 = vpop.xlane.xlu0 %2080
  %v2082 = vsel %vm634, %v2063, 0.0
  %2083 = vadd.xlane.f32.xlu0 %v2082
  %v2084 = vpop.xlane.xlu0 %2083
  %v2085 = vsel %vm634, %v2065, 0.0
  %2086 = vadd.xlane.f32.xlu0 %v2085
  %v2087 = vpop.xlane.xlu0 %2086
  %v2088 = vsel %vm634, %v2067, 0.0
  %2089 = vadd.xlane.f32.xlu0 %v2088
  %v2090 = vpop.xlane.xlu0 %2089
  %v2091 = vsel %vm634, %v2069, 0.0
  %2092 = vadd.xlane.f32.xlu0 %v2091
  %v2093 = vpop.xlane.xlu0 %2092
  %v2094 = vrcp.pop %v2072
  %v2095 = vmul.f32 %v2055, %v2094
  %v2096 = vrcp.pop %v2075
  %v2097 = vmul.f32 %v2057, %v2096
  %v2098 = vrcp.pop %v2078
  %v2099 = vmul.f32 %v2059, %v2098
  %v2100 = vrcp.pop %v2081
  %v2101 = vmul.f32 %v2061, %v2100
  %v2102 = vrcp.pop %v2084
  %v2103 = vmul.f32 %v2063, %v2102
  %v2104 = vrcp.pop %v2087
  %v2105 = vmul.f32 %v2065, %v2104
  %v2106 = vrcp.pop %v2090
  %v2107 = vmul.f32 %v2067, %v2106
  %v2108 = vrcp.pop %v2093
  %v2109 = vmul.f32 %v2069, %v2108
  %v2110 = vpack.c.bf16 %v2095, %v2095
  %v2111 = vpack.c.bf16 %v2097, %v2097
  %v2112 = vpack.c.bf16 %v2099, %v2099
  %v2113 = vpack.c.bf16 %v2101, %v2101
  %v2114 = vpack.c.bf16 %v2103, %v2103
  %v2115 = vpack.c.bf16 %v2105, %v2105
  %v2116 = vpack.c.bf16 %v2107, %v2107
  %v2117 = vpack.c.bf16 %v2109, %v2109
  %v2119 = vsel %vm634, %v2110, 0
  %v2122 = vsel %vm734, %v1622, 0
  %2124 = vmatprep.subr.bf16.mxu0 0
  %2125 = vmatpush1.bf16.msra.mxu0 %v2122
  %2126 = vmatprep.subr.bf16.mxu0 0
  %2127 = vmatpush1.bf16.msra.mxu0 0
  %2128 = vmatprep.subr.bf16.mxu0 0
  %2129 = vmatpush1.bf16.msra.mxu0 0
  %2130 = vmatprep.subr.bf16.mxu0 0
  %2131 = vmatpush1.bf16.msra.mxu0 0
  %2132 = vmatprep.subr.bf16.mxu0 0
  %2133 = vmatpush1.bf16.msra.mxu0 0
  %2134 = vmatprep.subr.bf16.mxu0 0
  %2135 = vmatpush1.bf16.msra.mxu0 0
  %2136 = vmatprep.subr.bf16.mxu0 0
  %2137 = vmatpush1.bf16.msra.mxu0 0
  %2138 = vmatprep.subr.bf16.mxu0 0
  %2139 = vmatpush1.bf16.msra.mxu0 0
  %2140 = vmatprep.subr.bf16.mxu0 0
  %2141 = vmatpush1.bf16.msra.mxu0 0
  %2142 = vmatprep.subr.bf16.mxu0 0
  %2143 = vmatpush1.bf16.msra.mxu0 0
  %2144 = vmatprep.subr.bf16.mxu0 0
  %2145 = vmatpush1.bf16.msra.mxu0 0
  %2146 = vmatprep.subr.bf16.mxu0 0
  %2147 = vmatpush1.bf16.msra.mxu0 0
  %2148 = vmatprep.subr.bf16.mxu0 0
  %2149 = vmatpush1.bf16.msra.mxu0 0
  %2150 = vmatprep.subr.bf16.mxu0 0
  %2151 = vmatpush1.bf16.msra.mxu0 0
  %2152 = vmatprep.subr.bf16.mxu0 0
  %2153 = vmatpush1.bf16.msra.mxu0 0
  %2154 = vmatprep.subr.bf16.mxu0 0
  %2155 = vmatpush1.bf16.msra.mxu0 0
  %2156 = vmatprep.mubr.bf16.mxu0 0
  %2157 = vmatmul.mubr.bf16.gmra.mrb[0].mxu0 %v2119
  %v2158 = vpop.f32.mrb[0].mxu0
  %v2159 = vadd.f32 0.0, %v2158
  %v2160 = vpop.f32.mrb[0].mxu0
  %v2161 = vpop.f32.mrb[0].mxu0
  %v2162 = vpop.f32.mrb[0].mxu0
  %2163 = vdwg.mxu0
  %v2165 = vsel %vm634, %v2111, 0
  %v2168 = vsel %vm734, %v1623, 0
  %2170 = vmatprep.subr.bf16.mxu0 0
  %2171 = vmatpush1.bf16.msra.mxu0 %v2168
  %2172 = vmatprep.subr.bf16.mxu0 0
  %2173 = vmatpush1.bf16.msra.mxu0 0
  %2174 = vmatprep.subr.bf16.mxu0 0
  %2175 = vmatpush1.bf16.msra.mxu0 0
  %2176 = vmatprep.subr.bf16.mxu0 0
  %2177 = vmatpush1.bf16.msra.mxu0 0
  %2178 = vmatprep.subr.bf16.mxu0 0
  %2179 = vmatpush1.bf16.msra.mxu0 0
  %2180 = vmatprep.subr.bf16.mxu0 0
  %2181 = vmatpush1.bf16.msra.mxu0 0
  %2182 = vmatprep.subr.bf16.mxu0 0
  %2183 = vmatpush1.bf16.msra.mxu0 0
  %2184 = vmatprep.subr.bf16.mxu0 0
  %2185 = vmatpush1.bf16.msra.mxu0 0
  %2186 = vmatprep.subr.bf16.mxu0 0
  %2187 = vmatpush1.bf16.msra.mxu0 0
  %2188 = vmatprep.subr.bf16.mxu0 0
  %2189 = vmatpush1.bf16.msra.mxu0 0
  %2190 = vmatprep.subr.bf16.mxu0 0
  %2191 = vmatpush1.bf16.msra.mxu0 0
  %2192 = vmatprep.subr.bf16.mxu0 0
  %2193 = vmatpush1.bf16.msra.mxu0 0
  %2194 = vmatprep.subr.bf16.mxu0 0
  %2195 = vmatpush1.bf16.msra.mxu0 0
  %2196 = vmatprep.subr.bf16.mxu0 0
  %2197 = vmatpush1.bf16.msra.mxu0 0
  %2198 = vmatprep.subr.bf16.mxu0 0
  %2199 = vmatpush1.bf16.msra.mxu0 0
  %2200 = vmatprep.subr.bf16.mxu0 0
  %2201 = vmatpush1.bf16.msra.mxu0 0
  %2202 = vmatprep.mubr.bf16.mxu0 0
  %2203 = vmatmul.mubr.bf16.gmra.mrb[0].mxu0 %v2165
  %v2204 = vpop.f32.mrb[0].mxu0
  %v2205 = vadd.f32 0.0, %v2204
  %v2206 = vpop.f32.mrb[0].mxu0
  %v2207 = vpop.f32.mrb[0].mxu0
  %v2208 = vpop.f32.mrb[0].mxu0
  %2209 = vdwg.mxu0
  %v2211 = vsel %vm634, %v2112, 0
  %v2214 = vsel %vm734, %v1624, 0
  %2216 = vmatprep.subr.bf16.mxu0 0
  %2217 = vmatpush1.bf16.msra.mxu0 %v2214
  %2218 = vmatprep.subr.bf16.mxu0 0
  %2219 = vmatpush1.bf16.msra.mxu0 0
  %2220 = vmatprep.subr.bf16.mxu0 0
  %2221 = vmatpush1.bf16.msra.mxu0 0
  %2222 = vmatprep.subr.bf16.mxu0 0
  %2223 = vmatpush1.bf16.msra.mxu0 0
  %2224 = vmatprep.subr.bf16.mxu0 0
  %2225 = vmatpush1.bf16.msra.mxu0 0
  %2226 = vmatprep.subr.bf16.mxu0 0
  %2227 = vmatpush1.bf16.msra.mxu0 0
  %2228 = vmatprep.subr.bf16.mxu0 0
  %2229 = vmatpush1.bf16.msra.mxu0 0
  %2230 = vmatprep.subr.bf16.mxu0 0
  %2231 = vmatpush1.bf16.msra.mxu0 0
  %2232 = vmatprep.subr.bf16.mxu0 0
  %2233 = vmatpush1.bf16.msra.mxu0 0
  %2234 = vmatprep.subr.bf16.mxu0 0
  %2235 = vmatpush1.bf16.msra.mxu0 0
  %2236 = vmatprep.subr.bf16.mxu0 0
  %2237 = vmatpush1.bf16.msra.mxu0 0
  %2238 = vmatprep.subr.bf16.mxu0 0
  %2239 = vmatpush1.bf16.msra.mxu0 0
  %2240 = vmatprep.subr.bf16.mxu0 0
  %2241 = vmatpush1.bf16.msra.mxu0 0
  %2242 = vmatprep.subr.bf16.mxu0 0
  %2243 = vmatpush1.bf16.msra.mxu0 0
  %2244 = vmatprep.subr.bf16.mxu0 0
  %2245 = vmatpush1.bf16.msra.mxu0 0
  %2246 = vmatprep.subr.bf16.mxu0 0
  %2247 = vmatpush1.bf16.msra.mxu0 0
  %2248 = vmatprep.mubr.bf16.mxu0 0
  %2249 = vmatmul.mubr.bf16.gmra.mrb[0].mxu0 %v2211
  %v2250 = vpop.f32.mrb[0].mxu0
  %v2251 = vadd.f32 0.0, %v2250
  %v2252 = vpop.f32.mrb[0].mxu0
  %v2253 = vpop.f32.mrb[0].mxu0
  %v2254 = vpop.f32.mrb[0].mxu0
  %2255 = vdwg.mxu0
  %v2257 = vsel %vm634, %v2113, 0
  %v2260 = vsel %vm734, %v1625, 0
  %2262 = vmatprep.subr.bf16.mxu0 0
  %2263 = vmatpush1.bf16.msra.mxu0 %v2260
  %2264 = vmatprep.subr.bf16.mxu0 0
  %2265 = vmatpush1.bf16.msra.mxu0 0
  %2266 = vmatprep.subr.bf16.mxu0 0
  %2267 = vmatpush1.bf16.msra.mxu0 0
  %2268 = vmatprep.subr.bf16.mxu0 0
  %2269 = vmatpush1.bf16.msra.mxu0 0
  %2270 = vmatprep.subr.bf16.mxu0 0
  %2271 = vmatpush1.bf16.msra.mxu0 0
  %2272 = vmatprep.subr.bf16.mxu0 0
  %2273 = vmatpush1.bf16.msra.mxu0 0
  %2274 = vmatprep.subr.bf16.mxu0 0
  %2275 = vmatpush1.bf16.msra.mxu0 0
  %2276 = vmatprep.subr.bf16.mxu0 0
  %2277 = vmatpush1.bf16.msra.mxu0 0
  %2278 = vmatprep.subr.bf16.mxu0 0
  %2279 = vmatpush1.bf16.msra.mxu0 0
  %2280 = vmatprep.subr.bf16.mxu0 0
  %2281 = vmatpush1.bf16.msra.mxu0 0
  %2282 = vmatprep.subr.bf16.mxu0 0
  %2283 = vmatpush1.bf16.msra.mxu0 0
  %2284 = vmatprep.subr.bf16.mxu0 0
  %2285 = vmatpush1.bf16.msra.mxu0 0
  %2286 = vmatprep.subr.bf16.mxu0 0
  %2287 = vmatpush1.bf16.msra.mxu0 0
  %2288 = vmatprep.subr.bf16.mxu0 0
  %2289 = vmatpush1.bf16.msra.mxu0 0
  %2290 = vmatprep.subr.bf16.mxu0 0
  %2291 = vmatpush1.bf16.msra.mxu0 0
  %2292 = vmatprep.subr.bf16.mxu0 0
  %2293 = vmatpush1.bf16.msra.mxu0 0
  %2294 = vmatprep.mubr.bf16.mxu0 0
  %2295 = vmatmul.mubr.bf16.gmra.mrb[0].mxu0 %v2257
  %v2296 = vpop.f32.mrb[0].mxu0
  %v2297 = vadd.f32 0.0, %v2296
  %v2298 = vpop.f32.mrb[0].mxu0
  %v2299 = vpop.f32.mrb[0].mxu0
  %v2300 = vpop.f32.mrb[0].mxu0
  %2301 = vdwg.mxu0
  %v2303 = vsel %vm634, %v2114, 0
  %v2306 = vsel %vm734, %v1626, 0
  %2308 = vmatprep.subr.bf16.mxu0 0
  %2309 = vmatpush1.bf16.msra.mxu0 %v2306
  %2310 = vmatprep.subr.bf16.mxu0 0
  %2311 = vmatpush1.bf16.msra.mxu0 0
  %2312 = vmatprep.subr.bf16.mxu0 0
  %2313 = vmatpush1.bf16.msra.mxu0 0
  %2314 = vmatprep.subr.bf16.mxu0 0
  %2315 = vmatpush1.bf16.msra.mxu0 0
  %2316 = vmatprep.subr.bf16.mxu0 0
  %2317 = vmatpush1.bf16.msra.mxu0 0
  %2318 = vmatprep.subr.bf16.mxu0 0
  %2319 = vmatpush1.bf16.msra.mxu0 0
  %2320 = vmatprep.subr.bf16.mxu0 0
  %2321 = vmatpush1.bf16.msra.mxu0 0
  %2322 = vmatprep.subr.bf16.mxu0 0
  %2323 = vmatpush1.bf16.msra.mxu0 0
  %2324 = vmatprep.subr.bf16.mxu0 0
  %2325 = vmatpush1.bf16.msra.mxu0 0
  %2326 = vmatprep.subr.bf16.mxu0 0
  %2327 = vmatpush1.bf16.msra.mxu0 0
  %2328 = vmatprep.subr.bf16.mxu0 0
  %2329 = vmatpush1.bf16.msra.mxu0 0
  %2330 = vmatprep.subr.bf16.mxu0 0
  %2331 = vmatpush1.bf16.msra.mxu0 0
  %2332 = vmatprep.subr.bf16.mxu0 0
  %2333 = vmatpush1.bf16.msra.mxu0 0
  %2334 = vmatprep.subr.bf16.mxu0 0
  %2335 = vmatpush1.bf16.msra.mxu0 0
  %2336 = vmatprep.subr.bf16.mxu0 0
  %2337 = vmatpush1.bf16.msra.mxu0 0
  %2338 = vmatprep.subr.bf16.mxu0 0
  %2339 = vmatpush1.bf16.msra.mxu0 0
  %2340 = vmatprep.mubr.bf16.mxu0 0
  %2341 = vmatmul.mubr.bf16.gmra.mrb[0].mxu0 %v2303
  %v2342 = vpop.f32.mrb[0].mxu0
  %v2343 = vadd.f32 0.0, %v2342
  %v2344 = vpop.f32.mrb[0].mxu0
  %v2345 = vpop.f32.mrb[0].mxu0
  %v2346 = vpop.f32.mrb[0].mxu0
  %2347 = vdwg.mxu0
  %v2349 = vsel %vm634, %v2115, 0
  %v2352 = vsel %vm734, %v1627, 0
  %2354 = vmatprep.subr.bf16.mxu0 0
  %2355 = vmatpush1.bf16.msra.mxu0 %v2352
  %2356 = vmatprep.subr.bf16.mxu0 0
  %2357 = vmatpush1.bf16.msra.mxu0 0
  %2358 = vmatprep.subr.bf16.mxu0 0
  %2359 = vmatpush1.bf16.msra.mxu0 0
  %2360 = vmatprep.subr.bf16.mxu0 0
  %2361 = vmatpush1.bf16.msra.mxu0 0
  %2362 = vmatprep.subr.bf16.mxu0 0
  %2363 = vmatpush1.bf16.msra.mxu0 0
  %2364 = vmatprep.subr.bf16.mxu0 0
  %2365 = vmatpush1.bf16.msra.mxu0 0
  %2366 = vmatprep.subr.bf16.mxu0 0
  %2367 = vmatpush1.bf16.msra.mxu0 0
  %2368 = vmatprep.subr.bf16.mxu0 0
  %2369 = vmatpush1.bf16.msra.mxu0 0
  %2370 = vmatprep.subr.bf16.mxu0 0
  %2371 = vmatpush1.bf16.msra.mxu0 0
  %2372 = vmatprep.subr.bf16.mxu0 0
  %2373 = vmatpush1.bf16.msra.mxu0 0
  %2374 = vmatprep.subr.bf16.mxu0 0
  %2375 = vmatpush1.bf16.msra.mxu0 0
  %2376 = vmatprep.subr.bf16.mxu0 0
  %2377 = vmatpush1.bf16.msra.mxu0 0
  %2378 = vmatprep.subr.bf16.mxu0 0
  %2379 = vmatpush1.bf16.msra.mxu0 0
  %2380 = vmatprep.subr.bf16.mxu0 0
  %2381 = vmatpush1.bf16.msra.mxu0 0
  %2382 = vmatprep.subr.bf16.mxu0 0
  %2383 = vmatpush1.bf16.msra.mxu0 0
  %2384 = vmatprep.subr.bf16.mxu0 0
  %2385 = vmatpush1.bf16.msra.mxu0 0
  %2386 = vmatprep.mubr.bf16.mxu0 0
  %2387 = vmatmul.mubr.bf16.gmra.mrb[0].mxu0 %v2349
  %v2388 = vpop.f32.mrb[0].mxu0
  %v2389 = vadd.f32 0.0, %v2388
  %v2390 = vpop.f32.mrb[0].mxu0
  %v2391 = vpop.f32.mrb[0].mxu0
  %v2392 = vpop.f32.mrb[0].mxu0
  %2393 = vdwg.mxu0
  %v2395 = vsel %vm634, %v2116, 0
  %v2398 = vsel %vm734, %v1628, 0
  %2400 = vmatprep.subr.bf16.mxu0 0
  %2401 = vmatpush1.bf16.msra.mxu0 %v2398
  %2402 = vmatprep.subr.bf16.mxu0 0
  %2403 = vmatpush1.bf16.msra.mxu0 0
  %2404 = vmatprep.subr.bf16.mxu0 0
  %2405 = vmatpush1.bf16.msra.mxu0 0
  %2406 = vmatprep.subr.bf16.mxu0 0
  %2407 = vmatpush1.bf16.msra.mxu0 0
  %2408 = vmatprep.subr.bf16.mxu0 0
  %2409 = vmatpush1.bf16.msra.mxu0 0
  %2410 = vmatprep.subr.bf16.mxu0 0
  %2411 = vmatpush1.bf16.msra.mxu0 0
  %2412 = vmatprep.subr.bf16.mxu0 0
  %2413 = vmatpush1.bf16.msra.mxu0 0
  %2414 = vmatprep.subr.bf16.mxu0 0
  %2415 = vmatpush1.bf16.msra.mxu0 0
  %2416 = vmatprep.subr.bf16.mxu0 0
  %2417 = vmatpush1.bf16.msra.mxu0 0
  %2418 = vmatprep.subr.bf16.mxu0 0
  %2419 = vmatpush1.bf16.msra.mxu0 0
  %2420 = vmatprep.subr.bf16.mxu0 0
  %2421 = vmatpush1.bf16.msra.mxu0 0
  %2422 = vmatprep.subr.bf16.mxu0 0
  %2423 = vmatpush1.bf16.msra.mxu0 0
  %2424 = vmatprep.subr.bf16.mxu0 0
  %2425 = vmatpush1.bf16.msra.mxu0 0
  %2426 = vmatprep.subr.bf16.mxu0 0
  %2427 = vmatpush1.bf16.msra.mxu0 0
  %2428 = vmatprep.subr.bf16.mxu0 0
  %2429 = vmatpush1.bf16.msra.mxu0 0
  %2430 = vmatprep.subr.bf16.mxu0 0
  %2431 = vmatpush1.bf16.msra.mxu0 0
  %2432 = vmatprep.mubr.bf16.mxu0 0
  %2433 = vmatmul.mubr.bf16.gmra.mrb[0].mxu0 %v2395
  %v2434 = vpop.f32.mrb[0].mxu0
  %v2435 = vadd.f32 0.0, %v2434
  %v2436 = vpop.f32.mrb[0].mxu0
  %v2437 = vpop.f32.mrb[0].mxu0
  %v2438 = vpop.f32.mrb[0].mxu0
  %2439 = vdwg.mxu0
  %v2441 = vsel %vm634, %v2117, 0
  %v2444 = vsel %vm734, %v1629, 0
  %2446 = vmatprep.subr.bf16.mxu0 0
  %2447 = vmatpush1.bf16.msra.mxu0 %v2444
  %2448 = vmatprep.subr.bf16.mxu0 0
  %2449 = vmatpush1.bf16.msra.mxu0 0
  %2450 = vmatprep.subr.bf16.mxu0 0
  %2451 = vmatpush1.bf16.msra.mxu0 0
  %2452 = vmatprep.subr.bf16.mxu0 0
  %2453 = vmatpush1.bf16.msra.mxu0 0
  %2454 = vmatprep.subr.bf16.mxu0 0
  %2455 = vmatpush1.bf16.msra.mxu0 0
  %2456 = vmatprep.subr.bf16.mxu0 0
  %2457 = vmatpush1.bf16.msra.mxu0 0
  %2458 = vmatprep.subr.bf16.mxu0 0
  %2459 = vmatpush1.bf16.msra.mxu0 0
  %2460 = vmatprep.subr.bf16.mxu0 0
  %2461 = vmatpush1.bf16.msra.mxu0 0
  %2462 = vmatprep.subr.bf16.mxu0 0
  %2463 = vmatpush1.bf16.msra.mxu0 0
  %2464 = vmatprep.subr.bf16.mxu0 0
  %2465 = vmatpush1.bf16.msra.mxu0 0
  %2466 = vmatprep.subr.bf16.mxu0 0
  %2467 = vmatpush1.bf16.msra.mxu0 0
  %2468 = vmatprep.subr.bf16.mxu0 0
  %2469 = vmatpush1.bf16.msra.mxu0 0
  %2470 = vmatprep.subr.bf16.mxu0 0
  %2471 = vmatpush1.bf16.msra.mxu0 0
  %2472 = vmatprep.subr.bf16.mxu0 0
  %2473 = vmatpush1.bf16.msra.mxu0 0
  %2474 = vmatprep.subr.bf16.mxu0 0
  %2475 = vmatpush1.bf16.msra.mxu0 0
  %2476 = vmatprep.subr.bf16.mxu0 0
  %2477 = vmatpush1.bf16.msra.mxu0 0
  %2478 = vmatprep.mubr.bf16.mxu0 0
  %2479 = vmatmul.mubr.bf16.gmra.mrb[0].mxu0 %v2441
  %v2480 = vpop.f32.mrb[0].mxu0
  %v2481 = vadd.f32 0.0, %v2480
  %v2482 = vpop.f32.mrb[0].mxu0
  %v2483 = vpop.f32.mrb[0].mxu0
  %v2484 = vpop.f32.mrb[0].mxu0
  %2485 = vdwg.mxu0
  %2488 = vrot.lane.b32.xlu0 %v2251, 16
  %v2489 = vpop.permute.xlu0 %2488
  %2490 = vrot.lane.b32.xlu0 %v2297, 16
  %v2491 = vpop.permute.xlu0 %2490
  %2496 = vrot.lane.b32.xlu0 %v2343, 32
  %v2497 = vpop.permute.xlu0 %2496
  %2498 = vrot.lane.b32.xlu0 %v2389, 32
  %v2499 = vpop.permute.xlu0 %2498
  %2504 = vrot.lane.b32.xlu0 %v2435, 48
  %v2505 = vpop.permute.xlu0 %2504
  %2506 = vrot.lane.b32.xlu0 %v2481, 48
  %v2507 = vpop.permute.xlu0 %2506
  %v2510 = vsel %vm32, %v2159, %v2489
  %v2511 = vsel %vm32, %v2205, %v2491
  %v2512 = vsel %vm1126, %v2510, %v2497
  %v2513 = vsel %vm1126, %v2511, %v2499
  %v2514 = vsel %vm1129, %v2512, %v2505
  %v2515 = vsel %vm1129, %v2513, %v2507
  %v2516 = vpack.c.bf16 %v2515, %v2514
  %v2517 = vld [vmem:[%s1 + $0x190] sm:$0xf]
  %v2518 = vld [vmem:[%s1 + $0x198] sm:$0xf]
  %v2519 = vld [vmem:[%s1 + $0x1a0] sm:$0xf]
  %v2520 = vld [vmem:[%s1 + $0x1a8] sm:$0xf]
  %v2521 = vld [vmem:[%s1 + $0x1b0] sm:$0xf]
  %v2522 = vld [vmem:[%s1 + $0x1b8] sm:$0xf]
  %v2523 = vld [vmem:[%s1 + $0x1c0] sm:$0xf]
  %v2524 = vld [vmem:[%s1 + $0x1c8] sm:$0xf]
  %v2525 = vld [vmem:[%s2 + $0x31] ss:$0 sm:$0xff]
  %v2534 = vunpack.c.l.b16 %v2517
  %v2535 = vunpack.c.l.b16 %v2518
  %v2536 = vunpack.c.l.b16 %v2519
  %v2537 = vunpack.c.l.b16 %v2520
  %v2538 = vunpack.c.l.b16 %v2521
  %v2539 = vunpack.c.l.b16 %v2522
  %v2540 = vunpack.c.l.b16 %v2523
  %v2541 = vunpack.c.l.b16 %v2524
  %v2542 = vpack.c.b16 %v2535, %v2534
  %v2543 = vpack.c.b16 %v2537, %v2536
  %v2544 = vpack.c.b16 %v2539, %v2538
  %v2545 = vpack.c.b16 %v2541, %v2540
  %v2551 = vsel %vm139, %v2516, 0
  %2553 = vmatprep.subr.bf16.mxu0 0
  %2554 = vmatpush1.bf16.msra.mxu0 %v2542
  %2555 = vmatprep.subr.bf16.mxu0 0
  %2556 = vmatpush1.bf16.msra.mxu0 %v2543
  %2557 = vmatprep.subr.bf16.mxu0 0
  %2558 = vmatpush1.bf16.msra.mxu0 %v2544
  %2559 = vmatprep.subr.bf16.mxu0 0
  %2560 = vmatpush1.bf16.msra.mxu0 %v2545
  %2561 = vmatprep.subr.bf16.mxu0 0
  %2562 = vmatpush1.bf16.msra.mxu0 0
  %2563 = vmatprep.subr.bf16.mxu0 0
  %2564 = vmatpush1.bf16.msra.mxu0 0
  %2565 = vmatprep.subr.bf16.mxu0 0
  %2566 = vmatpush1.bf16.msra.mxu0 0
  %2567 = vmatprep.subr.bf16.mxu0 0
  %2568 = vmatpush1.bf16.msra.mxu0 0
  %2569 = vmatprep.subr.bf16.mxu0 0
  %2570 = vmatpush1.bf16.msra.mxu0 0
  %2571 = vmatprep.subr.bf16.mxu0 0
  %2572 = vmatpush1.bf16.msra.mxu0 0
  %2573 = vmatprep.subr.bf16.mxu0 0
  %2574 = vmatpush1.bf16.msra.mxu0 0
  %2575 = vmatprep.subr.bf16.mxu0 0
  %2576 = vmatpush1.bf16.msra.mxu0 0
  %2577 = vmatprep.subr.bf16.mxu0 0
  %2578 = vmatpush1.bf16.msra.mxu0 0
  %2579 = vmatprep.subr.bf16.mxu0 0
  %2580 = vmatpush1.bf16.msra.mxu0 0
  %2581 = vmatprep.subr.bf16.mxu0 0
  %2582 = vmatpush1.bf16.msra.mxu0 0
  %2583 = vmatprep.subr.bf16.mxu0 0
  %2584 = vmatpush1.bf16.msra.mxu0 0
  %2585 = vmatprep.mubr.bf16.mxu0 0
  %2586 = vmatmul.mubr.bf16.gmra.mrb[0].mxu0 %v2551
  %v2587 = vpop.f32.mrb[0].mxu0
  %v2588 = vadd.f32 %v2525, %v2587
  %v2589 = vpop.f32.mrb[0].mxu0
  %v2590 = vpop.f32.mrb[0].mxu0
  %v2591 = vadd.f32 %v2525, %v2590
  %v2592 = vpop.f32.mrb[0].mxu0
  %2593 = vdwg.mxu0
  %v2594 = vadd.f32 %v1464, %v2588
  %v2595 = vadd.f32 %v1465, %v2591
  %v2596 = vld [vmem:[%s2 + $0x32] ss:$0 sm:$0xff]
  %v2597 = vld [vmem:[%s2 + $0x33] ss:$0 sm:$0xff]
  %v2598 = vsel %vm139, %v2594, 0.0
  %2599 = vadd.xlane.f32.xlu0 %v2598
  %v2600 = vpop.xlane.xlu0 %2599
  %v2601 = vsel %vm139, %v2595, 0.0
  %2602 = vadd.xlane.f32.xlu0 %v2601
  %v2603 = vpop.xlane.xlu0 %2602
  %v2604 = vmul.f32 %v2600, %v1220
  %v2605 = vmul.f32 %v2603, %v1220
  %v2606 = vsub.f32 %v2594, %v2604
  %v2607 = vsub.f32 %v2595, %v2605
  %v2608 = vmul.f32 %v2606, %v2606
  %v2609 = vmul.f32 %v2607, %v2607
  %v2610 = vsel %vm139, %v2608, 0.0
  %2611 = vadd.xlane.f32.xlu0 %v2610
  %v2612 = vpop.xlane.xlu0 %2611
  %v2613 = vsel %vm139, %v2609, 0.0
  %2614 = vadd.xlane.f32.xlu0 %v2613
  %v2615 = vpop.xlane.xlu0 %2614
  %v2616 = vmul.f32 %v2612, %v1220
  %v2617 = vmul.f32 %v2615, %v1220
  %v2618 = vadd.f32 %v2616, 1e-05
  %v2619 = vadd.f32 %v2617, 1e-05
  %v2620 = vrsqrt.pop %v2618
  %v2621 = vrsqrt.pop %v2619
  %v2622 = vmul.f32 %v2606, %v2620
  %v2623 = vmul.f32 %v2607, %v2621
  %v2624 = vmul.f32 %v2622, %v2596
  %v2625 = vmul.f32 %v2623, %v2596
  %v2626 = vadd.f32 %v2624, %v2597
  %v2627 = vadd.f32 %v2625, %v2597
  %v2628 = vpack.c.bf16 %v2627, %v2626
  %v2629 = vld [vmem:[%s1 + $0x1d0] sm:$0xf]
  %v2630 = vld [vmem:[%s1 + $0x1d8] sm:$0xf]
  %v2631 = vld [vmem:[%s1 + $0x1e0] sm:$0xf]
  %v2632 = vld [vmem:[%s1 + $0x1e8] sm:$0xf]
  %v2633 = vld [vmem:[%s1 + $0x1f0] sm:$0xf]
  %v2634 = vld [vmem:[%s1 + $0x1f8] sm:$0xf]
  %v2635 = vld [vmem:[%s1 + $0x200] sm:$0xf]
  %v2636 = vld [vmem:[%s1 + $0x208] sm:$0xf]
  %v2637 = vld [vmem:[%s2 + $0x34] ss:$0 sm:$0xff]
  %v2646 = vunpack.c.l.b16 %v2629
  %v2647 = vunpack.c.l.b16 %v2630
  %v2648 = vunpack.c.l.b16 %v2631
  %v2649 = vunpack.c.l.b16 %v2632
  %v2650 = vunpack.c.l.b16 %v2633
  %v2651 = vunpack.c.l.b16 %v2634
  %v2652 = vunpack.c.l.b16 %v2635
  %v2653 = vunpack.c.l.b16 %v2636
  %v2654 = vpack.c.b16 %v2647, %v2646
  %v2655 = vpack.c.b16 %v2649, %v2648
  %v2656 = vpack.c.b16 %v2651, %v2650
  %v2657 = vpack.c.b16 %v2653, %v2652
  %v2663 = vsel %vm139, %v2628, 0
  %2665 = vmatprep.subr.bf16.mxu0 0
  %2666 = vmatpush1.bf16.msra.mxu0 %v2654
  %2667 = vmatprep.subr.bf16.mxu0 0
  %2668 = vmatpush1.bf16.msra.mxu0 %v2655
  %2669 = vmatprep.subr.bf16.mxu0 0
  %2670 = vmatpush1.bf16.msra.mxu0 %v2656
  %2671 = vmatprep.subr.bf16.mxu0 0
  %2672 = vmatpush1.bf16.msra.mxu0 %v2657
  %2673 = vmatprep.subr.bf16.mxu0 0
  %2674 = vmatpush1.bf16.msra.mxu0 0
  %2675 = vmatprep.subr.bf16.mxu0 0
  %2676 = vmatpush1.bf16.msra.mxu0 0
  %2677 = vmatprep.subr.bf16.mxu0 0
  %2678 = vmatpush1.bf16.msra.mxu0 0
  %2679 = vmatprep.subr.bf16.mxu0 0
  %2680 = vmatpush1.bf16.msra.mxu0 0
  %2681 = vmatprep.subr.bf16.mxu0 0
  %2682 = vmatpush1.bf16.msra.mxu0 0
  %2683 = vmatprep.subr.bf16.mxu0 0
  %2684 = vmatpush1.bf16.msra.mxu0 0
  %2685 = vmatprep.subr.bf16.mxu0 0
  %2686 = vmatpush1.bf16.msra.mxu0 0
  %2687 = vmatprep.subr.bf16.mxu0 0
  %2688 = vmatpush1.bf16.msra.mxu0 0
  %2689 = vmatprep.subr.bf16.mxu0 0
  %2690 = vmatpush1.bf16.msra.mxu0 0
  %2691 = vmatprep.subr.bf16.mxu0 0
  %2692 = vmatpush1.bf16.msra.mxu0 0
  %2693 = vmatprep.subr.bf16.mxu0 0
  %2694 = vmatpush1.bf16.msra.mxu0 0
  %2695 = vmatprep.subr.bf16.mxu0 0
  %2696 = vmatpush1.bf16.msra.mxu0 0
  %2697 = vmatprep.mubr.bf16.mxu0 0
  %2698 = vmatmul.mubr.bf16.gmra.mrb[0].mxu0 %v2663
  %v2699 = vpop.f32.mrb[0].mxu0
  %v2700 = vadd.f32 %v2637, %v2699
  %v2701 = vpop.f32.mrb[0].mxu0
  %v2702 = vpop.f32.mrb[0].mxu0
  %v2703 = vadd.f32 %v2637, %v2702
  %v2704 = vpop.f32.mrb[0].mxu0
  %2705 = vdwg.mxu0
  %v2706 = vmax.f32 %v2700, 0.0
  %v2707 = vmax.f32 %v2703, 0.0
  %v2708 = vpack.c.bf16 %v2707, %v2706
  %v2709 = vld [vmem:[%s1 + $0x210] sm:$0xf]
  %v2710 = vld [vmem:[%s1 + $0x218] sm:$0xf]
  %v2711 = vld [vmem:[%s1 + $0x220] sm:$0xf]
  %v2712 = vld [vmem:[%s1 + $0x228] sm:$0xf]
  %v2713 = vld [vmem:[%s1 + $0x230] sm:$0xf]
  %v2714 = vld [vmem:[%s1 + $0x238] sm:$0xf]
  %v2715 = vld [vmem:[%s1 + $0x240] sm:$0xf]
  %v2716 = vld [vmem:[%s1 + $0x248] sm:$0xf]
  %v2717 = vld [vmem:[%s1 + $0x250] sm:$0xf]
  %v2718 = vld [vmem:[%s1 + $0x258] sm:$0xf]
  %v2719 = vld [vmem:[%s1 + $0x260] sm:$0xf]
  %v2720 = vld [vmem:[%s1 + $0x268] sm:$0xf]
  %v2721 = vld [vmem:[%s1 + $0x270] sm:$0xf]
  %v2722 = vld [vmem:[%s1 + $0x278] sm:$0xf]
  %v2723 = vld [vmem:[%s1 + $0x280] sm:$0xf]
  %v2724 = vld [vmem:[%s1 + $0x288] sm:$0xf]
  %v2725 = vld [vmem:[%s2 + $0x35] ss:$0 sm:$0xff]
  %v2742 = vunpack.c.l.b16 %v2709
  %v2743 = vunpack.c.l.b16 %v2710
  %v2744 = vunpack.c.l.b16 %v2711
  %v2745 = vunpack.c.l.b16 %v2712
  %v2746 = vunpack.c.l.b16 %v2713
  %v2747 = vunpack.c.l.b16 %v2714
  %v2748 = vunpack.c.l.b16 %v2715
  %v2749 = vunpack.c.l.b16 %v2716
  %v2750 = vunpack.c.l.b16 %v2717
  %v2751 = vunpack.c.l.b16 %v2718
  %v2752 = vunpack.c.l.b16 %v2719
  %v2753 = vunpack.c.l.b16 %v2720
  %v2754 = vunpack.c.l.b16 %v2721
  %v2755 = vunpack.c.l.b16 %v2722
  %v2756 = vunpack.c.l.b16 %v2723
  %v2757 = vunpack.c.l.b16 %v2724
  %v2758 = vpack.c.b16 %v2743, %v2742
  %v2759 = vpack.c.b16 %v2745, %v2744
  %v2760 = vpack.c.b16 %v2747, %v2746
  %v2761 = vpack.c.b16 %v2749, %v2748
  %v2762 = vpack.c.b16 %v2751, %v2750
  %v2763 = vpack.c.b16 %v2753, %v2752
  %v2764 = vpack.c.b16 %v2755, %v2754
  %v2765 = vpack.c.b16 %v2757, %v2756
  %2774 = vmatprep.subr.bf16.mxu0 0
  %2775 = vmatpush1.bf16.msra.mxu0 %v2758
  %2776 = vmatprep.subr.bf16.mxu0 0
  %2777 = vmatpush1.bf16.msra.mxu0 %v2759
  %2778 = vmatprep.subr.bf16.mxu0 0
  %2779 = vmatpush1.bf16.msra.mxu0 %v2760
  %2780 = vmatprep.subr.bf16.mxu0 0
  %2781 = vmatpush1.bf16.msra.mxu0 %v2761
  %2782 = vmatprep.subr.bf16.mxu0 0
  %2783 = vmatpush1.bf16.msra.mxu0 %v2762
  %2784 = vmatprep.subr.bf16.mxu0 0
  %2785 = vmatpush1.bf16.msra.mxu0 %v2763
  %2786 = vmatprep.subr.bf16.mxu0 0
  %2787 = vmatpush1.bf16.msra.mxu0 %v2764
  %2788 = vmatprep.subr.bf16.mxu0 0
  %2789 = vmatpush1.bf16.msra.mxu0 %v2765
  %2790 = vmatprep.subr.bf16.mxu0 0
  %2791 = vmatpush1.bf16.msra.mxu0 0
  %2792 = vmatprep.subr.bf16.mxu0 0
  %2793 = vmatpush1.bf16.msra.mxu0 0
  %2794 = vmatprep.subr.bf16.mxu0 0
  %2795 = vmatpush1.bf16.msra.mxu0 0
  %2796 = vmatprep.subr.bf16.mxu0 0
  %2797 = vmatpush1.bf16.msra.mxu0 0
  %2798 = vmatprep.subr.bf16.mxu0 0
  %2799 = vmatpush1.bf16.msra.mxu0 0
  %2800 = vmatprep.subr.bf16.mxu0 0
  %2801 = vmatpush1.bf16.msra.mxu0 0
  %2802 = vmatprep.subr.bf16.mxu0 0
  %2803 = vmatpush1.bf16.msra.mxu0 0
  %2804 = vmatprep.subr.bf16.mxu0 0
  %2805 = vmatpush1.bf16.msra.mxu0 0
  %2806 = vmatprep.mubr.bf16.mxu0 0
  %2807 = vmatmul.mubr.bf16.gmra.mrb[0].mxu0 %v2708
  %v2808 = vpop.f32.mrb[0].mxu0
  %v2809 = vadd.f32 %v2725, %v2808
  %v2810 = vpop.f32.mrb[0].mxu0
  %v2811 = vpop.f32.mrb[0].mxu0
  %v2812 = vadd.f32 %v2725, %v2811
  %v2813 = vpop.f32.mrb[0].mxu0
  %2814 = vdwg.mxu0
  %v2815 = vadd.f32 %v2626, %v2809
  %v2816 = vadd.f32 %v2627, %v2812
  %v2817 = vld [vmem:[%s2 + $0x36] ss:$0 sm:$0xff]
  %v2818 = vld [vmem:[%s2 + $0x37] ss:$0 sm:$0xff]
  %v2819 = vsel %vm139, %v2815, 0.0
  %2820 = vadd.xlane.f32.xlu0 %v2819
  %v2821 = vpop.xlane.xlu0 %2820
  %v2822 = vsel %vm139, %v2816, 0.0
  %2823 = vadd.xlane.f32.xlu0 %v2822
  %v2824 = vpop.xlane.xlu0 %2823
  %v2825 = vmul.f32 %v2821, %v1220
  %v2826 = vmul.f32 %v2824, %v1220
  %v2827 = vsub.f32 %v2815, %v2825
  %v2828 = vsub.f32 %v2816, %v2826
  %v2829 = vmul.f32 %v2827, %v2827
  %v2830 = vmul.f32 %v2828, %v2828
  %v2831 = vsel %vm139, %v2829, 0.0
  %2832 = vadd.xlane.f32.xlu0 %v2831
  %v2833 = vpop.xlane.xlu0 %2832
  %v2834 = vsel %vm139, %v2830, 0.0
  %2835 = vadd.xlane.f32.xlu0 %v2834
  %v2836 = vpop.xlane.xlu0 %2835
  %v2837 = vmul.f32 %v2833, %v1220
  %v2838 = vmul.f32 %v2836, %v1220
  %v2839 = vadd.f32 %v2837, 1e-05
  %v2840 = vadd.f32 %v2838, 1e-05
  %v2841 = vrsqrt.pop %v2839
  %v2842 = vrsqrt.pop %v2840
  %v2843 = vmul.f32 %v2827, %v2841
  %v2844 = vmul.f32 %v2828, %v2842
  %v2845 = vmul.f32 %v2843, %v2817
  %v2846 = vmul.f32 %v2844, %v2817
  %v2847 = vadd.f32 %v2845, %v2818
  %v2848 = vadd.f32 %v2846, %v2818
  %v2849 = vsel %vm139, %v2847, 0.0
  %v2850 = vrot.slane %v2849, 4
  %v2851 = vadd.f32 %v2849, %v2850
  %v2852 = vrot.slane %v2851, 2
  %v2853 = vadd.f32 %v2851, %v2852
  %v2854 = vrot.slane %v2853, 1
  %v2855 = vadd.f32 %v2853, %v2854
  %v2856 = vsel %vm139, %v2848, 0.0
  %v2857 = vrot.slane %v2856, 4
  %v2858 = vadd.f32 %v2856, %v2857
  %v2859 = vrot.slane %v2858, 2
  %v2860 = vadd.f32 %v2858, %v2859
  %v2861 = vrot.slane %v2860, 1
  %v2862 = vadd.f32 %v2860, %v2861
  %v2863 = vrcp.pop 8.0
  %v2864 = vmul.f32 %v2855, %v2863
  %v2865 = vmul.f32 %v2862, %v2863
  %v2866 = vld [vmem:[%s2 + $0x40] ss:$0 sm:$0xff]
  %v2867 = vld [vmem:[%s2 + $0x41] ss:$0 sm:$0xff]
  %v2868 = vmul.f32 %v2864, %v2866
  %v2869 = vmul.f32 %v2865, %v2866
  %v2872 = vrot.slane %v2869, 7
  %vm2873 = vcmask 1041409
  %v2874 = vsel %vm2873, %v2872, %v2868
  %vm2876 = vcmask 517120
  %v2877 = vsel %vm2876, %v2874, 0.0
  %2878 = vadd.xlane.f32.xlu0 %v2877
  %v2879 = vpop.xlane.xlu0 %2878
  %v2880 = vadd.f32 %v2879, %v2867
  %vm2881 = vcmask 1024
  %2882 = vst.msk [vmem:[%s3] sm:$0x3] %vm2881, %v2880
  // Predicated region
  $region14: #{tpu_custom_call.1} parent=0 // pred_check
    _
  $region15: #{tpu_custom_call.1} parent=0 // pred_check_branch
    %2884 = sbr.rel (0) target = $region17
  $region16: #{tpu_custom_call.1} parent=0 // pred_region
    _
  $region17: #{tpu_custom_call.1} parent=0 // pred_fallthru
    _
  // Predicated region
  $region18: #{tpu_custom_call.1} parent=0 // pred_check
    _
  $region19: #{tpu_custom_call.1} parent=0 // pred_check_branch
    %2886 = sbr.rel (0) target = $region21
  $region20: #{tpu_custom_call.1} parent=0 // pred_region
    _
  $region21: #{tpu_custom_call.1} parent=0 // pred_fallthru
    _

</llo_original>
